<compile_context>
chip_gen: v6e
topology: v6e:2x2x1
jax: 0.10.0
libtpu: 0.0.40
codegen_flags: <defaults>
</compile_context>

<pallas_src>
import functools

import numpy as np
import jax
import jax.numpy as jnp
from jax.experimental import pallas as pl
from jax.experimental.pallas import tpu as pltpu


# -----------------------------------------------------------------------------
# Fused kernel: conv stack (channel-last, shifted-window matmuls) + Gramian
# -----------------------------------------------------------------------------
def _fused_kernel(alpha, N, tau,
                  x_ref,
                  w1, b1, w2, b2, w3, b3, w4, b4, w5, b5, w6, b6,
                  rr_ref, ri_ref,
                  a1, a2, a3, a4, a5, a6):
    H = 2 * N

    def layer(load, cin, ho, wo, cout, w_ref, b_ref, apply_act):
        """One 2x2 conv (or padded deconv) as 4 shifted-window matmuls.

        load(r0, r1, c0, c1) -> f32 [r1-r0, c1-c0] window of the packed
        [H, W*Cin] source.  w_ref: [4, Wo*Cin, Wo*Cout] bf16 block-diagonal
        taps.  Returns f32 [Ho, Wo*Cout]."""
        acc = jnp.zeros((ho, wo * cout), jnp.float32)
        for t in range(4):
            di, dj = divmod(t, 2)
            xs = load(di, di + ho, dj * cin, dj * cin + wo * cin)
            acc = acc + jnp.dot(xs.astype(jnp.bfloat16), w_ref[t],
                                preferred_element_type=jnp.float32)
        acc = acc + b_ref[...]                               # [1, Wo*Cout] f32
        if apply_act:
            acc = jnp.where(acc >= 0, acc, alpha * acc)      # LeakyReLU(alpha)
        return acc

    def window(ref):
        def load(r0, r1, c0, c1):
            return ref[r0:r1, c0:c1]
        return load

    def x_window(r0, r1, c0, c1):
        return x_ref[0, r0:r1, c0:c1]

    # conv1: (2N, N, tau) -> (2N-1, N-1, 16)
    a1[...] = layer(x_window, tau, H - 1, N - 1, 16, w1, b1, True)
    # conv2: -> (2N-2, N-2, 32)
    a2[...] = layer(window(a1), 16, H - 2, N - 2, 32, w2, b2, True)
    # conv3: -> (2N-3, N-3, 64), written into zero-padded buffer for deconv2
    out3 = layer(window(a2), 32, H - 3, N - 3, 64, w3, b3, True)
    a3[...] = jnp.zeros_like(a3)
    a3[1:H - 2, 64:64 + (N - 3) * 64] = out3
    # deconv2 (flipped kernel over padded a3): -> (2N-2, N-2, 32)
    out4 = layer(window(a3), 64, H - 2, N - 2, 32, w4, b4, True)
    a4[...] = jnp.zeros_like(a4)
    a4[1:H - 1, 32:32 + (N - 2) * 32] = out4
    # deconv3: -> (2N-1, N-1, 16)
    out5 = layer(window(a4), 32, H - 1, N - 1, 16, w5, b5, True)
    a5[...] = jnp.zeros_like(a5)
    a5[1:H, 16:16 + (N - 1) * 16] = out5
    # TODO(synk): nn.Dropout(0.2) treated as identity (inference); torch RNG mask not reproduced.
    # deconv4 (no activation): -> (2N, N, 1) == Rx, stays in VMEM
    a6[...] = layer(window(a5), 16, H, N, 1, w6, b6, False)

    # Gramian  Rz = K^H K + eps*I  with K = Kr + i*Ki, Kr = Rx[:N], Ki = Rx[N:]
    def tmm(a, b):                                  # a^T @ b (contract rows)
        return jax.lax.dot_general(
            a, b, (((0,), (0,)), ((), ())), preferred_element_type=jnp.float32)

    rx = a6[...]                                    # [2N, N] f32
    kr = a6[0:N, :]
    ki = a6[N:2 * N, :]
    rr = tmm(rx, rx)                                # Kr^T Kr + Ki^T Ki (one dot)
    ri = tmm(kr, ki) - tmm(ki, kr)                  # Im(K^H K)
    eye = (jax.lax.broadcasted_iota(jnp.int32, (N, N), 0)
           == jax.lax.broadcasted_iota(jnp.int32, (N, N), 1)).astype(jnp.float32)
    rr_ref[0] = rr + eye                            # eps = 1.0 on the diagonal
    ri_ref[0] = ri


# -----------------------------------------------------------------------------
# Host-side weight preparation (block-diagonal taps for the packed layout)
# -----------------------------------------------------------------------------
def _prep_conv(w, b, Wo):
    """w: [Cout, Cin, 2, 2] -> taps [4, Wo*Cin, Wo*Cout] bf16, bias [1, Wo*Cout] f32."""
    Cout, Cin = w.shape[0], w.shape[1]
    eye = jnp.eye(Wo, dtype=w.dtype)
    taps = [jnp.kron(eye, w[:, :, di, dj].T) for di in range(2) for dj in range(2)]
    W = jnp.stack(taps, axis=0).astype(jnp.bfloat16)
    bias = jnp.tile(b, Wo).reshape(1, Wo * Cout).astype(jnp.float32)
    return W, bias


def _prep_deconv(w, b, Wo):
    """w: [Cin, Cout, 2, 2] (ConvTranspose2d).  Flipped kernel + pad == deconv."""
    Cin, Cout = w.shape[0], w.shape[1]
    eye = jnp.eye(Wo, dtype=w.dtype)
    taps = [jnp.kron(eye, w[:, :, 1 - di, 1 - dj]) for di in range(2) for dj in range(2)]
    W = jnp.stack(taps, axis=0).astype(jnp.bfloat16)
    bias = jnp.tile(b, Wo).reshape(1, Wo * Cout).astype(jnp.float32)
    return W, bias


# -----------------------------------------------------------------------------
# Device part of Deep_Root_Net.forward (single fused pallas_call)
# -----------------------------------------------------------------------------
def build_forward(alpha):
    def forward(params, x):
        B, tau, H, W = x.shape
        N = W
        assert H == 2 * N and N >= 4
        # channel-last, packed 2-D activations: x2d[b, i, j*tau + c] = x[b, c, i, j]
        x2d = jnp.transpose(x, (0, 2, 3, 1)).reshape(B, H, W * tau)

        lw = [
            _prep_conv(params["conv1_w"], params["conv1_b"], N - 1),
            _prep_conv(params["conv2_w"], params["conv2_b"], N - 2),
            _prep_conv(params["conv3_w"], params["conv3_b"], N - 3),
            _prep_deconv(params["deconv2_w"], params["deconv2_b"], N - 2),
            _prep_deconv(params["deconv3_w"], params["deconv3_b"], N - 1),
            _prep_deconv(params["deconv4_w"], params["deconv4_b"], N),
        ]

        def wspec(w):
            return pl.BlockSpec(w.shape, lambda b: (0, 0, 0))

        def bspec(bb):
            return pl.BlockSpec(bb.shape, lambda b: (0, 0))

        in_specs = [pl.BlockSpec((1, H, W * tau), lambda b: (b, 0, 0))]
        args = [x2d]
        for w, bb in lw:
            in_specs += [wspec(w), bspec(bb)]
            args += [w, bb]

        scratch = [
            pltpu.VMEM((2 * N - 1, (N - 1) * 16), jnp.float32),   # conv1 out
            pltpu.VMEM((2 * N - 2, (N - 2) * 32), jnp.float32),   # conv2 out
            pltpu.VMEM((2 * N - 1, (N - 1) * 64), jnp.float32),   # conv3 out (padded)
            pltpu.VMEM((2 * N,     N * 32),       jnp.float32),   # deconv2 out (padded)
            pltpu.VMEM((2 * N + 1, (N + 1) * 16), jnp.float32),   # deconv3 out (padded)
            pltpu.VMEM((2 * N,     N),            jnp.float32),   # deconv4 out (Rx)
        ]

        kernel = functools.partial(_fused_kernel, float(alpha), N, tau)
        return pl.pallas_call(
            kernel,
            out_shape=(jax.ShapeDtypeStruct((B, N, N), jnp.float32),
                       jax.ShapeDtypeStruct((B, N, N), jnp.float32)),
            grid=(B,),
            in_specs=in_specs,
            out_specs=(pl.BlockSpec((1, N, N), lambda b: (b, 0, 0)),
                       pl.BlockSpec((1, N, N), lambda b: (b, 0, 0))),
            scratch_shapes=scratch,
            compiler_params=pltpu.CompilerParams(
                dimension_semantics=("parallel",)),   # v7x: both TensorCores
        )(*args)

    return jax.jit(forward)


# -----------------------------------------------------------------------------
# Root-MUSIC tail on host (no TPU / Pallas equivalent for general complex eig)
# -----------------------------------------------------------------------------
def _sum_of_diags(F):
    n = F.shape[0]
    return np.stack([np.trace(F, offset=k) for k in range(-(n - 1), n)], axis=0)


def _find_roots(coeff):
    A = np.diag(np.ones(len(coeff) - 2, dtype=coeff.dtype), -1)
    A[0, :] = -coeff[1:] / coeff[0]
    # TODO(synk): torch.linalg.eigvals of the companion matrix -> host NumPy eigvals.
    return np.linalg.eigvals(A)


def root_music_host(Rz, M):
    dist, f = 0.5, 1.0
    scale = 1.0 / (2.0 * np.pi * dist * f)
    doa_list, doa_all_list = [], []
    roots_to_return = None
    for b in range(Rz.shape[0]):
        R = Rz[b]
        eigvals, eigvecs = np.linalg.eig(R)
        idx = np.argsort(np.abs(eigvals))[::-1]        # descending |eigenvalue|
        Un = eigvecs[:, idx][:, M:]                    # noise subspace
        F = Un @ Un.conj().T
        coeff = _sum_of_diags(F)
        roots = _find_roots(coeff)
        doa_all_list.append(np.arcsin(scale * np.angle(roots)))
        roots_to_return = roots
        order = sorted(range(roots.shape[0]), key=lambda k: abs(abs(roots[k]) - 1))
        roots_s = roots[order]
        mask = (np.abs(roots_s) - 1) < 0
        roots_sel = roots_s[mask][:M]
        doa_list.append(np.arcsin(scale * np.angle(roots_sel)))
    return (np.stack(doa_list, axis=0),
            np.stack(doa_all_list, axis=0),
            roots_to_return)


# -----------------------------------------------------------------------------
# Deterministic parameter init (shapes from Deep_Root_Net.__init__)
# -----------------------------------------------------------------------------
def init_params(key, tau):
    def u(k, shape, fan_in):
        bound = 1.0 / np.sqrt(fan_in)
        return jax.random.uniform(k, shape, jnp.float32, -bound, bound)

    keys = jax.random.split(key, 12)
    p = {}
    p["conv1_w"] = u(keys[0], (16, tau, 2, 2), tau * 4)
    p["conv1_b"] = u(keys[1], (16,), tau * 4)
    p["conv2_w"] = u(keys[2], (32, 16, 2, 2), 16 * 4)
    p["conv2_b"] = u(keys[3], (32,), 16 * 4)
    p["conv3_w"] = u(keys[4], (64, 32, 2, 2), 32 * 4)
    p["conv3_b"] = u(keys[5], (64,), 32 * 4)
    p["deconv2_w"] = u(keys[6], (64, 32, 2, 2), 32 * 4)   # [in, out, kH, kW]
    p["deconv2_b"] = u(keys[7], (32,), 32 * 4)
    p["deconv3_w"] = u(keys[8], (32, 16, 2, 2), 16 * 4)
    p["deconv3_b"] = u(keys[9], (16,), 16 * 4)
    p["deconv4_w"] = u(keys[10], (16, 1, 2, 2), 1 * 4)
    p["deconv4_b"] = u(keys[11], (1,), 1 * 4)
    return p


# -----------------------------------------------------------------------------
# Main
# -----------------------------------------------------------------------------
if __name__ == "__main__":
    tau = 4            # input channels (self.tau)
    activation_val = 0.1
    N = 8              # array size -> input spatial is (2N, N)
    BATCH = 2
    M = 2              # number of sources

    key = jax.random.PRNGKey(0)
    k_params, k_x = jax.random.split(key)
    params = init_params(k_params, tau)
    # New_Rx_tau: [B, tau, 2N, N] float32 (NCHW, as in the PyTorch module)
    x = jax.random.normal(k_x, (BATCH, tau, 2 * N, N), dtype=jnp.float32)

    forward = build_forward(activation_val)
    Rz_r, Rz_i = forward(params, x)
    Rz_r, Rz_i = jax.block_until_ready((Rz_r, Rz_i))

    Rz = np.asarray(Rz_r).astype(np.complex64) + 1j * np.asarray(Rz_i).astype(np.complex64)
    DOA, DOA_all, roots = root_music_host(Rz, M)

    # Sanity checks on shapes / finiteness of the full forward output tuple.
    assert Rz.shape == (BATCH, N, N)
    assert DOA.shape == (BATCH, M)
    assert DOA_all.shape == (BATCH, 2 * N - 2)
    assert roots.shape == (2 * N - 2,)
    assert np.all(np.isfinite(np.asarray(Rz_r))) and np.all(np.isfinite(np.asarray(Rz_i)))
    assert np.all(np.isfinite(DOA))

    print("KERNEL_OK")
</pallas_src>

<mosaic_0001>
module attributes {stable_mosaic.version = 11 : i64} {
  func.func @_fused_kernel(%arg0: i32, %arg1: memref<1x16x32xf32, #tpu.memory_space<vmem>>, %arg2: memref<4x28x112xbf16, #tpu.memory_space<vmem>>, %arg3: memref<1x112xf32, #tpu.memory_space<vmem>>, %arg4: memref<4x96x192xbf16, #tpu.memory_space<vmem>>, %arg5: memref<1x192xf32, #tpu.memory_space<vmem>>, %arg6: memref<4x160x320xbf16, #tpu.memory_space<vmem>>, %arg7: memref<1x320xf32, #tpu.memory_space<vmem>>, %arg8: memref<4x384x192xbf16, #tpu.memory_space<vmem>>, %arg9: memref<1x192xf32, #tpu.memory_space<vmem>>, %arg10: memref<4x224x112xbf16, #tpu.memory_space<vmem>>, %arg11: memref<1x112xf32, #tpu.memory_space<vmem>>, %arg12: memref<4x128x8xbf16, #tpu.memory_space<vmem>>, %arg13: memref<1x8xf32, #tpu.memory_space<vmem>>, %arg14: memref<1x8x8xf32, #tpu.memory_space<vmem>>, %arg15: memref<1x8x8xf32, #tpu.memory_space<vmem>>, %arg16: memref<15x112xf32, #tpu.memory_space<vmem>>, %arg17: memref<14x192xf32, #tpu.memory_space<vmem>>, %arg18: memref<15x448xf32, #tpu.memory_space<vmem>>, %arg19: memref<16x256xf32, #tpu.memory_space<vmem>>, %arg20: memref<17x144xf32, #tpu.memory_space<vmem>>, %arg21: memref<16x8xf32, #tpu.memory_space<vmem>>) attributes {dimension_semantics = [#tpu.dimension_semantics<parallel>], iteration_bounds = array<i64: 2>, scalar_prefetch = 0 : i64, scratch_operands = 6 : i64, tpu.core_type = #tpu.core_type<tc>, window_params = [{transform_indices = @transform_0, window_bounds = array<i64: 1, 16, 32>}, {pipeline_mode = #tpu.pipeline_mode<synchronous>, transform_indices = @transform_1, window_bounds = array<i64: 4, 28, 112>}, {pipeline_mode = #tpu.pipeline_mode<synchronous>, transform_indices = @transform_2, window_bounds = array<i64: 1, 112>}, {pipeline_mode = #tpu.pipeline_mode<synchronous>, transform_indices = @transform_3, window_bounds = array<i64: 4, 96, 192>}, {pipeline_mode = #tpu.pipeline_mode<synchronous>, transform_indices = @transform_4, window_bounds = array<i64: 1, 192>}, {pipeline_mode = #tpu.pipeline_mode<synchronous>, transform_indices = @transform_5, window_bounds = array<i64: 4, 160, 320>}, {pipeline_mode = #tpu.pipeline_mode<synchronous>, transform_indices = @transform_6, window_bounds = array<i64: 1, 320>}, {pipeline_mode = #tpu.pipeline_mode<synchronous>, transform_indices = @transform_7, window_bounds = array<i64: 4, 384, 192>}, {pipeline_mode = #tpu.pipeline_mode<synchronous>, transform_indices = @transform_8, window_bounds = array<i64: 1, 192>}, {pipeline_mode = #tpu.pipeline_mode<synchronous>, transform_indices = @transform_9, window_bounds = array<i64: 4, 224, 112>}, {pipeline_mode = #tpu.pipeline_mode<synchronous>, transform_indices = @transform_10, window_bounds = array<i64: 1, 112>}, {pipeline_mode = #tpu.pipeline_mode<synchronous>, transform_indices = @transform_11, window_bounds = array<i64: 4, 128, 8>}, {pipeline_mode = #tpu.pipeline_mode<synchronous>, transform_indices = @transform_12, window_bounds = array<i64: 1, 8>}, {transform_indices = @transform_13, window_bounds = array<i64: 1, 8, 8>}, {transform_indices = @transform_14, window_bounds = array<i64: 1, 8, 8>}]} {
    %cst = arith.constant 0.000000e+00 : f32
    %0 = vector.broadcast %cst : f32 to vector<15x112xf32>
    %c0 = arith.constant 0 : index
    %c0_0 = arith.constant 0 : index
    %c0_1 = arith.constant 0 : index
    %1 = vector.load %arg1[%c0, %c0_0, %c0_1] : memref<1x16x32xf32, #tpu.memory_space<vmem>>, vector<1x15x28xf32>
    %2 = vector.shape_cast %1 : vector<1x15x28xf32> to vector<15x28xf32>
    %3 = arith.truncf %2 : vector<15x28xf32> to vector<15x28xbf16>
    %c0_2 = arith.constant 0 : index
    %c0_3 = arith.constant 0 : index
    %c0_4 = arith.constant 0 : index
    %4 = vector.load %arg2[%c0_2, %c0_3, %c0_4] : memref<4x28x112xbf16, #tpu.memory_space<vmem>>, vector<1x28x112xbf16>
    %5 = vector.shape_cast %4 : vector<1x28x112xbf16> to vector<28x112xbf16>
    %cst_5 = arith.constant dense<0.000000e+00> : vector<15x112xf32>
    %6 = tpu.matmul %3, %5, %cst_5 {dimension_numbers = #tpu.dot_dimension_numbers<[1], [0], [0], [1], [0, 0, 1, 1], [], []>} : vector<15x28xbf16>, vector<28x112xbf16>, vector<15x112xf32> -> vector<15x112xf32>
    %7 = arith.addf %0, %6 : vector<15x112xf32>
    %c0_6 = arith.constant 0 : index
    %c0_7 = arith.constant 0 : index
    %c4 = arith.constant 4 : index
    %8 = vector.load %arg1[%c0_6, %c0_7, %c4] : memref<1x16x32xf32, #tpu.memory_space<vmem>>, vector<1x15x28xf32>
    %9 = vector.shape_cast %8 : vector<1x15x28xf32> to vector<15x28xf32>
    %10 = arith.truncf %9 : vector<15x28xf32> to vector<15x28xbf16>
    %c1 = arith.constant 1 : index
    %c0_8 = arith.constant 0 : index
    %c0_9 = arith.constant 0 : index
    %11 = vector.load %arg2[%c1, %c0_8, %c0_9] : memref<4x28x112xbf16, #tpu.memory_space<vmem>>, vector<1x28x112xbf16>
    %12 = vector.shape_cast %11 : vector<1x28x112xbf16> to vector<28x112xbf16>
    %cst_10 = arith.constant dense<0.000000e+00> : vector<15x112xf32>
    %13 = tpu.matmul %10, %12, %cst_10 {dimension_numbers = #tpu.dot_dimension_numbers<[1], [0], [0], [1], [0, 0, 1, 1], [], []>} : vector<15x28xbf16>, vector<28x112xbf16>, vector<15x112xf32> -> vector<15x112xf32>
    %14 = arith.addf %7, %13 : vector<15x112xf32>
    %c0_11 = arith.constant 0 : index
    %c1_12 = arith.constant 1 : index
    %c0_13 = arith.constant 0 : index
    %15 = vector.load %arg1[%c0_11, %c1_12, %c0_13] : memref<1x16x32xf32, #tpu.memory_space<vmem>>, vector<1x15x28xf32>
    %16 = vector.shape_cast %15 : vector<1x15x28xf32> to vector<15x28xf32>
    %17 = arith.truncf %16 : vector<15x28xf32> to vector<15x28xbf16>
    %c2 = arith.constant 2 : index
    %c0_14 = arith.constant 0 : index
    %c0_15 = arith.constant 0 : index
    %18 = vector.load %arg2[%c2, %c0_14, %c0_15] : memref<4x28x112xbf16, #tpu.memory_space<vmem>>, vector<1x28x112xbf16>
    %19 = vector.shape_cast %18 : vector<1x28x112xbf16> to vector<28x112xbf16>
    %cst_16 = arith.constant dense<0.000000e+00> : vector<15x112xf32>
    %20 = tpu.matmul %17, %19, %cst_16 {dimension_numbers = #tpu.dot_dimension_numbers<[1], [0], [0], [1], [0, 0, 1, 1], [], []>} : vector<15x28xbf16>, vector<28x112xbf16>, vector<15x112xf32> -> vector<15x112xf32>
    %21 = arith.addf %14, %20 : vector<15x112xf32>
    %c0_17 = arith.constant 0 : index
    %c1_18 = arith.constant 1 : index
    %c4_19 = arith.constant 4 : index
    %22 = vector.load %arg1[%c0_17, %c1_18, %c4_19] : memref<1x16x32xf32, #tpu.memory_space<vmem>>, vector<1x15x28xf32>
    %23 = vector.shape_cast %22 : vector<1x15x28xf32> to vector<15x28xf32>
    %24 = arith.truncf %23 : vector<15x28xf32> to vector<15x28xbf16>
    %c3 = arith.constant 3 : index
    %c0_20 = arith.constant 0 : index
    %c0_21 = arith.constant 0 : index
    %25 = vector.load %arg2[%c3, %c0_20, %c0_21] : memref<4x28x112xbf16, #tpu.memory_space<vmem>>, vector<1x28x112xbf16>
    %26 = vector.shape_cast %25 : vector<1x28x112xbf16> to vector<28x112xbf16>
    %cst_22 = arith.constant dense<0.000000e+00> : vector<15x112xf32>
    %27 = tpu.matmul %24, %26, %cst_22 {dimension_numbers = #tpu.dot_dimension_numbers<[1], [0], [0], [1], [0, 0, 1, 1], [], []>} : vector<15x28xbf16>, vector<28x112xbf16>, vector<15x112xf32> -> vector<15x112xf32>
    %28 = arith.addf %21, %27 : vector<15x112xf32>
    %c0_23 = arith.constant 0 : index
    %c0_24 = arith.constant 0 : index
    %29 = vector.load %arg3[%c0_23, %c0_24] : memref<1x112xf32, #tpu.memory_space<vmem>>, vector<1x112xf32>
    %30 = vector.broadcast %29 : vector<1x112xf32> to vector<15x112xf32>
    %31 = arith.addf %28, %30 : vector<15x112xf32>
    %cst_25 = arith.constant 0.000000e+00 : f32
    %32 = vector.broadcast %cst_25 : f32 to vector<15x112xf32>
    %33 = arith.cmpf oge, %31, %32 : vector<15x112xf32>
    %cst_26 = arith.constant 1.000000e-01 : f32
    %34 = vector.broadcast %cst_26 : f32 to vector<15x112xf32>
    %35 = arith.mulf %34, %31 : vector<15x112xf32>
    %36 = arith.select %33, %31, %35 : vector<15x112xi1>, vector<15x112xf32>
    %c0_27 = arith.constant 0 : index
    %c0_28 = arith.constant 0 : index
    %37 = vector.load %arg16[%c0_27, %c0_28] : memref<15x112xf32, #tpu.memory_space<vmem>>, vector<15x112xf32>
    tpu.vector_store %arg16[%c0_27, %c0_28], %36 {strides = array<i32>} : memref<15x112xf32, #tpu.memory_space<vmem>>, vector<15x112xf32>,
    %cst_29 = arith.constant 0.000000e+00 : f32
    %38 = vector.broadcast %cst_29 : f32 to vector<14x192xf32>
    %c0_30 = arith.constant 0 : index
    %c0_31 = arith.constant 0 : index
    %39 = vector.load %arg16[%c0_30, %c0_31] : memref<15x112xf32, #tpu.memory_space<vmem>>, vector<14x96xf32>
    %40 = arith.truncf %39 : vector<14x96xf32> to vector<14x96xbf16>
    %c0_32 = arith.constant 0 : index
    %c0_33 = arith.constant 0 : index
    %c0_34 = arith.constant 0 : index
    %41 = vector.load %arg4[%c0_32, %c0_33, %c0_34] : memref<4x96x192xbf16, #tpu.memory_space<vmem>>, vector<1x96x192xbf16>
    %42 = vector.shape_cast %41 : vector<1x96x192xbf16> to vector<96x192xbf16>
    %cst_35 = arith.constant dense<0.000000e+00> : vector<14x192xf32>
    %43 = tpu.matmul %40, %42, %cst_35 {dimension_numbers = #tpu.dot_dimension_numbers<[1], [0], [0], [1], [0, 0, 1, 1], [], []>} : vector<14x96xbf16>, vector<96x192xbf16>, vector<14x192xf32> -> vector<14x192xf32>
    %44 = arith.addf %38, %43 : vector<14x192xf32>
    %c0_36 = arith.constant 0 : index
    %c16 = arith.constant 16 : index
    %45 = vector.load %arg16[%c0_36, %c16] : memref<15x112xf32, #tpu.memory_space<vmem>>, vector<14x96xf32>
    %46 = arith.truncf %45 : vector<14x96xf32> to vector<14x96xbf16>
    %c1_37 = arith.constant 1 : index
    %c0_38 = arith.constant 0 : index
    %c0_39 = arith.constant 0 : index
    %47 = vector.load %arg4[%c1_37, %c0_38, %c0_39] : memref<4x96x192xbf16, #tpu.memory_space<vmem>>, vector<1x96x192xbf16>
    %48 = vector.shape_cast %47 : vector<1x96x192xbf16> to vector<96x192xbf16>
    %cst_40 = arith.constant dense<0.000000e+00> : vector<14x192xf32>
    %49 = tpu.matmul %46, %48, %cst_40 {dimension_numbers = #tpu.dot_dimension_numbers<[1], [0], [0], [1], [0, 0, 1, 1], [], []>} : vector<14x96xbf16>, vector<96x192xbf16>, vector<14x192xf32> -> vector<14x192xf32>
    %50 = arith.addf %44, %49 : vector<14x192xf32>
    %c1_41 = arith.constant 1 : index
    %c0_42 = arith.constant 0 : index
    %51 = vector.load %arg16[%c1_41, %c0_42] : memref<15x112xf32, #tpu.memory_space<vmem>>, vector<14x96xf32>
    %52 = arith.truncf %51 : vector<14x96xf32> to vector<14x96xbf16>
    %c2_43 = arith.constant 2 : index
    %c0_44 = arith.constant 0 : index
    %c0_45 = arith.constant 0 : index
    %53 = vector.load %arg4[%c2_43, %c0_44, %c0_45] : memref<4x96x192xbf16, #tpu.memory_space<vmem>>, vector<1x96x192xbf16>
    %54 = vector.shape_cast %53 : vector<1x96x192xbf16> to vector<96x192xbf16>
    %cst_46 = arith.constant dense<0.000000e+00> : vector<14x192xf32>
    %55 = tpu.matmul %52, %54, %cst_46 {dimension_numbers = #tpu.dot_dimension_numbers<[1], [0], [0], [1], [0, 0, 1, 1], [], []>} : vector<14x96xbf16>, vector<96x192xbf16>, vector<14x192xf32> -> vector<14x192xf32>
    %56 = arith.addf %50, %55 : vector<14x192xf32>
    %c1_47 = arith.constant 1 : index
    %c16_48 = arith.constant 16 : index
    %57 = vector.load %arg16[%c1_47, %c16_48] : memref<15x112xf32, #tpu.memory_space<vmem>>, vector<14x96xf32>
    %58 = arith.truncf %57 : vector<14x96xf32> to vector<14x96xbf16>
    %c3_49 = arith.constant 3 : index
    %c0_50 = arith.constant 0 : index
    %c0_51 = arith.constant 0 : index
    %59 = vector.load %arg4[%c3_49, %c0_50, %c0_51] : memref<4x96x192xbf16, #tpu.memory_space<vmem>>, vector<1x96x192xbf16>
    %60 = vector.shape_cast %59 : vector<1x96x192xbf16> to vector<96x192xbf16>
    %cst_52 = arith.constant dense<0.000000e+00> : vector<14x192xf32>
    %61 = tpu.matmul %58, %60, %cst_52 {dimension_numbers = #tpu.dot_dimension_numbers<[1], [0], [0], [1], [0, 0, 1, 1], [], []>} : vector<14x96xbf16>, vector<96x192xbf16>, vector<14x192xf32> -> vector<14x192xf32>
    %62 = arith.addf %56, %61 : vector<14x192xf32>
    %c0_53 = arith.constant 0 : index
    %c0_54 = arith.constant 0 : index
    %63 = vector.load %arg5[%c0_53, %c0_54] : memref<1x192xf32, #tpu.memory_space<vmem>>, vector<1x192xf32>
    %64 = vector.broadcast %63 : vector<1x192xf32> to vector<14x192xf32>
    %65 = arith.addf %62, %64 : vector<14x192xf32>
    %cst_55 = arith.constant 0.000000e+00 : f32
    %66 = vector.broadcast %cst_55 : f32 to vector<14x192xf32>
    %67 = arith.cmpf oge, %65, %66 : vector<14x192xf32>
    %cst_56 = arith.constant 1.000000e-01 : f32
    %68 = vector.broadcast %cst_56 : f32 to vector<14x192xf32>
    %69 = arith.mulf %68, %65 : vector<14x192xf32>
    %70 = arith.select %67, %65, %69 : vector<14x192xi1>, vector<14x192xf32>
    %c0_57 = arith.constant 0 : index
    %c0_58 = arith.constant 0 : index
    %71 = vector.load %arg17[%c0_57, %c0_58] : memref<14x192xf32, #tpu.memory_space<vmem>>, vector<14x192xf32>
    tpu.vector_store %arg17[%c0_57, %c0_58], %70 {strides = array<i32>} : memref<14x192xf32, #tpu.memory_space<vmem>>, vector<14x192xf32>,
    %cst_59 = arith.constant 0.000000e+00 : f32
    %72 = vector.broadcast %cst_59 : f32 to vector<13x320xf32>
    %c0_60 = arith.constant 0 : index
    %c0_61 = arith.constant 0 : index
    %73 = vector.load %arg17[%c0_60, %c0_61] : memref<14x192xf32, #tpu.memory_space<vmem>>, vector<13x160xf32>
    %74 = arith.truncf %73 : vector<13x160xf32> to vector<13x160xbf16>
    %c0_62 = arith.constant 0 : index
    %c0_63 = arith.constant 0 : index
    %c0_64 = arith.constant 0 : index
    %75 = vector.load %arg6[%c0_62, %c0_63, %c0_64] : memref<4x160x320xbf16, #tpu.memory_space<vmem>>, vector<1x160x320xbf16>
    %76 = vector.shape_cast %75 : vector<1x160x320xbf16> to vector<160x320xbf16>
    %cst_65 = arith.constant dense<0.000000e+00> : vector<13x320xf32>
    %77 = tpu.matmul %74, %76, %cst_65 {dimension_numbers = #tpu.dot_dimension_numbers<[1], [0], [0], [1], [0, 0, 1, 1], [], []>} : vector<13x160xbf16>, vector<160x320xbf16>, vector<13x320xf32> -> vector<13x320xf32>
    %78 = arith.addf %72, %77 : vector<13x320xf32>
    %c0_66 = arith.constant 0 : index
    %c32 = arith.constant 32 : index
    %79 = vector.load %arg17[%c0_66, %c32] : memref<14x192xf32, #tpu.memory_space<vmem>>, vector<13x160xf32>
    %80 = arith.truncf %79 : vector<13x160xf32> to vector<13x160xbf16>
    %c1_67 = arith.constant 1 : index
    %c0_68 = arith.constant 0 : index
    %c0_69 = arith.constant 0 : index
    %81 = vector.load %arg6[%c1_67, %c0_68, %c0_69] : memref<4x160x320xbf16, #tpu.memory_space<vmem>>, vector<1x160x320xbf16>
    %82 = vector.shape_cast %81 : vector<1x160x320xbf16> to vector<160x320xbf16>
    %cst_70 = arith.constant dense<0.000000e+00> : vector<13x320xf32>
    %83 = tpu.matmul %80, %82, %cst_70 {dimension_numbers = #tpu.dot_dimension_numbers<[1], [0], [0], [1], [0, 0, 1, 1], [], []>} : vector<13x160xbf16>, vector<160x320xbf16>, vector<13x320xf32> -> vector<13x320xf32>
    %84 = arith.addf %78, %83 : vector<13x320xf32>
    %c1_71 = arith.constant 1 : index
    %c0_72 = arith.constant 0 : index
    %85 = vector.load %arg17[%c1_71, %c0_72] : memref<14x192xf32, #tpu.memory_space<vmem>>, vector<13x160xf32>
    %86 = arith.truncf %85 : vector<13x160xf32> to vector<13x160xbf16>
    %c2_73 = arith.constant 2 : index
    %c0_74 = arith.constant 0 : index
    %c0_75 = arith.constant 0 : index
    %87 = vector.load %arg6[%c2_73, %c0_74, %c0_75] : memref<4x160x320xbf16, #tpu.memory_space<vmem>>, vector<1x160x320xbf16>
    %88 = vector.shape_cast %87 : vector<1x160x320xbf16> to vector<160x320xbf16>
    %cst_76 = arith.constant dense<0.000000e+00> : vector<13x320xf32>
    %89 = tpu.matmul %86, %88, %cst_76 {dimension_numbers = #tpu.dot_dimension_numbers<[1], [0], [0], [1], [0, 0, 1, 1], [], []>} : vector<13x160xbf16>, vector<160x320xbf16>, vector<13x320xf32> -> vector<13x320xf32>
    %90 = arith.addf %84, %89 : vector<13x320xf32>
    %c1_77 = arith.constant 1 : index
    %c32_78 = arith.constant 32 : index
    %91 = vector.load %arg17[%c1_77, %c32_78] : memref<14x192xf32, #tpu.memory_space<vmem>>, vector<13x160xf32>
    %92 = arith.truncf %91 : vector<13x160xf32> to vector<13x160xbf16>
    %c3_79 = arith.constant 3 : index
    %c0_80 = arith.constant 0 : index
    %c0_81 = arith.constant 0 : index
    %93 = vector.load %arg6[%c3_79, %c0_80, %c0_81] : memref<4x160x320xbf16, #tpu.memory_space<vmem>>, vector<1x160x320xbf16>
    %94 = vector.shape_cast %93 : vector<1x160x320xbf16> to vector<160x320xbf16>
    %cst_82 = arith.constant dense<0.000000e+00> : vector<13x320xf32>
    %95 = tpu.matmul %92, %94, %cst_82 {dimension_numbers = #tpu.dot_dimension_numbers<[1], [0], [0], [1], [0, 0, 1, 1], [], []>} : vector<13x160xbf16>, vector<160x320xbf16>, vector<13x320xf32> -> vector<13x320xf32>
    %96 = arith.addf %90, %95 : vector<13x320xf32>
    %c0_83 = arith.constant 0 : index
    %c0_84 = arith.constant 0 : index
    %97 = vector.load %arg7[%c0_83, %c0_84] : memref<1x320xf32, #tpu.memory_space<vmem>>, vector<1x320xf32>
    %98 = vector.broadcast %97 : vector<1x320xf32> to vector<13x320xf32>
    %99 = arith.addf %96, %98 : vector<13x320xf32>
    %cst_85 = arith.constant 0.000000e+00 : f32
    %100 = vector.broadcast %cst_85 : f32 to vector<13x320xf32>
    %101 = arith.cmpf oge, %99, %100 : vector<13x320xf32>
    %cst_86 = arith.constant 1.000000e-01 : f32
    %102 = vector.broadcast %cst_86 : f32 to vector<13x320xf32>
    %103 = arith.mulf %102, %99 : vector<13x320xf32>
    %104 = arith.select %101, %99, %103 : vector<13x320xi1>, vector<13x320xf32>
    %cst_87 = arith.constant 0.000000e+00 : f32
    %105 = vector.broadcast %cst_87 : f32 to vector<15x448xf32>
    %c0_88 = arith.constant 0 : index
    %c0_89 = arith.constant 0 : index
    %106 = vector.load %arg18[%c0_88, %c0_89] : memref<15x448xf32, #tpu.memory_space<vmem>>, vector<15x448xf32>
    tpu.vector_store %arg18[%c0_88, %c0_89], %105 {strides = array<i32>} : memref<15x448xf32, #tpu.memory_space<vmem>>, vector<15x448xf32>,
    %c1_90 = arith.constant 1 : index
    %c64 = arith.constant 64 : index
    %107 = vector.load %arg18[%c1_90, %c64] : memref<15x448xf32, #tpu.memory_space<vmem>>, vector<13x320xf32>
    tpu.vector_store %arg18[%c1_90, %c64], %104 {strides = array<i32>} : memref<15x448xf32, #tpu.memory_space<vmem>>, vector<13x320xf32>,
    %cst_91 = arith.constant 0.000000e+00 : f32
    %108 = vector.broadcast %cst_91 : f32 to vector<14x192xf32>
    %c0_92 = arith.constant 0 : index
    %c0_93 = arith.constant 0 : index
    %109 = vector.load %arg18[%c0_92, %c0_93] : memref<15x448xf32, #tpu.memory_space<vmem>>, vector<14x384xf32>
    %110 = arith.truncf %109 : vector<14x384xf32> to vector<14x384xbf16>
    %c0_94 = arith.constant 0 : index
    %c0_95 = arith.constant 0 : index
    %c0_96 = arith.constant 0 : index
    %111 = vector.load %arg8[%c0_94, %c0_95, %c0_96] : memref<4x384x192xbf16, #tpu.memory_space<vmem>>, vector<1x384x192xbf16>
    %112 = vector.shape_cast %111 : vector<1x384x192xbf16> to vector<384x192xbf16>
    %cst_97 = arith.constant dense<0.000000e+00> : vector<14x192xf32>
    %113 = tpu.matmul %110, %112, %cst_97 {dimension_numbers = #tpu.dot_dimension_numbers<[1], [0], [0], [1], [0, 0, 1, 1], [], []>} : vector<14x384xbf16>, vector<384x192xbf16>, vector<14x192xf32> -> vector<14x192xf32>
    %114 = arith.addf %108, %113 : vector<14x192xf32>
    %c0_98 = arith.constant 0 : index
    %c64_99 = arith.constant 64 : index
    %115 = vector.load %arg18[%c0_98, %c64_99] : memref<15x448xf32, #tpu.memory_space<vmem>>, vector<14x384xf32>
    %116 = arith.truncf %115 : vector<14x384xf32> to vector<14x384xbf16>
    %c1_100 = arith.constant 1 : index
    %c0_101 = arith.constant 0 : index
    %c0_102 = arith.constant 0 : index
    %117 = vector.load %arg8[%c1_100, %c0_101, %c0_102] : memref<4x384x192xbf16, #tpu.memory_space<vmem>>, vector<1x384x192xbf16>
    %118 = vector.shape_cast %117 : vector<1x384x192xbf16> to vector<384x192xbf16>
    %cst_103 = arith.constant dense<0.000000e+00> : vector<14x192xf32>
    %119 = tpu.matmul %116, %118, %cst_103 {dimension_numbers = #tpu.dot_dimension_numbers<[1], [0], [0], [1], [0, 0, 1, 1], [], []>} : vector<14x384xbf16>, vector<384x192xbf16>, vector<14x192xf32> -> vector<14x192xf32>
    %120 = arith.addf %114, %119 : vector<14x192xf32>
    %c1_104 = arith.constant 1 : index
    %c0_105 = arith.constant 0 : index
    %121 = vector.load %arg18[%c1_104, %c0_105] : memref<15x448xf32, #tpu.memory_space<vmem>>, vector<14x384xf32>
    %122 = arith.truncf %121 : vector<14x384xf32> to vector<14x384xbf16>
    %c2_106 = arith.constant 2 : index
    %c0_107 = arith.constant 0 : index
    %c0_108 = arith.constant 0 : index
    %123 = vector.load %arg8[%c2_106, %c0_107, %c0_108] : memref<4x384x192xbf16, #tpu.memory_space<vmem>>, vector<1x384x192xbf16>
    %124 = vector.shape_cast %123 : vector<1x384x192xbf16> to vector<384x192xbf16>
    %cst_109 = arith.constant dense<0.000000e+00> : vector<14x192xf32>
    %125 = tpu.matmul %122, %124, %cst_109 {dimension_numbers = #tpu.dot_dimension_numbers<[1], [0], [0], [1], [0, 0, 1, 1], [], []>} : vector<14x384xbf16>, vector<384x192xbf16>, vector<14x192xf32> -> vector<14x192xf32>
    %126 = arith.addf %120, %125 : vector<14x192xf32>
    %c1_110 = arith.constant 1 : index
    %c64_111 = arith.constant 64 : index
    %127 = vector.load %arg18[%c1_110, %c64_111] : memref<15x448xf32, #tpu.memory_space<vmem>>, vector<14x384xf32>
    %128 = arith.truncf %127 : vector<14x384xf32> to vector<14x384xbf16>
    %c3_112 = arith.constant 3 : index
    %c0_113 = arith.constant 0 : index
    %c0_114 = arith.constant 0 : index
    %129 = vector.load %arg8[%c3_112, %c0_113, %c0_114] : memref<4x384x192xbf16, #tpu.memory_space<vmem>>, vector<1x384x192xbf16>
    %130 = vector.shape_cast %129 : vector<1x384x192xbf16> to vector<384x192xbf16>
    %cst_115 = arith.constant dense<0.000000e+00> : vector<14x192xf32>
    %131 = tpu.matmul %128, %130, %cst_115 {dimension_numbers = #tpu.dot_dimension_numbers<[1], [0], [0], [1], [0, 0, 1, 1], [], []>} : vector<14x384xbf16>, vector<384x192xbf16>, vector<14x192xf32> -> vector<14x192xf32>
    %132 = arith.addf %126, %131 : vector<14x192xf32>
    %c0_116 = arith.constant 0 : index
    %c0_117 = arith.constant 0 : index
    %133 = vector.load %arg9[%c0_116, %c0_117] : memref<1x192xf32, #tpu.memory_space<vmem>>, vector<1x192xf32>
    %134 = vector.broadcast %133 : vector<1x192xf32> to vector<14x192xf32>
    %135 = arith.addf %132, %134 : vector<14x192xf32>
    %cst_118 = arith.constant 0.000000e+00 : f32
    %136 = vector.broadcast %cst_118 : f32 to vector<14x192xf32>
    %137 = arith.cmpf oge, %135, %136 : vector<14x192xf32>
    %cst_119 = arith.constant 1.000000e-01 : f32
    %138 = vector.broadcast %cst_119 : f32 to vector<14x192xf32>
    %139 = arith.mulf %138, %135 : vector<14x192xf32>
    %140 = arith.select %137, %135, %139 : vector<14x192xi1>, vector<14x192xf32>
    %cst_120 = arith.constant 0.000000e+00 : f32
    %141 = vector.broadcast %cst_120 : f32 to vector<16x256xf32>
    %c0_121 = arith.constant 0 : index
    %c0_122 = arith.constant 0 : index
    %142 = vector.load %arg19[%c0_121, %c0_122] : memref<16x256xf32, #tpu.memory_space<vmem>>, vector<16x256xf32>
    tpu.vector_store %arg19[%c0_121, %c0_122], %141 {strides = array<i32>} : memref<16x256xf32, #tpu.memory_space<vmem>>, vector<16x256xf32>,
    %c1_123 = arith.constant 1 : index
    %c32_124 = arith.constant 32 : index
    %143 = vector.load %arg19[%c1_123, %c32_124] : memref<16x256xf32, #tpu.memory_space<vmem>>, vector<14x192xf32>
    tpu.vector_store %arg19[%c1_123, %c32_124], %140 {strides = array<i32>} : memref<16x256xf32, #tpu.memory_space<vmem>>, vector<14x192xf32>,
    %cst_125 = arith.constant 0.000000e+00 : f32
    %144 = vector.broadcast %cst_125 : f32 to vector<15x112xf32>
    %c0_126 = arith.constant 0 : index
    %c0_127 = arith.constant 0 : index
    %145 = vector.load %arg19[%c0_126, %c0_127] : memref<16x256xf32, #tpu.memory_space<vmem>>, vector<15x224xf32>
    %146 = arith.truncf %145 : vector<15x224xf32> to vector<15x224xbf16>
    %c0_128 = arith.constant 0 : index
    %c0_129 = arith.constant 0 : index
    %c0_130 = arith.constant 0 : index
    %147 = vector.load %arg10[%c0_128, %c0_129, %c0_130] : memref<4x224x112xbf16, #tpu.memory_space<vmem>>, vector<1x224x112xbf16>
    %148 = vector.shape_cast %147 : vector<1x224x112xbf16> to vector<224x112xbf16>
    %cst_131 = arith.constant dense<0.000000e+00> : vector<15x112xf32>
    %149 = tpu.matmul %146, %148, %cst_131 {dimension_numbers = #tpu.dot_dimension_numbers<[1], [0], [0], [1], [0, 0, 1, 1], [], []>} : vector<15x224xbf16>, vector<224x112xbf16>, vector<15x112xf32> -> vector<15x112xf32>
    %150 = arith.addf %144, %149 : vector<15x112xf32>
    %c0_132 = arith.constant 0 : index
    %c32_133 = arith.constant 32 : index
    %151 = vector.load %arg19[%c0_132, %c32_133] : memref<16x256xf32, #tpu.memory_space<vmem>>, vector<15x224xf32>
    %152 = arith.truncf %151 : vector<15x224xf32> to vector<15x224xbf16>
    %c1_134 = arith.constant 1 : index
    %c0_135 = arith.constant 0 : index
    %c0_136 = arith.constant 0 : index
    %153 = vector.load %arg10[%c1_134, %c0_135, %c0_136] : memref<4x224x112xbf16, #tpu.memory_space<vmem>>, vector<1x224x112xbf16>
    %154 = vector.shape_cast %153 : vector<1x224x112xbf16> to vector<224x112xbf16>
    %cst_137 = arith.constant dense<0.000000e+00> : vector<15x112xf32>
    %155 = tpu.matmul %152, %154, %cst_137 {dimension_numbers = #tpu.dot_dimension_numbers<[1], [0], [0], [1], [0, 0, 1, 1], [], []>} : vector<15x224xbf16>, vector<224x112xbf16>, vector<15x112xf32> -> vector<15x112xf32>
    %156 = arith.addf %150, %155 : vector<15x112xf32>
    %c1_138 = arith.constant 1 : index
    %c0_139 = arith.constant 0 : index
    %157 = vector.load %arg19[%c1_138, %c0_139] : memref<16x256xf32, #tpu.memory_space<vmem>>, vector<15x224xf32>
    %158 = arith.truncf %157 : vector<15x224xf32> to vector<15x224xbf16>
    %c2_140 = arith.constant 2 : index
    %c0_141 = arith.constant 0 : index
    %c0_142 = arith.constant 0 : index
    %159 = vector.load %arg10[%c2_140, %c0_141, %c0_142] : memref<4x224x112xbf16, #tpu.memory_space<vmem>>, vector<1x224x112xbf16>
    %160 = vector.shape_cast %159 : vector<1x224x112xbf16> to vector<224x112xbf16>
    %cst_143 = arith.constant dense<0.000000e+00> : vector<15x112xf32>
    %161 = tpu.matmul %158, %160, %cst_143 {dimension_numbers = #tpu.dot_dimension_numbers<[1], [0], [0], [1], [0, 0, 1, 1], [], []>} : vector<15x224xbf16>, vector<224x112xbf16>, vector<15x112xf32> -> vector<15x112xf32>
    %162 = arith.addf %156, %161 : vector<15x112xf32>
    %c1_144 = arith.constant 1 : index
    %c32_145 = arith.constant 32 : index
    %163 = vector.load %arg19[%c1_144, %c32_145] : memref<16x256xf32, #tpu.memory_space<vmem>>, vector<15x224xf32>
    %164 = arith.truncf %163 : vector<15x224xf32> to vector<15x224xbf16>
    %c3_146 = arith.constant 3 : index
    %c0_147 = arith.constant 0 : index
    %c0_148 = arith.constant 0 : index
    %165 = vector.load %arg10[%c3_146, %c0_147, %c0_148] : memref<4x224x112xbf16, #tpu.memory_space<vmem>>, vector<1x224x112xbf16>
    %166 = vector.shape_cast %165 : vector<1x224x112xbf16> to vector<224x112xbf16>
    %cst_149 = arith.constant dense<0.000000e+00> : vector<15x112xf32>
    %167 = tpu.matmul %164, %166, %cst_149 {dimension_numbers = #tpu.dot_dimension_numbers<[1], [0], [0], [1], [0, 0, 1, 1], [], []>} : vector<15x224xbf16>, vector<224x112xbf16>, vector<15x112xf32> -> vector<15x112xf32>
    %168 = arith.addf %162, %167 : vector<15x112xf32>
    %c0_150 = arith.constant 0 : index
    %c0_151 = arith.constant 0 : index
    %169 = vector.load %arg11[%c0_150, %c0_151] : memref<1x112xf32, #tpu.memory_space<vmem>>, vector<1x112xf32>
    %170 = vector.broadcast %169 : vector<1x112xf32> to vector<15x112xf32>
    %171 = arith.addf %168, %170 : vector<15x112xf32>
    %cst_152 = arith.constant 0.000000e+00 : f32
    %172 = vector.broadcast %cst_152 : f32 to vector<15x112xf32>
    %173 = arith.cmpf oge, %171, %172 : vector<15x112xf32>
    %cst_153 = arith.constant 1.000000e-01 : f32
    %174 = vector.broadcast %cst_153 : f32 to vector<15x112xf32>
    %175 = arith.mulf %174, %171 : vector<15x112xf32>
    %176 = arith.select %173, %171, %175 : vector<15x112xi1>, vector<15x112xf32>
    %cst_154 = arith.constant 0.000000e+00 : f32
    %177 = vector.broadcast %cst_154 : f32 to vector<17x144xf32>
    %c0_155 = arith.constant 0 : index
    %c0_156 = arith.constant 0 : index
    %178 = vector.load %arg20[%c0_155, %c0_156] : memref<17x144xf32, #tpu.memory_space<vmem>>, vector<17x144xf32>
    tpu.vector_store %arg20[%c0_155, %c0_156], %177 {strides = array<i32>} : memref<17x144xf32, #tpu.memory_space<vmem>>, vector<17x144xf32>,
    %c1_157 = arith.constant 1 : index
    %c16_158 = arith.constant 16 : index
    %179 = vector.load %arg20[%c1_157, %c16_158] : memref<17x144xf32, #tpu.memory_space<vmem>>, vector<15x112xf32>
    tpu.vector_store %arg20[%c1_157, %c16_158], %176 {strides = array<i32>} : memref<17x144xf32, #tpu.memory_space<vmem>>, vector<15x112xf32>,
    %cst_159 = arith.constant 0.000000e+00 : f32
    %180 = vector.broadcast %cst_159 : f32 to vector<16x8xf32>
    %c0_160 = arith.constant 0 : index
    %c0_161 = arith.constant 0 : index
    %181 = vector.load %arg20[%c0_160, %c0_161] : memref<17x144xf32, #tpu.memory_space<vmem>>, vector<16x128xf32>
    %182 = arith.truncf %181 : vector<16x128xf32> to vector<16x128xbf16>
    %c0_162 = arith.constant 0 : index
    %c0_163 = arith.constant 0 : index
    %c0_164 = arith.constant 0 : index
    %183 = vector.load %arg12[%c0_162, %c0_163, %c0_164] : memref<4x128x8xbf16, #tpu.memory_space<vmem>>, vector<1x128x8xbf16>
    %184 = vector.shape_cast %183 : vector<1x128x8xbf16> to vector<128x8xbf16>
    %cst_165 = arith.constant dense<0.000000e+00> : vector<16x8xf32>
    %185 = tpu.matmul %182, %184, %cst_165 {dimension_numbers = #tpu.dot_dimension_numbers<[1], [0], [0], [1], [0, 0, 1, 1], [], []>} : vector<16x128xbf16>, vector<128x8xbf16>, vector<16x8xf32> -> vector<16x8xf32>
    %186 = arith.addf %180, %185 : vector<16x8xf32>
    %c0_166 = arith.constant 0 : index
    %c16_167 = arith.constant 16 : index
    %187 = vector.load %arg20[%c0_166, %c16_167] : memref<17x144xf32, #tpu.memory_space<vmem>>, vector<16x128xf32>
    %188 = arith.truncf %187 : vector<16x128xf32> to vector<16x128xbf16>
    %c1_168 = arith.constant 1 : index
    %c0_169 = arith.constant 0 : index
    %c0_170 = arith.constant 0 : index
    %189 = vector.load %arg12[%c1_168, %c0_169, %c0_170] : memref<4x128x8xbf16, #tpu.memory_space<vmem>>, vector<1x128x8xbf16>
    %190 = vector.shape_cast %189 : vector<1x128x8xbf16> to vector<128x8xbf16>
    %cst_171 = arith.constant dense<0.000000e+00> : vector<16x8xf32>
    %191 = tpu.matmul %188, %190, %cst_171 {dimension_numbers = #tpu.dot_dimension_numbers<[1], [0], [0], [1], [0, 0, 1, 1], [], []>} : vector<16x128xbf16>, vector<128x8xbf16>, vector<16x8xf32> -> vector<16x8xf32>
    %192 = arith.addf %186, %191 : vector<16x8xf32>
    %c1_172 = arith.constant 1 : index
    %c0_173 = arith.constant 0 : index
    %193 = vector.load %arg20[%c1_172, %c0_173] : memref<17x144xf32, #tpu.memory_space<vmem>>, vector<16x128xf32>
    %194 = arith.truncf %193 : vector<16x128xf32> to vector<16x128xbf16>
    %c2_174 = arith.constant 2 : index
    %c0_175 = arith.constant 0 : index
    %c0_176 = arith.constant 0 : index
    %195 = vector.load %arg12[%c2_174, %c0_175, %c0_176] : memref<4x128x8xbf16, #tpu.memory_space<vmem>>, vector<1x128x8xbf16>
    %196 = vector.shape_cast %195 : vector<1x128x8xbf16> to vector<128x8xbf16>
    %cst_177 = arith.constant dense<0.000000e+00> : vector<16x8xf32>
    %197 = tpu.matmul %194, %196, %cst_177 {dimension_numbers = #tpu.dot_dimension_numbers<[1], [0], [0], [1], [0, 0, 1, 1], [], []>} : vector<16x128xbf16>, vector<128x8xbf16>, vector<16x8xf32> -> vector<16x8xf32>
    %198 = arith.addf %192, %197 : vector<16x8xf32>
    %c1_178 = arith.constant 1 : index
    %c16_179 = arith.constant 16 : index
    %199 = vector.load %arg20[%c1_178, %c16_179] : memref<17x144xf32, #tpu.memory_space<vmem>>, vector<16x128xf32>
    %200 = arith.truncf %199 : vector<16x128xf32> to vector<16x128xbf16>
    %c3_180 = arith.constant 3 : index
    %c0_181 = arith.constant 0 : index
    %c0_182 = arith.constant 0 : index
    %201 = vector.load %arg12[%c3_180, %c0_181, %c0_182] : memref<4x128x8xbf16, #tpu.memory_space<vmem>>, vector<1x128x8xbf16>
    %202 = vector.shape_cast %201 : vector<1x128x8xbf16> to vector<128x8xbf16>
    %cst_183 = arith.constant dense<0.000000e+00> : vector<16x8xf32>
    %203 = tpu.matmul %200, %202, %cst_183 {dimension_numbers = #tpu.dot_dimension_numbers<[1], [0], [0], [1], [0, 0, 1, 1], [], []>} : vector<16x128xbf16>, vector<128x8xbf16>, vector<16x8xf32> -> vector<16x8xf32>
    %204 = arith.addf %198, %203 : vector<16x8xf32>
    %c0_184 = arith.constant 0 : index
    %c0_185 = arith.constant 0 : index
    %205 = vector.load %arg13[%c0_184, %c0_185] : memref<1x8xf32, #tpu.memory_space<vmem>>, vector<1x8xf32>
    %206 = vector.broadcast %205 : vector<1x8xf32> to vector<16x8xf32>
    %207 = arith.addf %204, %206 : vector<16x8xf32>
    %c0_186 = arith.constant 0 : index
    %c0_187 = arith.constant 0 : index
    %208 = vector.load %arg21[%c0_186, %c0_187] : memref<16x8xf32, #tpu.memory_space<vmem>>, vector<16x8xf32>
    tpu.vector_store %arg21[%c0_186, %c0_187], %207 {strides = array<i32>} : memref<16x8xf32, #tpu.memory_space<vmem>>, vector<16x8xf32>,
    %c0_188 = arith.constant 0 : index
    %c0_189 = arith.constant 0 : index
    %209 = vector.load %arg21[%c0_188, %c0_189] : memref<16x8xf32, #tpu.memory_space<vmem>>, vector<16x8xf32>
    %c0_190 = arith.constant 0 : index
    %c0_191 = arith.constant 0 : index
    %210 = vector.load %arg21[%c0_190, %c0_191] : memref<16x8xf32, #tpu.memory_space<vmem>>, vector<8x8xf32>
    %c8 = arith.constant 8 : index
    %c0_192 = arith.constant 0 : index
    %211 = vector.load %arg21[%c8, %c0_192] : memref<16x8xf32, #tpu.memory_space<vmem>>, vector<8x8xf32>
    %cst_193 = arith.constant dense<0.000000e+00> : vector<8x8xf32>
    %212 = tpu.matmul %209, %209, %cst_193 {dimension_numbers = #tpu.dot_dimension_numbers<[0], [0], [1], [1], [0, 1, 1, 1], [], []>} : vector<16x8xf32>, vector<16x8xf32>, vector<8x8xf32> -> vector<8x8xf32>
    %cst_194 = arith.constant dense<0.000000e+00> : vector<8x8xf32>
    %213 = tpu.matmul %210, %211, %cst_194 {dimension_numbers = #tpu.dot_dimension_numbers<[0], [0], [1], [1], [0, 1, 1, 1], [], []>} : vector<8x8xf32>, vector<8x8xf32>, vector<8x8xf32> -> vector<8x8xf32>
    %cst_195 = arith.constant dense<0.000000e+00> : vector<8x8xf32>
    %214 = tpu.matmul %211, %210, %cst_195 {dimension_numbers = #tpu.dot_dimension_numbers<[0], [0], [1], [1], [0, 1, 1, 1], [], []>} : vector<8x8xf32>, vector<8x8xf32>, vector<8x8xf32> -> vector<8x8xf32>
    %215 = arith.subf %213, %214 : vector<8x8xf32>
    %216 = tpu.iota {dimensions = array<i32: 0>} : vector<8x8xi32>
    %217 = tpu.iota {dimensions = array<i32: 1>} : vector<8x8xi32>
    %218 = arith.cmpi eq, %216, %217 : vector<8x8xi32>
    %219 = arith.extui %218 : vector<8x8xi1> to vector<8x8xi32>
    %220 = arith.sitofp %219 : vector<8x8xi32> to vector<8x8xf32>
    %221 = arith.addf %212, %220 : vector<8x8xf32>
    %c0_196 = arith.constant 0 : index
    %c0_197 = arith.constant 0 : index
    %c0_198 = arith.constant 0 : index
    %222 = vector.load %arg14[%c0_196, %c0_197, %c0_198] : memref<1x8x8xf32, #tpu.memory_space<vmem>>, vector<1x8x8xf32>
    %223 = vector.shape_cast %222 : vector<1x8x8xf32> to vector<8x8xf32>
    %224 = vector.shape_cast %221 : vector<8x8xf32> to vector<1x8x8xf32>
    tpu.vector_store %arg14[%c0_196, %c0_197, %c0_198], %224 {strides = array<i32>} : memref<1x8x8xf32, #tpu.memory_space<vmem>>, vector<1x8x8xf32>,
    %c0_199 = arith.constant 0 : index
    %c0_200 = arith.constant 0 : index
    %c0_201 = arith.constant 0 : index
    %225 = vector.load %arg15[%c0_199, %c0_200, %c0_201] : memref<1x8x8xf32, #tpu.memory_space<vmem>>, vector<1x8x8xf32>
    %226 = vector.shape_cast %225 : vector<1x8x8xf32> to vector<8x8xf32>
    %227 = vector.shape_cast %215 : vector<8x8xf32> to vector<1x8x8xf32>
    tpu.vector_store %arg15[%c0_199, %c0_200, %c0_201], %227 {strides = array<i32>} : memref<1x8x8xf32, #tpu.memory_space<vmem>>, vector<1x8x8xf32>,
    return
  }
  func.func @transform_0(%arg0: i32) -> (i32, i32, i32) {
    %c0_i32 = arith.constant 0 : i32
    %c0_i32_0 = arith.constant 0 : i32
    %c0_i32_1 = arith.constant 0 : i32
    return %arg0, %c0_i32, %c0_i32_0 : i32, i32, i32
  }
  func.func @transform_1(%arg0: i32) -> (i32, i32, i32) {
    %c0_i32 = arith.constant 0 : i32
    %c0_i32_0 = arith.constant 0 : i32
    %c0_i32_1 = arith.constant 0 : i32
    %c0_i32_2 = arith.constant 0 : i32
    return %c0_i32, %c0_i32_0, %c0_i32_1 : i32, i32, i32
  }
  func.func @transform_2(%arg0: i32) -> (i32, i32) {
    %c0_i32 = arith.constant 0 : i32
    %c0_i32_0 = arith.constant 0 : i32
    %c0_i32_1 = arith.constant 0 : i32
    return %c0_i32, %c0_i32_0 : i32, i32
  }
  func.func @transform_3(%arg0: i32) -> (i32, i32, i32) {
    %c0_i32 = arith.constant 0 : i32
    %c0_i32_0 = arith.constant 0 : i32
    %c0_i32_1 = arith.constant 0 : i32
    %c0_i32_2 = arith.constant 0 : i32
    return %c0_i32, %c0_i32_0, %c0_i32_1 : i32, i32, i32
  }
  func.func @transform_4(%arg0: i32) -> (i32, i32) {
    %c0_i32 = arith.constant 0 : i32
    %c0_i32_0 = arith.constant 0 : i32
    %c0_i32_1 = arith.constant 0 : i32
    return %c0_i32, %c0_i32_0 : i32, i32
  }
  func.func @transform_5(%arg0: i32) -> (i32, i32, i32) {
    %c0_i32 = arith.constant 0 : i32
    %c0_i32_0 = arith.constant 0 : i32
    %c0_i32_1 = arith.constant 0 : i32
    %c0_i32_2 = arith.constant 0 : i32
    return %c0_i32, %c0_i32_0, %c0_i32_1 : i32, i32, i32
  }
  func.func @transform_6(%arg0: i32) -> (i32, i32) {
    %c0_i32 = arith.constant 0 : i32
    %c0_i32_0 = arith.constant 0 : i32
    %c0_i32_1 = arith.constant 0 : i32
    return %c0_i32, %c0_i32_0 : i32, i32
  }
  func.func @transform_7(%arg0: i32) -> (i32, i32, i32) {
    %c0_i32 = arith.constant 0 : i32
    %c0_i32_0 = arith.constant 0 : i32
    %c0_i32_1 = arith.constant 0 : i32
    %c0_i32_2 = arith.constant 0 : i32
    return %c0_i32, %c0_i32_0, %c0_i32_1 : i32, i32, i32
  }
  func.func @transform_8(%arg0: i32) -> (i32, i32) {
    %c0_i32 = arith.constant 0 : i32
    %c0_i32_0 = arith.constant 0 : i32
    %c0_i32_1 = arith.constant 0 : i32
    return %c0_i32, %c0_i32_0 : i32, i32
  }
  func.func @transform_9(%arg0: i32) -> (i32, i32, i32) {
    %c0_i32 = arith.constant 0 : i32
    %c0_i32_0 = arith.constant 0 : i32
    %c0_i32_1 = arith.constant 0 : i32
    %c0_i32_2 = arith.constant 0 : i32
    return %c0_i32, %c0_i32_0, %c0_i32_1 : i32, i32, i32
  }
  func.func @transform_10(%arg0: i32) -> (i32, i32) {
    %c0_i32 = arith.constant 0 : i32
    %c0_i32_0 = arith.constant 0 : i32
    %c0_i32_1 = arith.constant 0 : i32
    return %c0_i32, %c0_i32_0 : i32, i32
  }
  func.func @transform_11(%arg0: i32) -> (i32, i32, i32) {
    %c0_i32 = arith.constant 0 : i32
    %c0_i32_0 = arith.constant 0 : i32
    %c0_i32_1 = arith.constant 0 : i32
    %c0_i32_2 = arith.constant 0 : i32
    return %c0_i32, %c0_i32_0, %c0_i32_1 : i32, i32, i32
  }
  func.func @transform_12(%arg0: i32) -> (i32, i32) {
    %c0_i32 = arith.constant 0 : i32
    %c0_i32_0 = arith.constant 0 : i32
    %c0_i32_1 = arith.constant 0 : i32
    return %c0_i32, %c0_i32_0 : i32, i32
  }
  func.func @transform_13(%arg0: i32) -> (i32, i32, i32) {
    %c0_i32 = arith.constant 0 : i32
    %c0_i32_0 = arith.constant 0 : i32
    %c0_i32_1 = arith.constant 0 : i32
    return %arg0, %c0_i32, %c0_i32_0 : i32, i32, i32
  }
  func.func @transform_14(%arg0: i32) -> (i32, i32, i32) {
    %c0_i32 = arith.constant 0 : i32
    %c0_i32_0 = arith.constant 0 : i32
    %c0_i32_1 = arith.constant 0 : i32
    return %arg0, %c0_i32, %c0_i32_0 : i32, i32, i32
  }
}

</mosaic_0001>

<llo_original>
// kernel: tile.33
$region0: #{tile.33}
  #allocation0 [shape = 's32[1]{0}', space=sflag, size = 0x4, scoped, tag = 'scoped memory for tile.33']
  %s0 = inlined_call_operand.vmem [shape: f32[16], index: 0, kind: input, shape index: {}]
  %s1 = inlined_call_operand.vmem [shape: f32[7,16], index: 1, kind: output, shape index: {}]
  // Predicated region
  $region2: #{tile.33} parent=0 // pred_check
    _
  $region3: #{tile.33} parent=0 // pred_check_branch
    %3 = sbr.rel (0) target = $region5
  $region4: #{tile.33} parent=0 // pred_region
    _
  $region5: #{tile.33} parent=0 // pred_fallthru
    _
  %v4 = vld [vmem:[%s0] ss:$0 sm:$0xff]
  %5 = vst [vmem:[%s1] sm:$0xff] %v4

// kernel: tile.34
$region0: #{tile.34}
  %s0 = inlined_call_operand.vmem [shape: f32[7,16], index: 0, kind: input, shape index: {}]
  %s1 = inlined_call_operand.vmem [shape: f32[1,112], index: 1, kind: output, shape index: {}]
  $region1: #{tile.34} parent=0
    #allocation0 [shape = 'u8[4096]{0}', space=vmem, size = 0x1000, scoped, tag = 'scoped mem for output reshape']
    %v2 = vld [vmem:[%s0] sm:$0x1]
    %vm3 = vcmask 130048
    %4 = vst.msk [vmem:[#allocation0] sm:$0x1] %vm3, %v2
    %s5 = scalar_lea.vmem %s0, 6
    %v6 = vld [vmem:[%s5] sm:$0x1]
    %7 = vrot.lane.b32.xlu0 %v6, 96
    %v8 = vpop.permute.xlu0 %7
    %vm9 = vcmask 917248
    %10 = vst.msk [vmem:[#allocation0] sm:$0x1] %vm9, %v8
    %s11 = scalar_lea.vmem %s0, 5
    %v12 = vld [vmem:[%s11] sm:$0x1]
    %13 = vrot.lane.b32.xlu0 %v12, 80
    %v14 = vpop.permute.xlu0 %13
    %vm15 = vcmask 786048
    %16 = vst.msk [vmem:[#allocation0] sm:$0x1] %vm15, %v14
    %s17 = scalar_lea.vmem %s0, 4
    %v18 = vld [vmem:[%s17] sm:$0x1]
    %19 = vrot.lane.b32.xlu0 %v18, 64
    %v20 = vpop.permute.xlu0 %19
    %vm21 = vcmask 654848
    %22 = vst.msk [vmem:[#allocation0] sm:$0x1] %vm21, %v20
    %s23 = scalar_lea.vmem %s0, 3
    %v24 = vld [vmem:[%s23] sm:$0x1]
    %25 = vrot.lane.b32.xlu0 %v24, 48
    %v26 = vpop.permute.xlu0 %25
    %vm27 = vcmask 523648
    %28 = vst.msk [vmem:[#allocation0] sm:$0x1] %vm27, %v26
    %s29 = scalar_lea.vmem %s0, 2
    %v30 = vld [vmem:[%s29] sm:$0x1]
    %31 = vrot.lane.b32.xlu0 %v30, 32
    %v32 = vpop.permute.xlu0 %31
    %vm33 = vcmask 392448
    %34 = vst.msk [vmem:[#allocation0] sm:$0x1] %vm33, %v32
    %s35 = scalar_lea.vmem %s0, 1
    %v36 = vld [vmem:[%s35] sm:$0x1]
    %37 = vrot.lane.b32.xlu0 %v36, 16
    %v38 = vpop.permute.xlu0 %37
    %vm39 = vcmask 261248
    %40 = vst.msk [vmem:[#allocation0] sm:$0x1] %vm39, %v38
    %s42 = sshll.u32 1, 1
    %s43 = ssub.s32 %s42, 1
    %v45 = vld [vmem:[#allocation0] sm:%s43]
    %s46 = sshll.u32 1, 1
    %s47 = ssub.s32 %s46, 1
    %48 = vst [vmem:[%s1] sm:%s47] %v45

// kernel: tile.38
$region0: #{tile.38}
  #allocation0 [shape = 's32[1]{0}', space=sflag, size = 0x4, scoped, tag = 'scoped memory for tile.38']
  %s0 = inlined_call_operand.vmem [shape: f32[32], index: 0, kind: input, shape index: {}]
  %s1 = inlined_call_operand.vmem [shape: f32[6,32], index: 1, kind: output, shape index: {}]
  // Predicated region
  $region2: #{tile.38} parent=0 // pred_check
    _
  $region3: #{tile.38} parent=0 // pred_check_branch
    %3 = sbr.rel (0) target = $region5
  $region4: #{tile.38} parent=0 // pred_region
    _
  $region5: #{tile.38} parent=0 // pred_fallthru
    _
  %v4 = vld [vmem:[%s0] ss:$0 sm:$0xff]
  %5 = vst [vmem:[%s1] sm:$0xff] %v4

// kernel: tile.39
$region0: #{tile.39}
  %s0 = inlined_call_operand.vmem [shape: f32[6,32], index: 0, kind: input, shape index: {}]
  %s1 = inlined_call_operand.vmem [shape: f32[1,192], index: 1, kind: output, shape index: {}]
  $region1: #{tile.39} parent=0
    #allocation0 [shape = 'u8[8192]{0}', space=vmem, size = 0x2000, scoped, tag = 'scoped mem for output reshape']
    %s2 = smov 3
    %v3 = vld [vmem:[%s0] ss:$4 sm:%s2]
    %vm4 = vcmask 261120
    %5 = vst.msk [vmem:[#allocation0] ss:$8 sm:$0x3] %vm4, %v3
    %s6 = scalar_lea.vmem %s0, 3
    %v7 = vld [vmem:[%s6] sm:$0x1]
    %8 = vrot.lane.b32.xlu0 %v7, 96
    %v9 = vpop.permute.xlu0 %8
    %vm10 = vcmask 1048320
    %11 = vst.msk [vmem:[#allocation0] sm:$0x1] %vm10, %v9
    %s12 = scalar_lea.vmem %s0, 2
    %v13 = vld [vmem:[%s12] sm:$0x1]
    %14 = vrot.lane.b32.xlu0 %v13, 64
    %v15 = vpop.permute.xlu0 %14
    %vm16 = vcmask 785920
    %17 = vst.msk [vmem:[#allocation0] sm:$0x1] %vm16, %v15
    %s18 = scalar_lea.vmem %s0, 1
    %s19 = smov 3
    %v20 = vld [vmem:[%s18] ss:$4 sm:%s19]
    %21 = vrot.lane.b32.xlu0 %v20, 32
    %v22 = vpop.permute.xlu0 %21
    %vm23 = vcmask 523520
    %24 = vst.msk [vmem:[#allocation0] ss:$8 sm:$0x3] %vm23, %v22
    %s26 = sshll.u32 1, 1
    %s27 = ssub.s32 %s26, 1
    %v29 = vld [vmem:[#allocation0] sm:%s27]
    %s30 = sshll.u32 1, 1
    %s31 = ssub.s32 %s30, 1
    %32 = vst [vmem:[%s1] sm:%s31] %v29
    %s33 = scalar_lea.vmem [#allocation0], 8
    %v34 = vld [vmem:[%s33] sm:%s27]
    %s35 = sshll.u32 1, 1
    %s36 = ssub.s32 %s35, 1
    %s37 = scalar_lea.vmem %s1, 1
    %38 = vst [vmem:[%s37] sm:%s36] %v34

// kernel: tile.43
$region0: #{tile.43}
  #allocation0 [shape = 's32[1]{0}', space=sflag, size = 0x4, scoped, tag = 'scoped memory for tile.43']
  %s0 = inlined_call_operand.vmem [shape: f32[64], index: 0, kind: input, shape index: {}]
  %s1 = inlined_call_operand.vmem [shape: f32[5,64], index: 1, kind: output, shape index: {}]
  // Predicated region
  $region2: #{tile.43} parent=0 // pred_check
    _
  $region3: #{tile.43} parent=0 // pred_check_branch
    %3 = sbr.rel (0) target = $region5
  $region4: #{tile.43} parent=0 // pred_region
    _
  $region5: #{tile.43} parent=0 // pred_fallthru
    _
  %v4 = vld [vmem:[%s0] ss:$0 sm:$0xff]
  %5 = vst [vmem:[%s1] sm:$0xff] %v4

// kernel: tile.44
$region0: #{tile.44}
  %s0 = inlined_call_operand.vmem [shape: f32[5,64], index: 0, kind: input, shape index: {}]
  %s1 = inlined_call_operand.vmem [shape: f32[1,320], index: 1, kind: output, shape index: {}]
  $region1: #{tile.44} parent=0
    #allocation0 [shape = 'u8[12288]{0}', space=vmem, size = 0x3000, scoped, tag = 'scoped mem for output reshape']
    %v2 = vld [vmem:[%s0] ss:$2 sm:$0x7]
    %vm3 = vcmask 523264
    %4 = vst.msk [vmem:[#allocation0] ss:$8 sm:$0x7] %vm3, %v2
    %s5 = scalar_lea.vmem %s0, 1
    %s6 = smov 3
    %v7 = vld [vmem:[%s5] ss:$2 sm:%s6]
    %8 = vrot.lane.b32.xlu0 %v7, 64
    %v9 = vpop.permute.xlu0 %8
    %vm10 = vcmask 1048064
    %11 = vst.msk [vmem:[#allocation0] ss:$8 sm:$0x3] %vm10, %v9
    %s13 = sshll.u32 1, 1
    %s14 = ssub.s32 %s13, 1
    %v16 = vld [vmem:[#allocation0] sm:%s14]
    %s17 = sshll.u32 1, 1
    %s18 = ssub.s32 %s17, 1
    %19 = vst [vmem:[%s1] sm:%s18] %v16
    %s20 = scalar_lea.vmem [#allocation0], 8
    %v21 = vld [vmem:[%s20] sm:%s14]
    %s22 = sshll.u32 1, 1
    %s23 = ssub.s32 %s22, 1
    %s24 = scalar_lea.vmem %s1, 1
    %25 = vst [vmem:[%s24] sm:%s23] %v21
    %s26 = scalar_lea.vmem [#allocation0], 16
    %v27 = vld [vmem:[%s26] sm:%s14]
    %s28 = sshll.u32 1, 1
    %s29 = ssub.s32 %s28, 1
    %s30 = smul.addr 1, 2
    %s31 = scalar_lea.vmem %s1, %s30
    %32 = vst [vmem:[%s31] sm:%s29] %v27

// kernel: forward.1
$region0: #{forward.1}
  #allocation0 [shape = 'u32[]', space=smem, size = 0x4, offset = 0x4, fixed_abs, tag = 'smem constant byte address 0x4 - core index']
  #allocation1 [shape = 'u32[144,128]{1,0:T(1,128)}', space=vmem, size = 0x12000, scoped, tag = 'internal scratch']
  #allocation2 [shape = 'f32[15,112]{1,0:T(8,128)}', space=vmem, size = 0x2000, scoped, tag = 'scratch operand']
  #allocation3 [shape = 'f32[14,192]{1,0:T(8,128)}', space=vmem, size = 0x4000, scoped, tag = 'scratch operand']
  #allocation4 [shape = 'f32[15,448]{1,0:T(8,128)}', space=vmem, size = 0x8000, scoped, tag = 'scratch operand']
  #allocation5 [shape = 'f32[16,256]{1,0:T(8,128)}', space=vmem, size = 0x4000, scoped, tag = 'scratch operand']
  #allocation6 [shape = 'f32[17,144]{1,0:T(8,128)}', space=vmem, size = 0x6000, scoped, tag = 'scratch operand']
  #allocation7 [shape = 'f32[16,8]{1,0:T(8,128)}', space=vmem, size = 0x2000, scoped, tag = 'scratch operand']
  %s0 = inlined_call_operand.vmem [shape: f32[2,16,32], index: 0, kind: input, shape index: {}]
  %s1 = inlined_call_operand.vmem [shape: bf16[4,28,112], index: 1, kind: input, shape index: {}]
  %s2 = inlined_call_operand.vmem [shape: f32[1,112], index: 2, kind: input, shape index: {}]
  %s3 = inlined_call_operand.vmem [shape: bf16[4,96,192], index: 3, kind: input, shape index: {}]
  %s4 = inlined_call_operand.vmem [shape: f32[1,192], index: 4, kind: input, shape index: {}]
  %s5 = inlined_call_operand.vmem [shape: bf16[4,160,320], index: 5, kind: input, shape index: {}]
  %s6 = inlined_call_operand.vmem [shape: f32[1,320], index: 6, kind: input, shape index: {}]
  %s7 = inlined_call_operand.vmem [shape: bf16[4,384,192], index: 7, kind: input, shape index: {}]
  %s8 = inlined_call_operand.vmem [shape: f32[1,192], index: 8, kind: input, shape index: {}]
  %s9 = inlined_call_operand.vmem [shape: bf16[4,224,112], index: 9, kind: input, shape index: {}]
  %s10 = inlined_call_operand.vmem [shape: f32[1,112], index: 10, kind: input, shape index: {}]
  %s11 = inlined_call_operand.vmem [shape: bf16[4,128,8], index: 11, kind: input, shape index: {}]
  %s12 = inlined_call_operand.vmem [shape: f32[1,8], index: 12, kind: input, shape index: {}]
  %s13 = inlined_call_operand.hbm [shape: f32[2,8,8], index: 13, kind: output, shape index: {0}]
  %s14 = inlined_call_operand.hbm [shape: f32[2,8,8], index: 14, kind: output, shape index: {1}]
  %15 = xla_tuple %s13, %s14
  %s16 = sld [smem:[#allocation0]]
  $region93: #{forward.1} parent=0
    _
  %s18 = ssub.s32 1, %s16
  %s19 = scalar_select 0, %s18, %s16
  $region1: #{forward.1} parent=0
    #allocation8 [shape = 'u8[8192]{0}', space=vmem, size = 0x2000, scoped, tag = 'output window, operand 0']
    #allocation9 [shape = 's32[2]{0}', space=sflag, size = 0x8, scoped, tag = 'scoped memory for forward.1']
    #allocation10 [shape = 'u8[8192]{0}', space=vmem, size = 0x2000, scoped, tag = 'output window, operand 1']
    #allocation11 [shape = 's32[2]{0}', space=sflag, size = 0x8, scoped, tag = 'scoped memory for forward.1']
    %20 = vsyncpa [#allocation9], 0
    %s21 = scalar_lea.sflag [#allocation9], 1
    %22 = vsyncpa %s21, 0
    %23 = vsyncpa [#allocation11], 0
    %s24 = scalar_lea.sflag [#allocation11], 1
    %25 = vsyncpa %s24, 0
    loop: start=0, step=1, limit=4
    $region2: #{forward.1} parent=1 // loop_pre_header
      _
    $region3: #{forward.1} parent=1 // loop_header
      %s27 = sphi 0, %s31
      %p28 = scmp.ge.s32.totalorder %s27, 4
      %s37 = sphi 0, %s39
      %s40 = sphi 0, %s37
      %s41 = sphi 0, %s40
      %s57 = sphi 0, %s41
      %s61 = sphi 0, %s61
      %s63 = sphi 0, %s61
      %s64 = sphi 0, %s63
      %s78 = sphi 0, %s64
      %s82 = sphi 0, %s82
      %s84 = sphi 0, %s82
      %s85 = sphi 0, %s84
      %s99 = sphi 0, %s85
      %s103 = sphi 0, %s103
      %s105 = sphi 0, %s103
      %s106 = sphi 0, %s105
      %s120 = sphi 0, %s106
      %s124 = sphi 0, %s124
      %s126 = sphi 0, %s124
      %s127 = sphi 0, %s126
      %s141 = sphi 0, %s127
      %s145 = sphi 0, %s145
      %s147 = sphi 0, %s145
      %s148 = sphi 0, %s147
      %s162 = sphi 0, %s148
      %s166 = sphi 0, %s166
      %s168 = sphi 0, %s166
      %s169 = sphi 0, %s168
      %s183 = sphi 0, %s169
      %s187 = sphi 0, %s187
      %s189 = sphi 0, %s187
      %s190 = sphi 0, %s189
      %s204 = sphi 0, %s190
      %s208 = sphi 0, %s208
      %s210 = sphi 0, %s208
      %s211 = sphi 0, %s210
      %s225 = sphi 0, %s211
      %s229 = sphi 0, %s229
      %s231 = sphi 0, %s229
      %s232 = sphi 0, %s231
      %s246 = sphi 0, %s232
      %s250 = sphi 0, %s250
      %s252 = sphi 0, %s250
      %s253 = sphi 0, %s252
      %s267 = sphi 0, %s253
      %s271 = sphi 0, %s271
      %s273 = sphi 0, %s271
      %s274 = sphi 0, %s273
      %s288 = sphi 0, %s274
      %s292 = sphi 0, %s292
      %s294 = sphi 0, %s292
      %s295 = sphi 0, %s294
      %s309 = sphi 0, %s295
      %s315 = sphi 0, %s317
      %s318 = sphi 0, %s315
      %s319 = sphi 0, %s318
      %s335 = sphi 0, %s319
      %s341 = sphi 0, %s343
      %s344 = sphi 0, %s341
      %s345 = sphi 0, %s344
      %s361 = sphi 0, %s345
    $region4: #{forward.1} parent=1 // loop_header_branch
      %30 = sbr.rel (%p28) target = $region8
    $region5: #{forward.1} parent=1 // loop_body
      %s32 = ssub.s32 %s27, 1
      %s33 = ssub.s32 %s27, 2
      %s34 = sadd.s32 %s27, 1
      %s35 = ssub.s32 %s27, %s34
      %p36 = scmp.eq.s32.totalorder %s35, 0
      %s38 = sadd.s32 %s37, 1
      %s39 = scalar_select %p36, %s37, %s38
      %p42 = pneg %p36
      %p43 = scmp.eq.s32.totalorder %s27, 1
      %p44 = por %p42, %p43
      %p45 = scmp.ne.s32.totalorder %s37, %s40
      %p46 = scmp.eq.s32.totalorder %s27, 0
      %p47 = por %p45, %p46
      %p48 = scmp.ne.s32.totalorder %s37, %s40
      %p49 = scmp.eq.s32.totalorder %s32, 1
      %p50 = por %p48, %p49
      %p51 = scmp.ne.s32.totalorder %s40, %s41
      %p52 = scmp.eq.s32.totalorder %s32, 0
      %p53 = por %p51, %p52
      %p54 = scmp.ne.s32.totalorder %s40, %s41
      %p55 = scmp.eq.s32.totalorder %s33, 1
      %p56 = por %p54, %p55
      %p58 = scmp.ne.s32.totalorder %s41, %s57
      %p59 = scmp.eq.s32.totalorder %s33, 0
      %p60 = por %p58, %p59
      %s62 = sadd.s32 %s61, 1
      %p65 = scmp.eq.s32.totalorder %s27, 1
      %p66 = scmp.ne.s32.totalorder %s61, %s63
      %p67 = scmp.eq.s32.totalorder %s27, 0
      %p68 = por %p66, %p67
      %p69 = scmp.ne.s32.totalorder %s61, %s63
      %p70 = scmp.eq.s32.totalorder %s32, 1
      %p71 = por %p69, %p70
      %p72 = scmp.ne.s32.totalorder %s63, %s64
      %p73 = scmp.eq.s32.totalorder %s32, 0
      %p74 = por %p72, %p73
      %p75 = scmp.ne.s32.totalorder %s63, %s64
      %p76 = scmp.eq.s32.totalorder %s33, 1
      %p77 = por %p75, %p76
      %p79 = scmp.ne.s32.totalorder %s64, %s78
      %p80 = scmp.eq.s32.totalorder %s33, 0
      %p81 = por %p79, %p80
      %s83 = sadd.s32 %s82, 1
      %p86 = scmp.eq.s32.totalorder %s27, 1
      %p87 = scmp.ne.s32.totalorder %s82, %s84
      %p88 = scmp.eq.s32.totalorder %s27, 0
      %p89 = por %p87, %p88
      %p90 = scmp.ne.s32.totalorder %s82, %s84
      %p91 = scmp.eq.s32.totalorder %s32, 1
      %p92 = por %p90, %p91
      %p93 = scmp.ne.s32.totalorder %s84, %s85
      %p94 = scmp.eq.s32.totalorder %s32, 0
      %p95 = por %p93, %p94
      %p96 = scmp.ne.s32.totalorder %s84, %s85
      %p97 = scmp.eq.s32.totalorder %s33, 1
      %p98 = por %p96, %p97
      %p100 = scmp.ne.s32.totalorder %s85, %s99
      %p101 = scmp.eq.s32.totalorder %s33, 0
      %p102 = por %p100, %p101
      %s104 = sadd.s32 %s103, 1
      %p107 = scmp.eq.s32.totalorder %s27, 1
      %p108 = scmp.ne.s32.totalorder %s103, %s105
      %p109 = scmp.eq.s32.totalorder %s27, 0
      %p110 = por %p108, %p109
      %p111 = scmp.ne.s32.totalorder %s103, %s105
      %p112 = scmp.eq.s32.totalorder %s32, 1
      %p113 = por %p111, %p112
      %p114 = scmp.ne.s32.totalorder %s105, %s106
      %p115 = scmp.eq.s32.totalorder %s32, 0
      %p116 = por %p114, %p115
      %p117 = scmp.ne.s32.totalorder %s105, %s106
      %p118 = scmp.eq.s32.totalorder %s33, 1
      %p119 = por %p117, %p118
      %p121 = scmp.ne.s32.totalorder %s106, %s120
      %p122 = scmp.eq.s32.totalorder %s33, 0
      %p123 = por %p121, %p122
      %s125 = sadd.s32 %s124, 1
      %p128 = scmp.eq.s32.totalorder %s27, 1
      %p129 = scmp.ne.s32.totalorder %s124, %s126
      %p130 = scmp.eq.s32.totalorder %s27, 0
      %p131 = por %p129, %p130
      %p132 = scmp.ne.s32.totalorder %s124, %s126
      %p133 = scmp.eq.s32.totalorder %s32, 1
      %p134 = por %p132, %p133
      %p135 = scmp.ne.s32.totalorder %s126, %s127
      %p136 = scmp.eq.s32.totalorder %s32, 0
      %p137 = por %p135, %p136
      %p138 = scmp.ne.s32.totalorder %s126, %s127
      %p139 = scmp.eq.s32.totalorder %s33, 1
      %p140 = por %p138, %p139
      %p142 = scmp.ne.s32.totalorder %s127, %s141
      %p143 = scmp.eq.s32.totalorder %s33, 0
      %p144 = por %p142, %p143
      %s146 = sadd.s32 %s145, 1
      %p149 = scmp.eq.s32.totalorder %s27, 1
      %p150 = scmp.ne.s32.totalorder %s145, %s147
      %p151 = scmp.eq.s32.totalorder %s27, 0
      %p152 = por %p150, %p151
      %p153 = scmp.ne.s32.totalorder %s145, %s147
      %p154 = scmp.eq.s32.totalorder %s32, 1
      %p155 = por %p153, %p154
      %p156 = scmp.ne.s32.totalorder %s147, %s148
      %p157 = scmp.eq.s32.totalorder %s32, 0
      %p158 = por %p156, %p157
      %p159 = scmp.ne.s32.totalorder %s147, %s148
      %p160 = scmp.eq.s32.totalorder %s33, 1
      %p161 = por %p159, %p160
      %p163 = scmp.ne.s32.totalorder %s148, %s162
      %p164 = scmp.eq.s32.totalorder %s33, 0
      %p165 = por %p163, %p164
      %s167 = sadd.s32 %s166, 1
      %p170 = scmp.eq.s32.totalorder %s27, 1
      %p171 = scmp.ne.s32.totalorder %s166, %s168
      %p172 = scmp.eq.s32.totalorder %s27, 0
      %p173 = por %p171, %p172
      %p174 = scmp.ne.s32.totalorder %s166, %s168
      %p175 = scmp.eq.s32.totalorder %s32, 1
      %p176 = por %p174, %p175
      %p177 = scmp.ne.s32.totalorder %s168, %s169
      %p178 = scmp.eq.s32.totalorder %s32, 0
      %p179 = por %p177, %p178
      %p180 = scmp.ne.s32.totalorder %s168, %s169
      %p181 = scmp.eq.s32.totalorder %s33, 1
      %p182 = por %p180, %p181
      %p184 = scmp.ne.s32.totalorder %s169, %s183
      %p185 = scmp.eq.s32.totalorder %s33, 0
      %p186 = por %p184, %p185
      %s188 = sadd.s32 %s187, 1
      %p191 = scmp.eq.s32.totalorder %s27, 1
      %p192 = scmp.ne.s32.totalorder %s187, %s189
      %p193 = scmp.eq.s32.totalorder %s27, 0
      %p194 = por %p192, %p193
      %p195 = scmp.ne.s32.totalorder %s187, %s189
      %p196 = scmp.eq.s32.totalorder %s32, 1
      %p197 = por %p195, %p196
      %p198 = scmp.ne.s32.totalorder %s189, %s190
      %p199 = scmp.eq.s32.totalorder %s32, 0
      %p200 = por %p198, %p199
      %p201 = scmp.ne.s32.totalorder %s189, %s190
      %p202 = scmp.eq.s32.totalorder %s33, 1
      %p203 = por %p201, %p202
      %p205 = scmp.ne.s32.totalorder %s190, %s204
      %p206 = scmp.eq.s32.totalorder %s33, 0
      %p207 = por %p205, %p206
      %s209 = sadd.s32 %s208, 1
      %p212 = scmp.eq.s32.totalorder %s27, 1
      %p213 = scmp.ne.s32.totalorder %s208, %s210
      %p214 = scmp.eq.s32.totalorder %s27, 0
      %p215 = por %p213, %p214
      %p216 = scmp.ne.s32.totalorder %s208, %s210
      %p217 = scmp.eq.s32.totalorder %s32, 1
      %p218 = por %p216, %p217
      %p219 = scmp.ne.s32.totalorder %s210, %s211
      %p220 = scmp.eq.s32.totalorder %s32, 0
      %p221 = por %p219, %p220
      %p222 = scmp.ne.s32.totalorder %s210, %s211
      %p223 = scmp.eq.s32.totalorder %s33, 1
      %p224 = por %p222, %p223
      %p226 = scmp.ne.s32.totalorder %s211, %s225
      %p227 = scmp.eq.s32.totalorder %s33, 0
      %p228 = por %p226, %p227
      %s230 = sadd.s32 %s229, 1
      %p233 = scmp.eq.s32.totalorder %s27, 1
      %p234 = scmp.ne.s32.totalorder %s229, %s231
      %p235 = scmp.eq.s32.totalorder %s27, 0
      %p236 = por %p234, %p235
      %p237 = scmp.ne.s32.totalorder %s229, %s231
      %p238 = scmp.eq.s32.totalorder %s32, 1
      %p239 = por %p237, %p238
      %p240 = scmp.ne.s32.totalorder %s231, %s232
      %p241 = scmp.eq.s32.totalorder %s32, 0
      %p242 = por %p240, %p241
      %p243 = scmp.ne.s32.totalorder %s231, %s232
      %p244 = scmp.eq.s32.totalorder %s33, 1
      %p245 = por %p243, %p244
      %p247 = scmp.ne.s32.totalorder %s232, %s246
      %p248 = scmp.eq.s32.totalorder %s33, 0
      %p249 = por %p247, %p248
      %s251 = sadd.s32 %s250, 1
      %p254 = scmp.eq.s32.totalorder %s27, 1
      %p255 = scmp.ne.s32.totalorder %s250, %s252
      %p256 = scmp.eq.s32.totalorder %s27, 0
      %p257 = por %p255, %p256
      %p258 = scmp.ne.s32.totalorder %s250, %s252
      %p259 = scmp.eq.s32.totalorder %s32, 1
      %p260 = por %p258, %p259
      %p261 = scmp.ne.s32.totalorder %s252, %s253
      %p262 = scmp.eq.s32.totalorder %s32, 0
      %p263 = por %p261, %p262
      %p264 = scmp.ne.s32.totalorder %s252, %s253
      %p265 = scmp.eq.s32.totalorder %s33, 1
      %p266 = por %p264, %p265
      %p268 = scmp.ne.s32.totalorder %s253, %s267
      %p269 = scmp.eq.s32.totalorder %s33, 0
      %p270 = por %p268, %p269
      %s272 = sadd.s32 %s271, 1
      %p275 = scmp.eq.s32.totalorder %s27, 1
      %p276 = scmp.ne.s32.totalorder %s271, %s273
      %p277 = scmp.eq.s32.totalorder %s27, 0
      %p278 = por %p276, %p277
      %p279 = scmp.ne.s32.totalorder %s271, %s273
      %p280 = scmp.eq.s32.totalorder %s32, 1
      %p281 = por %p279, %p280
      %p282 = scmp.ne.s32.totalorder %s273, %s274
      %p283 = scmp.eq.s32.totalorder %s32, 0
      %p284 = por %p282, %p283
      %p285 = scmp.ne.s32.totalorder %s273, %s274
      %p286 = scmp.eq.s32.totalorder %s33, 1
      %p287 = por %p285, %p286
      %p289 = scmp.ne.s32.totalorder %s274, %s288
      %p290 = scmp.eq.s32.totalorder %s33, 0
      %p291 = por %p289, %p290
      %s293 = sadd.s32 %s292, 1
      %p296 = scmp.eq.s32.totalorder %s27, 1
      %p297 = scmp.ne.s32.totalorder %s292, %s294
      %p298 = scmp.eq.s32.totalorder %s27, 0
      %p299 = por %p297, %p298
      %p300 = scmp.ne.s32.totalorder %s292, %s294
      %p301 = scmp.eq.s32.totalorder %s32, 1
      %p302 = por %p300, %p301
      %p303 = scmp.ne.s32.totalorder %s294, %s295
      %p304 = scmp.eq.s32.totalorder %s32, 0
      %p305 = por %p303, %p304
      %p306 = scmp.ne.s32.totalorder %s294, %s295
      %p307 = scmp.eq.s32.totalorder %s33, 1
      %p308 = por %p306, %p307
      %p310 = scmp.ne.s32.totalorder %s295, %s309
      %p311 = scmp.eq.s32.totalorder %s33, 0
      %p312 = por %p310, %p311
      %s313 = ssub.s32 %s27, %s34
      %p314 = scmp.eq.s32.totalorder %s313, 0
      %s316 = sadd.s32 %s315, 1
      %s317 = scalar_select %p314, %s315, %s316
      %p320 = pneg %p314
      %p321 = scmp.eq.s32.totalorder %s27, 1
      %p322 = por %p320, %p321
      %p323 = scmp.ne.s32.totalorder %s315, %s318
      %p324 = scmp.eq.s32.totalorder %s27, 0
      %p325 = por %p323, %p324
      %p326 = scmp.ne.s32.totalorder %s315, %s318
      %p327 = scmp.eq.s32.totalorder %s32, 1
      %p328 = por %p326, %p327
      %p329 = scmp.ne.s32.totalorder %s318, %s319
      %p330 = scmp.eq.s32.totalorder %s32, 0
      %p331 = por %p329, %p330
      %p332 = scmp.ne.s32.totalorder %s318, %s319
      %p333 = scmp.eq.s32.totalorder %s33, 1
      %p334 = por %p332, %p333
      %p336 = scmp.ne.s32.totalorder %s319, %s335
      %p337 = scmp.eq.s32.totalorder %s33, 0
      %p338 = por %p336, %p337
      %s339 = ssub.s32 %s27, %s34
      %p340 = scmp.eq.s32.totalorder %s339, 0
      %s342 = sadd.s32 %s341, 1
      %s343 = scalar_select %p340, %s341, %s342
      %p346 = pneg %p340
      %p347 = scmp.eq.s32.totalorder %s27, 1
      %p348 = por %p346, %p347
      %p349 = scmp.ne.s32.totalorder %s341, %s344
      %p350 = scmp.eq.s32.totalorder %s27, 0
      %p351 = por %p349, %p350
      %p352 = scmp.ne.s32.totalorder %s341, %s344
      %p353 = scmp.eq.s32.totalorder %s32, 1
      %p354 = por %p352, %p353
      %p355 = scmp.ne.s32.totalorder %s344, %s345
      %p356 = scmp.eq.s32.totalorder %s32, 0
      %p357 = por %p355, %p356
      %p358 = scmp.ne.s32.totalorder %s344, %s345
      %p359 = scmp.eq.s32.totalorder %s33, 1
      %p360 = por %p358, %p359
      %p362 = scmp.ne.s32.totalorder %s345, %s361
      %p363 = scmp.eq.s32.totalorder %s33, 0
      %p364 = por %p362, %p363
      %p365 = scmp.le.s32.totalorder 1, %s27
      %p366 = scmp.lt.s32.totalorder %s27, 3
      %p367 = pnand %p365, %p366
      %p368 = pneg %p367
      // Predicated region
      $region9: #{forward.1} parent=5 // pred_check
        _
      $region10: #{forward.1} parent=5 // pred_check_branch
        %370 = sbr.rel (%p367) target = $region12
      $region11: #{forward.1} parent=5 // pred_region
        %s371 = ssub.s32 %s27, 1
        // Predicated region
        $region13: #{forward.1} parent=11 // pred_check
          %p372 = pneg %p74
        $region14: #{forward.1} parent=11 // pred_check_branch
          %374 = sbr.rel (%p372) target = $region16
        $region15: #{forward.1} parent=11 // pred_region
          _
        $region16: #{forward.1} parent=11 // pred_fallthru
          _
        // Predicated region
        $region17: #{forward.1} parent=11 // pred_check
          %p375 = pneg %p95
        $region18: #{forward.1} parent=11 // pred_check_branch
          %377 = sbr.rel (%p375) target = $region20
        $region19: #{forward.1} parent=11 // pred_region
          _
        $region20: #{forward.1} parent=11 // pred_fallthru
          _
        // Predicated region
        $region21: #{forward.1} parent=11 // pred_check
          %p378 = pneg %p116
        $region22: #{forward.1} parent=11 // pred_check_branch
          %380 = sbr.rel (%p378) target = $region24
        $region23: #{forward.1} parent=11 // pred_region
          _
        $region24: #{forward.1} parent=11 // pred_fallthru
          _
        // Predicated region
        $region25: #{forward.1} parent=11 // pred_check
          %p381 = pneg %p137
        $region26: #{forward.1} parent=11 // pred_check_branch
          %383 = sbr.rel (%p381) target = $region28
        $region27: #{forward.1} parent=11 // pred_region
          _
        $region28: #{forward.1} parent=11 // pred_fallthru
          _
        // Predicated region
        $region29: #{forward.1} parent=11 // pred_check
          %p384 = pneg %p158
        $region30: #{forward.1} parent=11 // pred_check_branch
          %386 = sbr.rel (%p384) target = $region32
        $region31: #{forward.1} parent=11 // pred_region
          _
        $region32: #{forward.1} parent=11 // pred_fallthru
          _
        // Predicated region
        $region33: #{forward.1} parent=11 // pred_check
          %p387 = pneg %p179
        $region34: #{forward.1} parent=11 // pred_check_branch
          %389 = sbr.rel (%p387) target = $region36
        $region35: #{forward.1} parent=11 // pred_region
          _
        $region36: #{forward.1} parent=11 // pred_fallthru
          _
        // Predicated region
        $region37: #{forward.1} parent=11 // pred_check
          %p390 = pneg %p200
        $region38: #{forward.1} parent=11 // pred_check_branch
          %392 = sbr.rel (%p390) target = $region40
        $region39: #{forward.1} parent=11 // pred_region
          _
        $region40: #{forward.1} parent=11 // pred_fallthru
          _
        // Predicated region
        $region41: #{forward.1} parent=11 // pred_check
          %p393 = pneg %p221
        $region42: #{forward.1} parent=11 // pred_check_branch
          %395 = sbr.rel (%p393) target = $region44
        $region43: #{forward.1} parent=11 // pred_region
          _
        $region44: #{forward.1} parent=11 // pred_fallthru
          _
        // Predicated region
        $region45: #{forward.1} parent=11 // pred_check
          %p396 = pneg %p242
        $region46: #{forward.1} parent=11 // pred_check_branch
          %398 = sbr.rel (%p396) target = $region48
        $region47: #{forward.1} parent=11 // pred_region
          _
        $region48: #{forward.1} parent=11 // pred_fallthru
          _
        // Predicated region
        $region49: #{forward.1} parent=11 // pred_check
          %p399 = pneg %p263
        $region50: #{forward.1} parent=11 // pred_check_branch
          %401 = sbr.rel (%p399) target = $region52
        $region51: #{forward.1} parent=11 // pred_region
          _
        $region52: #{forward.1} parent=11 // pred_fallthru
          _
        // Predicated region
        $region53: #{forward.1} parent=11 // pred_check
          %p402 = pneg %p284
        $region54: #{forward.1} parent=11 // pred_check_branch
          %404 = sbr.rel (%p402) target = $region56
        $region55: #{forward.1} parent=11 // pred_region
          _
        $region56: #{forward.1} parent=11 // pred_fallthru
          _
        // Predicated region
        $region57: #{forward.1} parent=11 // pred_check
          %p405 = pneg %p305
        $region58: #{forward.1} parent=11 // pred_check_branch
          %407 = sbr.rel (%p405) target = $region60
        $region59: #{forward.1} parent=11 // pred_region
          _
        $region60: #{forward.1} parent=11 // pred_fallthru
          _
      $region12: #{forward.1} parent=5 // pred_fallthru
        _
      %p408 = scmp.lt.s32.totalorder %s27, 2
      // Predicated region
      $region61: #{forward.1} parent=5 // pred_check
        %p409 = pneg %p408
      $region62: #{forward.1} parent=5 // pred_check_branch
        %411 = sbr.rel (%p409) target = $region64
      $region63: #{forward.1} parent=5 // pred_region
        // Predicated region
        $region65: #{forward.1} parent=63 // pred_check
          %p412 = pneg %p47
        $region66: #{forward.1} parent=63 // pred_check_branch
          %414 = sbr.rel (%p412) target = $region68
        $region67: #{forward.1} parent=63 // pred_region
          %p415 = scmp.lt.s32.totalorder %s27, 1
          %s416 = scalar_select %p415, %s27, 1
          %s417 = smul.addr %s416, 2
          %s418 = smul.addr %s417, 8
          %s419 = scalar_lea.vmem %s0, %s418
        $region68: #{forward.1} parent=63 // pred_fallthru
          _
      $region64: #{forward.1} parent=5 // pred_fallthru
        _
      %p420 = scmp.le.s32.totalorder 1, %s27
      %p421 = scmp.lt.s32.totalorder %s27, 3
      %p422 = pnand %p420, %p421
      %p423 = pneg %p422
      // Predicated region
      $region69: #{forward.1} parent=5 // pred_check
        _
      $region70: #{forward.1} parent=5 // pred_check_branch
        %425 = sbr.rel (%p422) target = $region72
      $region71: #{forward.1} parent=5 // pred_region
        %s426 = ssub.s32 %s27, 1
        %p427 = scmp.lt.s32.totalorder %s32, 1
        %s428 = scalar_select %p427, %s32, 1
        %s429 = smul.addr %s428, 2
        %s430 = smul.addr %s429, 8
        %s431 = scalar_lea.vmem %s0, %s430
        %p432 = pneg %p53
        %p433 = pneg %p50
        %p434 = pneg %p74
        %p435 = pneg %p71
        %p436 = pneg %p95
        %p437 = pneg %p92
        %p438 = pneg %p116
        %p439 = pneg %p113
        %p440 = pneg %p137
        %p441 = pneg %p134
        %p442 = pneg %p158
        %p443 = pneg %p155
        %p444 = pneg %p179
        %p445 = pneg %p176
        %p446 = pneg %p200
        %p447 = pneg %p197
        %p448 = pneg %p221
        %p449 = pneg %p218
        %p450 = pneg %p242
        %p451 = pneg %p239
        %p452 = pneg %p263
        %p453 = pneg %p260
        %p454 = pneg %p284
        %p455 = pneg %p281
        %p456 = pneg %p305
        %p457 = pneg %p302
        %p458 = pneg %p331
        %p459 = pneg %p328
        %s460 = sand.u32 %s318, 1
        %s461 = scalar_lea.sflag [#allocation9], %s460
        %s462 = sand.u32 %s318, 1
        %s463 = smul.addr %s462, 8
        %s464 = scalar_lea.vmem [#allocation8], %s463
        %p465 = pneg %p357
        %p466 = pneg %p354
        %s467 = sand.u32 %s344, 1
        %s468 = scalar_lea.sflag [#allocation11], %s467
        %s469 = sand.u32 %s344, 1
        %s470 = smul.addr %s469, 8
        %s471 = scalar_lea.vmem [#allocation10], %s470
        %p472 = scmp.lt.s32.totalorder %s32, 1
        %s473 = scalar_select %p472, %s32, 1
        %s474 = smul.addr %s473, 2
        %s475 = smul.addr %s474, 8
        %s476 = scalar_lea.vmem %s0, %s475
        %v478 = vld [vmem:[%s476] sm:$0xff]
        %v479 = vld [vmem:[%s476 + $0x8] sm:$0x7f]
        %v480 = vpack.c.bf16 %v479, %v478
        %v481 = vld [vmem:[%s1] sm:$0xf]
        %v482 = vld [vmem:[%s1 + $0x4] sm:$0xf]
        %v483 = vld [vmem:[%s1 + $0x8] sm:$0xf]
        %v484 = vld [vmem:[%s1 + $0xc] sm:$0x3]
        %s485 = scalar_lea.vmem %s1, 16
        %v486 = vld [vmem:[%s485] sm:$0xf]
        %v487 = vld [vmem:[%s485 + $0x4] sm:$0xf]
        %v488 = vld [vmem:[%s485 + $0x8] sm:$0xf]
        %v489 = vld [vmem:[%s485 + $0xc] sm:$0x3]
        %491 = vrot.lane.b32.xlu0 %v480, 124
        %v492 = vpop.permute.xlu0 %491
        %v497 = vunpack.c.l.b16 %v486
        %v498 = vunpack.c.l.b16 %v487
        %v499 = vunpack.c.l.b16 %v488
        %v500 = vunpack.c.l.b16 %v489
        %v501 = vpack.c.b16 %v498, %v497
        %v502 = vpack.c.b16 %v500, %v499
        %vm504 = vcmask 228352
        %v506 = vsel %vm504, %v492, 0
        %vm508 = vcmask 1045504
        %v510 = vsel %vm508, %v502, 0
        %512 = vmatprep.subr.bf16.mxu0 0
        %513 = vmatpush1.bf16.msra.mxu0 0
        %514 = vmatprep.subr.bf16.mxu0 0
        %515 = vmatpush1.bf16.msra.mxu0 0
        %516 = vmatprep.subr.bf16.mxu0 0
        %517 = vmatpush1.bf16.msra.mxu0 0
        %518 = vmatprep.subr.bf16.mxu0 0
        %519 = vmatpush1.bf16.msra.mxu0 0
        %520 = vmatprep.subr.bf16.mxu0 0
        %521 = vmatpush1.bf16.msra.mxu0 0
        %522 = vmatprep.subr.bf16.mxu0 0
        %523 = vmatpush1.bf16.msra.mxu0 0
        %524 = vmatprep.subr.bf16.mxu0 0
        %525 = vmatpush1.bf16.msra.mxu0 %v510
        %526 = vmatprep.subr.bf16.mxu0 0
        %527 = vmatpush1.bf16.msra.mxu0 %v501
        %528 = vmatprep.subr.bf16.mxu0 0
        %529 = vmatpush2.bf16.msra.mxu0 0
        %530 = vmatprep.subr.bf16.mxu0 0
        %531 = vmatpush2.bf16.msra.mxu0 0
        %532 = vmatprep.subr.bf16.mxu0 0
        %533 = vmatpush2.bf16.msra.mxu0 0
        %534 = vmatprep.subr.bf16.mxu0 0
        %535 = vmatpush2.bf16.msra.mxu0 0
        %536 = vmatprep.subr.bf16.mxu0 0
        %537 = vmatpush2.bf16.msra.mxu0 0
        %538 = vmatprep.subr.bf16.mxu0 0
        %539 = vmatpush2.bf16.msra.mxu0 0
        %540 = vmatprep.subr.bf16.mxu0 0
        %541 = vmatpush2.bf16.msra.mxu0 0
        %542 = vmatprep.subr.bf16.mxu0 0
        %543 = vmatpush2.bf16.msra.mxu0 0
        %544 = vmatprep.mubr.bf16.mxu0 0
        %545 = vmatmul.mubr.bf16.gmra.mxu0 %v506
        %v546 = vpop.f32.mrf.mxu0
        %v547 = vadd.f32 0.0, %v546
        %v548 = vpop.f32.mrf.mxu0
        %v549 = vpop.f32.mrf.mxu0
        %v550 = vadd.f32 0.0, %v549
        %v551 = vpop.f32.mrf.mxu0
        %552 = vdwg.mxu0
        %v557 = vunpack.c.l.b16 %v481
        %v558 = vunpack.c.l.b16 %v482
        %v559 = vunpack.c.l.b16 %v483
        %v560 = vunpack.c.l.b16 %v484
        %v561 = vpack.c.b16 %v558, %v557
        %v562 = vpack.c.b16 %v560, %v559
        %v565 = vsel %vm504, %v480, 0
        %v568 = vsel %vm508, %v562, 0
        %570 = vmatprep.subr.bf16.mxu0 0
        %571 = vmatpush1.bf16.msra.mxu0 0
        %572 = vmatprep.subr.bf16.mxu0 0
        %573 = vmatpush1.bf16.msra.mxu0 0
        %574 = vmatprep.subr.bf16.mxu0 0
        %575 = vmatpush1.bf16.msra.mxu0 0
        %576 = vmatprep.subr.bf16.mxu0 0
        %577 = vmatpush1.bf16.msra.mxu0 0
        %578 = vmatprep.subr.bf16.mxu0 0
        %579 = vmatpush1.bf16.msra.mxu0 0
        %580 = vmatprep.subr.bf16.mxu0 0
        %581 = vmatpush1.bf16.msra.mxu0 0
        %582 = vmatprep.subr.bf16.mxu0 0
        %583 = vmatpush1.bf16.msra.mxu0 %v568
        %584 = vmatprep.subr.bf16.mxu0 0
        %585 = vmatpush1.bf16.msra.mxu0 %v561
        %586 = vmatprep.subr.bf16.mxu0 0
        %587 = vmatpush2.bf16.msra.mxu0 0
        %588 = vmatprep.subr.bf16.mxu0 0
        %589 = vmatpush2.bf16.msra.mxu0 0
        %590 = vmatprep.subr.bf16.mxu0 0
        %591 = vmatpush2.bf16.msra.mxu0 0
        %592 = vmatprep.subr.bf16.mxu0 0
        %593 = vmatpush2.bf16.msra.mxu0 0
        %594 = vmatprep.subr.bf16.mxu0 0
        %595 = vmatpush2.bf16.msra.mxu0 0
        %596 = vmatprep.subr.bf16.mxu0 0
        %597 = vmatpush2.bf16.msra.mxu0 0
        %598 = vmatprep.subr.bf16.mxu0 0
        %599 = vmatpush2.bf16.msra.mxu0 0
        %600 = vmatprep.subr.bf16.mxu0 0
        %601 = vmatpush2.bf16.msra.mxu0 0
        %602 = vmatprep.mubr.bf16.mxu0 0
        %603 = vmatmul.mubr.bf16.gmra.mxu0 %v565
        %v604 = vpop.f32.mrf.mxu0
        %v605 = vadd.f32 %v547, %v604
        %v606 = vpop.f32.mrf.mxu0
        %v607 = vpop.f32.mrf.mxu0
        %v608 = vadd.f32 %v550, %v607
        %v609 = vpop.f32.mrf.mxu0
        %610 = vdwg.mxu0
        %v611 = vld [vmem:[%s476 + $0x1] sm:$0xff]
        %v612 = vld [vmem:[%s476 + $0x9] sm:$0x7f]
        %v613 = vpack.c.bf16 %v612, %v611
        %s614 = scalar_lea.vmem %s1, 32
        %v615 = vld [vmem:[%s614] sm:$0xf]
        %v616 = vld [vmem:[%s614 + $0x4] sm:$0xf]
        %v617 = vld [vmem:[%s614 + $0x8] sm:$0xf]
        %v618 = vld [vmem:[%s614 + $0xc] sm:$0x3]
        %v623 = vunpack.c.l.b16 %v615
        %v624 = vunpack.c.l.b16 %v616
        %v625 = vunpack.c.l.b16 %v617
        %v626 = vunpack.c.l.b16 %v618
        %v627 = vpack.c.b16 %v624, %v623
        %v628 = vpack.c.b16 %v626, %v625
        %v631 = vsel %vm504, %v613, 0
        %v634 = vsel %vm508, %v628, 0
        %636 = vmatprep.subr.bf16.mxu0 0
        %637 = vmatpush1.bf16.msra.mxu0 0
        %638 = vmatprep.subr.bf16.mxu0 0
        %639 = vmatpush1.bf16.msra.mxu0 0
        %640 = vmatprep.subr.bf16.mxu0 0
        %641 = vmatpush1.bf16.msra.mxu0 0
        %642 = vmatprep.subr.bf16.mxu0 0
        %643 = vmatpush1.bf16.msra.mxu0 0
        %644 = vmatprep.subr.bf16.mxu0 0
        %645 = vmatpush1.bf16.msra.mxu0 0
        %646 = vmatprep.subr.bf16.mxu0 0
        %647 = vmatpush1.bf16.msra.mxu0 0
        %648 = vmatprep.subr.bf16.mxu0 0
        %649 = vmatpush1.bf16.msra.mxu0 %v634
        %650 = vmatprep.subr.bf16.mxu0 0
        %651 = vmatpush1.bf16.msra.mxu0 %v627
        %652 = vmatprep.subr.bf16.mxu0 0
        %653 = vmatpush2.bf16.msra.mxu0 0
        %654 = vmatprep.subr.bf16.mxu0 0
        %655 = vmatpush2.bf16.msra.mxu0 0
        %656 = vmatprep.subr.bf16.mxu0 0
        %657 = vmatpush2.bf16.msra.mxu0 0
        %658 = vmatprep.subr.bf16.mxu0 0
        %659 = vmatpush2.bf16.msra.mxu0 0
        %660 = vmatprep.subr.bf16.mxu0 0
        %661 = vmatpush2.bf16.msra.mxu0 0
        %662 = vmatprep.subr.bf16.mxu0 0
        %663 = vmatpush2.bf16.msra.mxu0 0
        %664 = vmatprep.subr.bf16.mxu0 0
        %665 = vmatpush2.bf16.msra.mxu0 0
        %666 = vmatprep.subr.bf16.mxu0 0
        %667 = vmatpush2.bf16.msra.mxu0 0
        %668 = vmatprep.mubr.bf16.mxu0 0
        %669 = vmatmul.mubr.bf16.gmra.mxu0 %v631
        %v670 = vpop.f32.mrf.mxu0
        %v671 = vadd.f32 0.0, %v670
        %v672 = vpop.f32.mrf.mxu0
        %v673 = vpop.f32.mrf.mxu0
        %v674 = vadd.f32 0.0, %v673
        %v675 = vpop.f32.mrf.mxu0
        %676 = vdwg.mxu0
        %v677 = vadd.f32 %v605, %v671
        %v678 = vadd.f32 %v608, %v674
        %s679 = scalar_lea.vmem %s1, 48
        %v680 = vld [vmem:[%s679] sm:$0xf]
        %v681 = vld [vmem:[%s679 + $0x4] sm:$0xf]
        %v682 = vld [vmem:[%s679 + $0x8] sm:$0xf]
        %v683 = vld [vmem:[%s679 + $0xc] sm:$0x3]
        %685 = vrot.lane.b32.xlu0 %v613, 124
        %v686 = vpop.permute.xlu0 %685
        %v691 = vunpack.c.l.b16 %v680
        %v692 = vunpack.c.l.b16 %v681
        %v693 = vunpack.c.l.b16 %v682
        %v694 = vunpack.c.l.b16 %v683
        %v695 = vpack.c.b16 %v692, %v691
        %v696 = vpack.c.b16 %v694, %v693
        %v699 = vsel %vm504, %v686, 0
        %v702 = vsel %vm508, %v696, 0
        %704 = vmatprep.subr.bf16.mxu0 0
        %705 = vmatpush1.bf16.msra.mxu0 0
        %706 = vmatprep.subr.bf16.mxu0 0
        %707 = vmatpush1.bf16.msra.mxu0 0
        %708 = vmatprep.subr.bf16.mxu0 0
        %709 = vmatpush1.bf16.msra.mxu0 0
        %710 = vmatprep.subr.bf16.mxu0 0
        %711 = vmatpush1.bf16.msra.mxu0 0
        %712 = vmatprep.subr.bf16.mxu0 0
        %713 = vmatpush1.bf16.msra.mxu0 0
        %714 = vmatprep.subr.bf16.mxu0 0
        %715 = vmatpush1.bf16.msra.mxu0 0
        %716 = vmatprep.subr.bf16.mxu0 0
        %717 = vmatpush1.bf16.msra.mxu0 %v702
        %718 = vmatprep.subr.bf16.mxu0 0
        %719 = vmatpush1.bf16.msra.mxu0 %v695
        %720 = vmatprep.subr.bf16.mxu0 0
        %721 = vmatpush2.bf16.msra.mxu0 0
        %722 = vmatprep.subr.bf16.mxu0 0
        %723 = vmatpush2.bf16.msra.mxu0 0
        %724 = vmatprep.subr.bf16.mxu0 0
        %725 = vmatpush2.bf16.msra.mxu0 0
        %726 = vmatprep.subr.bf16.mxu0 0
        %727 = vmatpush2.bf16.msra.mxu0 0
        %728 = vmatprep.subr.bf16.mxu0 0
        %729 = vmatpush2.bf16.msra.mxu0 0
        %730 = vmatprep.subr.bf16.mxu0 0
        %731 = vmatpush2.bf16.msra.mxu0 0
        %732 = vmatprep.subr.bf16.mxu0 0
        %733 = vmatpush2.bf16.msra.mxu0 0
        %734 = vmatprep.subr.bf16.mxu0 0
        %735 = vmatpush2.bf16.msra.mxu0 0
        %736 = vmatprep.mubr.bf16.mxu0 0
        %737 = vmatmul.mubr.bf16.gmra.mxu0 %v699
        %v738 = vpop.f32.mrf.mxu0
        %v739 = vadd.f32 0.0, %v738
        %v740 = vpop.f32.mrf.mxu0
        %v741 = vpop.f32.mrf.mxu0
        %v742 = vadd.f32 0.0, %v741
        %v743 = vpop.f32.mrf.mxu0
        %744 = vdwg.mxu0
        %v745 = vadd.f32 %v677, %v739
        %v746 = vadd.f32 %v678, %v742
        %v747 = vld [vmem:[%s2] sm:$0x1]
        %v749 = vlaneseq
        %v750 = vshrl.u32 %v749, 7
        %v751 = vsub.s32 0, %v750
        %v752 = vrot.slane %v747, %v751
        %v754 = vadd.f32 %v745, %v752
        %v755 = vadd.f32 %v746, %v752
        %vm756 = vcmp.ge.f32.partialorder %v754, 0.0
        %vm757 = vcmp.ge.f32.partialorder %v755, 0.0
        %v758 = vmul.f32 %v754, 0.1
        %v759 = vmul.f32 %v755, 0.1
        %v760 = vsel %vm756, %v754, %v758
        %v761 = vsel %vm757, %v755, %v759
        %vm762 = vcmask 916480
        %763 = vst.msk [vmem:[#allocation2] sm:$0xff] %vm762, %v760
        %vm764 = vcmask 915456
        %765 = vst.msk [vmem:[#allocation2 + $0x8] sm:$0x7f] %vm764, %v761
        %v766 = vld [vmem:[#allocation2] sm:$0xff]
        %v767 = vld [vmem:[#allocation2 + $0x8] sm:$0x3f]
        %v768 = vpack.c.bf16 %v767, %v766
        %v769 = vld [vmem:[%s3] sm:$0xff]
        %v770 = vld [vmem:[%s3 + $0x8] sm:$0xff]
        %v771 = vld [vmem:[%s3 + $0x10] sm:$0xff]
        %v772 = vld [vmem:[%s3 + $0x18] sm:$0xff]
        %v773 = vld [vmem:[%s3 + $0x20] sm:$0xff]
        %v774 = vld [vmem:[%s3 + $0x28] sm:$0xff]
        %v775 = vld [vmem:[%s3 + $0x30] sm:$0xff]
        %v776 = vld [vmem:[%s3 + $0x38] sm:$0xff]
        %v777 = vld [vmem:[%s3 + $0x40] sm:$0xff]
        %v778 = vld [vmem:[%s3 + $0x48] sm:$0xff]
        %v779 = vld [vmem:[%s3 + $0x50] sm:$0xff]
        %v780 = vld [vmem:[%s3 + $0x58] sm:$0xff]
        %s781 = scalar_lea.vmem %s3, 96
        %v782 = vld [vmem:[%s781] sm:$0xff]
        %v783 = vld [vmem:[%s781 + $0x8] sm:$0xff]
        %v784 = vld [vmem:[%s781 + $0x10] sm:$0xff]
        %v785 = vld [vmem:[%s781 + $0x18] sm:$0xff]
        %v786 = vld [vmem:[%s781 + $0x20] sm:$0xff]
        %v787 = vld [vmem:[%s781 + $0x28] sm:$0xff]
        %v788 = vld [vmem:[%s781 + $0x30] sm:$0xff]
        %v789 = vld [vmem:[%s781 + $0x38] sm:$0xff]
        %v790 = vld [vmem:[%s781 + $0x40] sm:$0xff]
        %v791 = vld [vmem:[%s781 + $0x48] sm:$0xff]
        %v792 = vld [vmem:[%s781 + $0x50] sm:$0xff]
        %v793 = vld [vmem:[%s781 + $0x58] sm:$0xff]
        %795 = vrot.lane.b32.xlu0 %v768, 112
        %v796 = vpop.permute.xlu0 %795
        %v809 = vunpack.c.l.b16 %v782
        %v810 = vunpack.c.h.b16 %v782
        %v811 = vunpack.c.l.b16 %v783
        %v812 = vunpack.c.h.b16 %v783
        %v813 = vunpack.c.l.b16 %v784
        %v814 = vunpack.c.h.b16 %v784
        %v815 = vunpack.c.l.b16 %v785
        %v816 = vunpack.c.h.b16 %v785
        %v817 = vunpack.c.l.b16 %v786
        %v818 = vunpack.c.h.b16 %v786
        %v819 = vunpack.c.l.b16 %v787
        %v820 = vunpack.c.h.b16 %v787
        %v821 = vunpack.c.l.b16 %v788
        %v822 = vunpack.c.h.b16 %v788
        %v823 = vunpack.c.l.b16 %v789
        %v824 = vunpack.c.h.b16 %v789
        %v825 = vunpack.c.l.b16 %v790
        %v826 = vunpack.c.h.b16 %v790
        %v827 = vunpack.c.l.b16 %v791
        %v828 = vunpack.c.h.b16 %v791
        %v829 = vunpack.c.l.b16 %v792
        %v830 = vunpack.c.h.b16 %v792
        %v831 = vunpack.c.l.b16 %v793
        %v832 = vunpack.c.h.b16 %v793
        %v833 = vpack.c.b16 %v811, %v809
        %v834 = vpack.c.b16 %v812, %v810
        %v835 = vpack.c.b16 %v815, %v813
        %v836 = vpack.c.b16 %v816, %v814
        %v837 = vpack.c.b16 %v819, %v817
        %v838 = vpack.c.b16 %v820, %v818
        %v839 = vpack.c.b16 %v823, %v821
        %v840 = vpack.c.b16 %v824, %v822
        %v841 = vpack.c.b16 %v827, %v825
        %v842 = vpack.c.b16 %v828, %v826
        %v843 = vpack.c.b16 %v831, %v829
        %v844 = vpack.c.b16 %v832, %v830
        %vm857 = vcmask 785408
        %v859 = vsel %vm857, %v796, 0
        %861 = vmatprep.subr.bf16.mxu0 0
        %862 = vmatpush1.bf16.msra.mxu0 0
        %863 = vmatprep.subr.bf16.mxu0 0
        %864 = vmatpush1.bf16.msra.mxu0 0
        %865 = vmatprep.subr.bf16.mxu0 %v844
        %866 = vmatpush1.bf16.msra.mxu0 %v843
        %867 = vmatprep.subr.bf16.mxu0 %v842
        %868 = vmatpush1.bf16.msra.mxu0 %v841
        %869 = vmatprep.subr.bf16.mxu0 %v840
        %870 = vmatpush1.bf16.msra.mxu0 %v839
        %871 = vmatprep.subr.bf16.mxu0 %v838
        %872 = vmatpush1.bf16.msra.mxu0 %v837
        %873 = vmatprep.subr.bf16.mxu0 %v836
        %874 = vmatpush1.bf16.msra.mxu0 %v835
        %875 = vmatprep.subr.bf16.mxu0 %v834
        %876 = vmatpush1.bf16.msra.mxu0 %v833
        %877 = vmatprep.subr.bf16.mxu0 0
        %878 = vmatpush2.bf16.msra.mxu0 0
        %879 = vmatprep.subr.bf16.mxu0 0
        %880 = vmatpush2.bf16.msra.mxu0 0
        %881 = vmatprep.subr.bf16.mxu0 0
        %882 = vmatpush2.bf16.msra.mxu0 0
        %883 = vmatprep.subr.bf16.mxu0 0
        %884 = vmatpush2.bf16.msra.mxu0 0
        %885 = vmatprep.subr.bf16.mxu0 0
        %886 = vmatpush2.bf16.msra.mxu0 0
        %887 = vmatprep.subr.bf16.mxu0 0
        %888 = vmatpush2.bf16.msra.mxu0 0
        %889 = vmatprep.subr.bf16.mxu0 0
        %890 = vmatpush2.bf16.msra.mxu0 0
        %891 = vmatprep.subr.bf16.mxu0 0
        %892 = vmatpush2.bf16.msra.mxu0 0
        %893 = vmatprep.mubr.bf16.mxu0 0
        %894 = vmatmul.mubr.bf16.gmra.mxu0 %v859
        %v895 = vpop.f32.mrf.mxu0
        %v896 = vadd.f32 0.0, %v895
        %v897 = vpop.f32.mrf.mxu0
        %v898 = vadd.f32 0.0, %v897
        %v899 = vpop.f32.mrf.mxu0
        %v900 = vadd.f32 0.0, %v899
        %v901 = vpop.f32.mrf.mxu0
        %v902 = vadd.f32 0.0, %v901
        %903 = vdwg.mxu0
        %v916 = vunpack.c.l.b16 %v769
        %v917 = vunpack.c.h.b16 %v769
        %v918 = vunpack.c.l.b16 %v770
        %v919 = vunpack.c.h.b16 %v770
        %v920 = vunpack.c.l.b16 %v771
        %v921 = vunpack.c.h.b16 %v771
        %v922 = vunpack.c.l.b16 %v772
        %v923 = vunpack.c.h.b16 %v772
        %v924 = vunpack.c.l.b16 %v773
        %v925 = vunpack.c.h.b16 %v773
        %v926 = vunpack.c.l.b16 %v774
        %v927 = vunpack.c.h.b16 %v774
        %v928 = vunpack.c.l.b16 %v775
        %v929 = vunpack.c.h.b16 %v775
        %v930 = vunpack.c.l.b16 %v776
        %v931 = vunpack.c.h.b16 %v776
        %v932 = vunpack.c.l.b16 %v777
        %v933 = vunpack.c.h.b16 %v777
        %v934 = vunpack.c.l.b16 %v778
        %v935 = vunpack.c.h.b16 %v778
        %v936 = vunpack.c.l.b16 %v779
        %v937 = vunpack.c.h.b16 %v779
        %v938 = vunpack.c.l.b16 %v780
        %v939 = vunpack.c.h.b16 %v780
        %v940 = vpack.c.b16 %v918, %v916
        %v941 = vpack.c.b16 %v919, %v917
        %v942 = vpack.c.b16 %v922, %v920
        %v943 = vpack.c.b16 %v923, %v921
        %v944 = vpack.c.b16 %v926, %v924
        %v945 = vpack.c.b16 %v927, %v925
        %v946 = vpack.c.b16 %v930, %v928
        %v947 = vpack.c.b16 %v931, %v929
        %v948 = vpack.c.b16 %v934, %v932
        %v949 = vpack.c.b16 %v935, %v933
        %v950 = vpack.c.b16 %v938, %v936
        %v951 = vpack.c.b16 %v939, %v937
        %v965 = vsel %vm857, %v768, 0
        %967 = vmatprep.subr.bf16.mxu0 0
        %968 = vmatpush1.bf16.msra.mxu0 0
        %969 = vmatprep.subr.bf16.mxu0 0
        %970 = vmatpush1.bf16.msra.mxu0 0
        %971 = vmatprep.subr.bf16.mxu0 %v951
        %972 = vmatpush1.bf16.msra.mxu0 %v950
        %973 = vmatprep.subr.bf16.mxu0 %v949
        %974 = vmatpush1.bf16.msra.mxu0 %v948
        %975 = vmatprep.subr.bf16.mxu0 %v947
        %976 = vmatpush1.bf16.msra.mxu0 %v946
        %977 = vmatprep.subr.bf16.mxu0 %v945
        %978 = vmatpush1.bf16.msra.mxu0 %v944
        %979 = vmatprep.subr.bf16.mxu0 %v943
        %980 = vmatpush1.bf16.msra.mxu0 %v942
        %981 = vmatprep.subr.bf16.mxu0 %v941
        %982 = vmatpush1.bf16.msra.mxu0 %v940
        %983 = vmatprep.subr.bf16.mxu0 0
        %984 = vmatpush2.bf16.msra.mxu0 0
        %985 = vmatprep.subr.bf16.mxu0 0
        %986 = vmatpush2.bf16.msra.mxu0 0
        %987 = vmatprep.subr.bf16.mxu0 0
        %988 = vmatpush2.bf16.msra.mxu0 0
        %989 = vmatprep.subr.bf16.mxu0 0
        %990 = vmatpush2.bf16.msra.mxu0 0
        %991 = vmatprep.subr.bf16.mxu0 0
        %992 = vmatpush2.bf16.msra.mxu0 0
        %993 = vmatprep.subr.bf16.mxu0 0
        %994 = vmatpush2.bf16.msra.mxu0 0
        %995 = vmatprep.subr.bf16.mxu0 0
        %996 = vmatpush2.bf16.msra.mxu0 0
        %997 = vmatprep.subr.bf16.mxu0 0
        %998 = vmatpush2.bf16.msra.mxu0 0
        %999 = vmatprep.mubr.bf16.mxu0 0
        %1000 = vmatmul.mubr.bf16.gmra.mxu0 %v965
        %v1001 = vpop.f32.mrf.mxu0
        %v1002 = vadd.f32 %v896, %v1001
        %v1003 = vpop.f32.mrf.mxu0
        %v1004 = vadd.f32 %v898, %v1003
        %v1005 = vpop.f32.mrf.mxu0
        %v1006 = vadd.f32 %v900, %v1005
        %v1007 = vpop.f32.mrf.mxu0
        %v1008 = vadd.f32 %v902, %v1007
        %1009 = vdwg.mxu0
        %v1010 = vld [vmem:[#allocation2 + $0x1] sm:$0xff]
        %v1011 = vld [vmem:[#allocation2 + $0x9] sm:$0x3f]
        %v1012 = vpack.c.bf16 %v1011, %v1010
        %s1013 = scalar_lea.vmem %s3, 192
        %v1014 = vld [vmem:[%s1013] sm:$0xff]
        %v1015 = vld [vmem:[%s1013 + $0x8] sm:$0xff]
        %v1016 = vld [vmem:[%s1013 + $0x10] sm:$0xff]
        %v1017 = vld [vmem:[%s1013 + $0x18] sm:$0xff]
        %v1018 = vld [vmem:[%s1013 + $0x20] sm:$0xff]
        %v1019 = vld [vmem:[%s1013 + $0x28] sm:$0xff]
        %v1020 = vld [vmem:[%s1013 + $0x30] sm:$0xff]
        %v1021 = vld [vmem:[%s1013 + $0x38] sm:$0xff]
        %v1022 = vld [vmem:[%s1013 + $0x40] sm:$0xff]
        %v1023 = vld [vmem:[%s1013 + $0x48] sm:$0xff]
        %v1024 = vld [vmem:[%s1013 + $0x50] sm:$0xff]
        %v1025 = vld [vmem:[%s1013 + $0x58] sm:$0xff]
        %v1038 = vunpack.c.l.b16 %v1014
        %v1039 = vunpack.c.h.b16 %v1014
        %v1040 = vunpack.c.l.b16 %v1015
        %v1041 = vunpack.c.h.b16 %v1015
        %v1042 = vunpack.c.l.b16 %v1016
        %v1043 = vunpack.c.h.b16 %v1016
        %v1044 = vunpack.c.l.b16 %v1017
        %v1045 = vunpack.c.h.b16 %v1017
        %v1046 = vunpack.c.l.b16 %v1018
        %v1047 = vunpack.c.h.b16 %v1018
        %v1048 = vunpack.c.l.b16 %v1019
        %v1049 = vunpack.c.h.b16 %v1019
        %v1050 = vunpack.c.l.b16 %v1020
        %v1051 = vunpack.c.h.b16 %v1020
        %v1052 = vunpack.c.l.b16 %v1021
        %v1053 = vunpack.c.h.b16 %v1021
        %v1054 = vunpack.c.l.b16 %v1022
        %v1055 = vunpack.c.h.b16 %v1022
        %v1056 = vunpack.c.l.b16 %v1023
        %v1057 = vunpack.c.h.b16 %v1023
        %v1058 = vunpack.c.l.b16 %v1024
        %v1059 = vunpack.c.h.b16 %v1024
        %v1060 = vunpack.c.l.b16 %v1025
        %v1061 = vunpack.c.h.b16 %v1025
        %v1062 = vpack.c.b16 %v1040, %v1038
        %v1063 = vpack.c.b16 %v1041, %v1039
        %v1064 = vpack.c.b16 %v1044, %v1042
        %v1065 = vpack.c.b16 %v1045, %v1043
        %v1066 = vpack.c.b16 %v1048, %v1046
        %v1067 = vpack.c.b16 %v1049, %v1047
        %v1068 = vpack.c.b16 %v1052, %v1050
        %v1069 = vpack.c.b16 %v1053, %v1051
        %v1070 = vpack.c.b16 %v1056, %v1054
        %v1071 = vpack.c.b16 %v1057, %v1055
        %v1072 = vpack.c.b16 %v1060, %v1058
        %v1073 = vpack.c.b16 %v1061, %v1059
        %v1087 = vsel %vm857, %v1012, 0
        %1089 = vmatprep.subr.bf16.mxu0 0
        %1090 = vmatpush1.bf16.msra.mxu0 0
        %1091 = vmatprep.subr.bf16.mxu0 0
        %1092 = vmatpush1.bf16.msra.mxu0 0
        %1093 = vmatprep.subr.bf16.mxu0 %v1073
        %1094 = vmatpush1.bf16.msra.mxu0 %v1072
        %1095 = vmatprep.subr.bf16.mxu0 %v1071
        %1096 = vmatpush1.bf16.msra.mxu0 %v1070
        %1097 = vmatprep.subr.bf16.mxu0 %v1069
        %1098 = vmatpush1.bf16.msra.mxu0 %v1068
        %1099 = vmatprep.subr.bf16.mxu0 %v1067
        %1100 = vmatpush1.bf16.msra.mxu0 %v1066
        %1101 = vmatprep.subr.bf16.mxu0 %v1065
        %1102 = vmatpush1.bf16.msra.mxu0 %v1064
        %1103 = vmatprep.subr.bf16.mxu0 %v1063
        %1104 = vmatpush1.bf16.msra.mxu0 %v1062
        %1105 = vmatprep.subr.bf16.mxu0 0
        %1106 = vmatpush2.bf16.msra.mxu0 0
        %1107 = vmatprep.subr.bf16.mxu0 0
        %1108 = vmatpush2.bf16.msra.mxu0 0
        %1109 = vmatprep.subr.bf16.mxu0 0
        %1110 = vmatpush2.bf16.msra.mxu0 0
        %1111 = vmatprep.subr.bf16.mxu0 0
        %1112 = vmatpush2.bf16.msra.mxu0 0
        %1113 = vmatprep.subr.bf16.mxu0 0
        %1114 = vmatpush2.bf16.msra.mxu0 0
        %1115 = vmatprep.subr.bf16.mxu0 0
        %1116 = vmatpush2.bf16.msra.mxu0 0
        %1117 = vmatprep.subr.bf16.mxu0 0
        %1118 = vmatpush2.bf16.msra.mxu0 0
        %1119 = vmatprep.subr.bf16.mxu0 0
        %1120 = vmatpush2.bf16.msra.mxu0 0
        %1121 = vmatprep.mubr.bf16.mxu0 0
        %1122 = vmatmul.mubr.bf16.gmra.mxu0 %v1087
        %v1123 = vpop.f32.mrf.mxu0
        %v1124 = vadd.f32 0.0, %v1123
        %v1125 = vpop.f32.mrf.mxu0
        %v1126 = vadd.f32 0.0, %v1125
        %v1127 = vpop.f32.mrf.mxu0
        %v1128 = vadd.f32 0.0, %v1127
        %v1129 = vpop.f32.mrf.mxu0
        %v1130 = vadd.f32 0.0, %v1129
        %1131 = vdwg.mxu0
        %v1132 = vadd.f32 %v1002, %v1124
        %v1133 = vadd.f32 %v1004, %v1126
        %v1134 = vadd.f32 %v1006, %v1128
        %v1135 = vadd.f32 %v1008, %v1130
        %s1136 = scalar_lea.vmem %s3, 288
        %v1137 = vld [vmem:[%s1136] sm:$0xff]
        %v1138 = vld [vmem:[%s1136 + $0x8] sm:$0xff]
        %v1139 = vld [vmem:[%s1136 + $0x10] sm:$0xff]
        %v1140 = vld [vmem:[%s1136 + $0x18] sm:$0xff]
        %v1141 = vld [vmem:[%s1136 + $0x20] sm:$0xff]
        %v1142 = vld [vmem:[%s1136 + $0x28] sm:$0xff]
        %v1143 = vld [vmem:[%s1136 + $0x30] sm:$0xff]
        %v1144 = vld [vmem:[%s1136 + $0x38] sm:$0xff]
        %v1145 = vld [vmem:[%s1136 + $0x40] sm:$0xff]
        %v1146 = vld [vmem:[%s1136 + $0x48] sm:$0xff]
        %v1147 = vld [vmem:[%s1136 + $0x50] sm:$0xff]
        %v1148 = vld [vmem:[%s1136 + $0x58] sm:$0xff]
        %1150 = vrot.lane.b32.xlu0 %v1012, 112
        %v1151 = vpop.permute.xlu0 %1150
        %v1164 = vunpack.c.l.b16 %v1137
        %v1165 = vunpack.c.h.b16 %v1137
        %v1166 = vunpack.c.l.b16 %v1138
        %v1167 = vunpack.c.h.b16 %v1138
        %v1168 = vunpack.c.l.b16 %v1139
        %v1169 = vunpack.c.h.b16 %v1139
        %v1170 = vunpack.c.l.b16 %v1140
        %v1171 = vunpack.c.h.b16 %v1140
        %v1172 = vunpack.c.l.b16 %v1141
        %v1173 = vunpack.c.h.b16 %v1141
        %v1174 = vunpack.c.l.b16 %v1142
        %v1175 = vunpack.c.h.b16 %v1142
        %v1176 = vunpack.c.l.b16 %v1143
        %v1177 = vunpack.c.h.b16 %v1143
        %v1178 = vunpack.c.l.b16 %v1144
        %v1179 = vunpack.c.h.b16 %v1144
        %v1180 = vunpack.c.l.b16 %v1145
        %v1181 = vunpack.c.h.b16 %v1145
        %v1182 = vunpack.c.l.b16 %v1146
        %v1183 = vunpack.c.h.b16 %v1146
        %v1184 = vunpack.c.l.b16 %v1147
        %v1185 = vunpack.c.h.b16 %v1147
        %v1186 = vunpack.c.l.b16 %v1148
        %v1187 = vunpack.c.h.b16 %v1148
        %v1188 = vpack.c.b16 %v1166, %v1164
        %v1189 = vpack.c.b16 %v1167, %v1165
        %v1190 = vpack.c.b16 %v1170, %v1168
        %v1191 = vpack.c.b16 %v1171, %v1169
        %v1192 = vpack.c.b16 %v1174, %v1172
        %v1193 = vpack.c.b16 %v1175, %v1173
        %v1194 = vpack.c.b16 %v1178, %v1176
        %v1195 = vpack.c.b16 %v1179, %v1177
        %v1196 = vpack.c.b16 %v1182, %v1180
        %v1197 = vpack.c.b16 %v1183, %v1181
        %v1198 = vpack.c.b16 %v1186, %v1184
        %v1199 = vpack.c.b16 %v1187, %v1185
        %v1213 = vsel %vm857, %v1151, 0
        %1215 = vmatprep.subr.bf16.mxu0 0
        %1216 = vmatpush1.bf16.msra.mxu0 0
        %1217 = vmatprep.subr.bf16.mxu0 0
        %1218 = vmatpush1.bf16.msra.mxu0 0
        %1219 = vmatprep.subr.bf16.mxu0 %v1199
        %1220 = vmatpush1.bf16.msra.mxu0 %v1198
        %1221 = vmatprep.subr.bf16.mxu0 %v1197
        %1222 = vmatpush1.bf16.msra.mxu0 %v1196
        %1223 = vmatprep.subr.bf16.mxu0 %v1195
        %1224 = vmatpush1.bf16.msra.mxu0 %v1194
        %1225 = vmatprep.subr.bf16.mxu0 %v1193
        %1226 = vmatpush1.bf16.msra.mxu0 %v1192
        %1227 = vmatprep.subr.bf16.mxu0 %v1191
        %1228 = vmatpush1.bf16.msra.mxu0 %v1190
        %1229 = vmatprep.subr.bf16.mxu0 %v1189
        %1230 = vmatpush1.bf16.msra.mxu0 %v1188
        %1231 = vmatprep.subr.bf16.mxu0 0
        %1232 = vmatpush2.bf16.msra.mxu0 0
        %1233 = vmatprep.subr.bf16.mxu0 0
        %1234 = vmatpush2.bf16.msra.mxu0 0
        %1235 = vmatprep.subr.bf16.mxu0 0
        %1236 = vmatpush2.bf16.msra.mxu0 0
        %1237 = vmatprep.subr.bf16.mxu0 0
        %1238 = vmatpush2.bf16.msra.mxu0 0
        %1239 = vmatprep.subr.bf16.mxu0 0
        %1240 = vmatpush2.bf16.msra.mxu0 0
        %1241 = vmatprep.subr.bf16.mxu0 0
        %1242 = vmatpush2.bf16.msra.mxu0 0
        %1243 = vmatprep.subr.bf16.mxu0 0
        %1244 = vmatpush2.bf16.msra.mxu0 0
        %1245 = vmatprep.subr.bf16.mxu0 0
        %1246 = vmatpush2.bf16.msra.mxu0 0
        %1247 = vmatprep.mubr.bf16.mxu0 0
        %1248 = vmatmul.mubr.bf16.gmra.mxu0 %v1213
        %v1249 = vpop.f32.mrf.mxu0
        %v1250 = vadd.f32 0.0, %v1249
        %v1251 = vpop.f32.mrf.mxu0
        %v1252 = vadd.f32 0.0, %v1251
        %v1253 = vpop.f32.mrf.mxu0
        %v1254 = vadd.f32 0.0, %v1253
        %v1255 = vpop.f32.mrf.mxu0
        %v1256 = vadd.f32 0.0, %v1255
        %1257 = vdwg.mxu0
        %v1258 = vadd.f32 %v1132, %v1250
        %v1259 = vadd.f32 %v1133, %v1252
        %v1260 = vadd.f32 %v1134, %v1254
        %v1261 = vadd.f32 %v1135, %v1256
        %v1262 = vld [vmem:[%s4] sm:$0x3]
        %v1264 = vlaneseq
        %v1265 = vshrl.u32 %v1264, 7
        %v1266 = vsub.s32 0, %v1265
        %v1267 = vrot.slane %v1262, %v1266
        %v1268 = vlaneseq
        %v1269 = vshrl.u32 %v1268, 7
        %v1270 = vsub.s32 1, %v1269
        %v1271 = vrot.slane %v1262, %v1270
        %v1274 = vadd.f32 %v1258, %v1267
        %v1275 = vadd.f32 %v1259, %v1271
        %v1276 = vadd.f32 %v1260, %v1267
        %v1277 = vadd.f32 %v1261, %v1271
        %vm1278 = vcmp.ge.f32.partialorder %v1274, 0.0
        %vm1279 = vcmp.ge.f32.partialorder %v1275, 0.0
        %vm1280 = vcmp.ge.f32.partialorder %v1276, 0.0
        %vm1281 = vcmp.ge.f32.partialorder %v1277, 0.0
        %v1282 = vmul.f32 %v1274, 0.1
        %v1283 = vmul.f32 %v1275, 0.1
        %v1284 = vmul.f32 %v1276, 0.1
        %v1285 = vmul.f32 %v1277, 0.1
        %v1286 = vsel %vm1278, %v1274, %v1282
        %v1287 = vsel %vm1279, %v1275, %v1283
        %v1288 = vsel %vm1280, %v1276, %v1284
        %v1289 = vsel %vm1281, %v1277, %v1285
        %1290 = vst [vmem:[#allocation3] sm:$0xff] %v1286
        %vm1291 = vcmask 523264
        %1292 = vst.msk [vmem:[#allocation3 + $0x8] sm:$0xff] %vm1291, %v1287
        %1293 = vst [vmem:[#allocation3 + $0x10] sm:$0x3f] %v1288
        %vm1294 = vcmask 521216
        %1295 = vst.msk [vmem:[#allocation3 + $0x18] sm:$0x3f] %vm1294, %v1289
        %v1296 = vld [vmem:[#allocation3] sm:$0xff]
        %v1297 = vld [vmem:[#allocation3 + $0x8] sm:$0xff]
        %v1298 = vld [vmem:[#allocation3 + $0x10] sm:$0x1f]
        %v1299 = vld [vmem:[#allocation3 + $0x18] sm:$0x1f]
        %v1300 = vpack.c.bf16 %v1298, %v1296
        %v1301 = vpack.c.bf16 %v1299, %v1297
        %v1302 = vld [vmem:[%s5] sm:$0xff]
        %v1303 = vld [vmem:[%s5 + $0x8] sm:$0xf]
        %v1304 = vld [vmem:[%s5 + $0xc] sm:$0xff]
        %v1305 = vld [vmem:[%s5 + $0x14] sm:$0xf]
        %v1306 = vld [vmem:[%s5 + $0x18] sm:$0xff]
        %v1307 = vld [vmem:[%s5 + $0x20] sm:$0xf]
        %v1308 = vld [vmem:[%s5 + $0x24] sm:$0xff]
        %v1309 = vld [vmem:[%s5 + $0x2c] sm:$0xf]
        %v1310 = vld [vmem:[%s5 + $0x30] sm:$0xff]
        %v1311 = vld [vmem:[%s5 + $0x38] sm:$0xf]
        %v1312 = vld [vmem:[%s5 + $0x3c] sm:$0xff]
        %v1313 = vld [vmem:[%s5 + $0x44] sm:$0xf]
        %v1314 = vld [vmem:[%s5 + $0x48] sm:$0xff]
        %v1315 = vld [vmem:[%s5 + $0x50] sm:$0xf]
        %v1316 = vld [vmem:[%s5 + $0x54] sm:$0xff]
        %v1317 = vld [vmem:[%s5 + $0x5c] sm:$0xf]
        %v1318 = vld [vmem:[%s5 + $0x60] sm:$0xff]
        %v1319 = vld [vmem:[%s5 + $0x68] sm:$0xf]
        %v1320 = vld [vmem:[%s5 + $0x6c] sm:$0xff]
        %v1321 = vld [vmem:[%s5 + $0x74] sm:$0xf]
        %v1322 = vld [vmem:[%s5 + $0x78] sm:$0xff]
        %v1323 = vld [vmem:[%s5 + $0x80] sm:$0xf]
        %v1324 = vld [vmem:[%s5 + $0x84] sm:$0xff]
        %v1325 = vld [vmem:[%s5 + $0x8c] sm:$0xf]
        %v1326 = vld [vmem:[%s5 + $0x90] sm:$0xff]
        %v1327 = vld [vmem:[%s5 + $0x98] sm:$0xf]
        %v1328 = vld [vmem:[%s5 + $0x9c] sm:$0xff]
        %v1329 = vld [vmem:[%s5 + $0xa4] sm:$0xf]
        %v1330 = vld [vmem:[%s5 + $0xa8] sm:$0xff]
        %v1331 = vld [vmem:[%s5 + $0xb0] sm:$0xf]
        %v1332 = vld [vmem:[%s5 + $0xb4] sm:$0xff]
        %v1333 = vld [vmem:[%s5 + $0xbc] sm:$0xf]
        %v1334 = vld [vmem:[%s5 + $0xc0] sm:$0xff]
        %v1335 = vld [vmem:[%s5 + $0xc8] sm:$0xf]
        %v1336 = vld [vmem:[%s5 + $0xcc] sm:$0xff]
        %v1337 = vld [vmem:[%s5 + $0xd4] sm:$0xf]
        %v1338 = vld [vmem:[%s5 + $0xd8] sm:$0xff]
        %v1339 = vld [vmem:[%s5 + $0xe0] sm:$0xf]
        %v1340 = vld [vmem:[%s5 + $0xe4] sm:$0xff]
        %v1341 = vld [vmem:[%s5 + $0xec] sm:$0xf]
        %s1342 = scalar_lea.vmem %s5, 240
        %v1343 = vld [vmem:[%s1342] sm:$0xff]
        %v1344 = vld [vmem:[%s1342 + $0x8] sm:$0xf]
        %v1345 = vld [vmem:[%s1342 + $0xc] sm:$0xff]
        %v1346 = vld [vmem:[%s1342 + $0x14] sm:$0xf]
        %v1347 = vld [vmem:[%s1342 + $0x18] sm:$0xff]
        %v1348 = vld [vmem:[%s1342 + $0x20] sm:$0xf]
        %v1349 = vld [vmem:[%s1342 + $0x24] sm:$0xff]
        %v1350 = vld [vmem:[%s1342 + $0x2c] sm:$0xf]
        %v1351 = vld [vmem:[%s1342 + $0x30] sm:$0xff]
        %v1352 = vld [vmem:[%s1342 + $0x38] sm:$0xf]
        %v1353 = vld [vmem:[%s1342 + $0x3c] sm:$0xff]
        %v1354 = vld [vmem:[%s1342 + $0x44] sm:$0xf]
        %v1355 = vld [vmem:[%s1342 + $0x48] sm:$0xff]
        %v1356 = vld [vmem:[%s1342 + $0x50] sm:$0xf]
        %v1357 = vld [vmem:[%s1342 + $0x54] sm:$0xff]
        %v1358 = vld [vmem:[%s1342 + $0x5c] sm:$0xf]
        %v1359 = vld [vmem:[%s1342 + $0x60] sm:$0xff]
        %v1360 = vld [vmem:[%s1342 + $0x68] sm:$0xf]
        %v1361 = vld [vmem:[%s1342 + $0x6c] sm:$0xff]
        %v1362 = vld [vmem:[%s1342 + $0x74] sm:$0xf]
        %v1363 = vld [vmem:[%s1342 + $0x78] sm:$0xff]
        %v1364 = vld [vmem:[%s1342 + $0x80] sm:$0xf]
        %v1365 = vld [vmem:[%s1342 + $0x84] sm:$0xff]
        %v1366 = vld [vmem:[%s1342 + $0x8c] sm:$0xf]
        %v1367 = vld [vmem:[%s1342 + $0x90] sm:$0xff]
        %v1368 = vld [vmem:[%s1342 + $0x98] sm:$0xf]
        %v1369 = vld [vmem:[%s1342 + $0x9c] sm:$0xff]
        %v1370 = vld [vmem:[%s1342 + $0xa4] sm:$0xf]
        %v1371 = vld [vmem:[%s1342 + $0xa8] sm:$0xff]
        %v1372 = vld [vmem:[%s1342 + $0xb0] sm:$0xf]
        %v1373 = vld [vmem:[%s1342 + $0xb4] sm:$0xff]
        %v1374 = vld [vmem:[%s1342 + $0xbc] sm:$0xf]
        %v1375 = vld [vmem:[%s1342 + $0xc0] sm:$0xff]
        %v1376 = vld [vmem:[%s1342 + $0xc8] sm:$0xf]
        %v1377 = vld [vmem:[%s1342 + $0xcc] sm:$0xff]
        %v1378 = vld [vmem:[%s1342 + $0xd4] sm:$0xf]
        %v1379 = vld [vmem:[%s1342 + $0xd8] sm:$0xff]
        %v1380 = vld [vmem:[%s1342 + $0xe0] sm:$0xf]
        %v1381 = vld [vmem:[%s1342 + $0xe4] sm:$0xff]
        %v1382 = vld [vmem:[%s1342 + $0xec] sm:$0xf]
        %1385 = vrot.lane.b32.xlu0 %v1300, 96
        %v1386 = vpop.permute.xlu0 %1385
        %1387 = vrot.lane.b32.xlu0 %v1301, 96
        %v1388 = vpop.permute.xlu0 %1387
        %vm1389 = vcmask 785408
        %v1390 = vsel %vm1389, %v1386, %v1388
        %v1432 = vunpack.c.l.b16 %v1343
        %v1433 = vunpack.c.h.b16 %v1343
        %v1434 = vunpack.c.l.b16 %v1344
        %v1435 = vunpack.c.l.b16 %v1345
        %v1436 = vunpack.c.h.b16 %v1345
        %v1437 = vunpack.c.l.b16 %v1346
        %v1438 = vunpack.c.l.b16 %v1347
        %v1439 = vunpack.c.h.b16 %v1347
        %v1440 = vunpack.c.l.b16 %v1348
        %v1441 = vunpack.c.l.b16 %v1349
        %v1442 = vunpack.c.h.b16 %v1349
        %v1443 = vunpack.c.l.b16 %v1350
        %v1444 = vunpack.c.l.b16 %v1351
        %v1445 = vunpack.c.h.b16 %v1351
        %v1446 = vunpack.c.l.b16 %v1352
        %v1447 = vunpack.c.l.b16 %v1353
        %v1448 = vunpack.c.h.b16 %v1353
        %v1449 = vunpack.c.l.b16 %v1354
        %v1450 = vunpack.c.l.b16 %v1355
        %v1451 = vunpack.c.h.b16 %v1355
        %v1452 = vunpack.c.l.b16 %v1356
        %v1453 = vunpack.c.l.b16 %v1357
        %v1454 = vunpack.c.h.b16 %v1357
        %v1455 = vunpack.c.l.b16 %v1358
        %v1456 = vunpack.c.l.b16 %v1359
        %v1457 = vunpack.c.h.b16 %v1359
        %v1458 = vunpack.c.l.b16 %v1360
        %v1459 = vunpack.c.l.b16 %v1361
        %v1460 = vunpack.c.h.b16 %v1361
        %v1461 = vunpack.c.l.b16 %v1362
        %v1462 = vunpack.c.l.b16 %v1363
        %v1463 = vunpack.c.h.b16 %v1363
        %v1464 = vunpack.c.l.b16 %v1364
        %v1465 = vunpack.c.l.b16 %v1365
        %v1466 = vunpack.c.h.b16 %v1365
        %v1467 = vunpack.c.l.b16 %v1366
        %v1468 = vunpack.c.l.b16 %v1367
        %v1469 = vunpack.c.h.b16 %v1367
        %v1470 = vunpack.c.l.b16 %v1368
        %v1471 = vunpack.c.l.b16 %v1369
        %v1472 = vunpack.c.h.b16 %v1369
        %v1473 = vunpack.c.l.b16 %v1370
        %v1474 = vunpack.c.l.b16 %v1371
        %v1475 = vunpack.c.h.b16 %v1371
        %v1476 = vunpack.c.l.b16 %v1372
        %v1477 = vunpack.c.l.b16 %v1373
        %v1478 = vunpack.c.h.b16 %v1373
        %v1479 = vunpack.c.l.b16 %v1374
        %v1480 = vunpack.c.l.b16 %v1375
        %v1481 = vunpack.c.h.b16 %v1375
        %v1482 = vunpack.c.l.b16 %v1376
        %v1483 = vunpack.c.l.b16 %v1377
        %v1484 = vunpack.c.h.b16 %v1377
        %v1485 = vunpack.c.l.b16 %v1378
        %v1486 = vunpack.c.l.b16 %v1379
        %v1487 = vunpack.c.h.b16 %v1379
        %v1488 = vunpack.c.l.b16 %v1380
        %v1489 = vunpack.c.l.b16 %v1381
        %v1490 = vunpack.c.h.b16 %v1381
        %v1491 = vunpack.c.l.b16 %v1382
        %v1492 = vpack.c.b16 %v1435, %v1432
        %v1493 = vpack.c.b16 %v1436, %v1433
        %v1494 = vpack.c.b16 %v1437, %v1434
        %v1495 = vpack.c.b16 %v1441, %v1438
        %v1496 = vpack.c.b16 %v1442, %v1439
        %v1497 = vpack.c.b16 %v1443, %v1440
        %v1498 = vpack.c.b16 %v1447, %v1444
        %v1499 = vpack.c.b16 %v1448, %v1445
        %v1500 = vpack.c.b16 %v1449, %v1446
        %v1501 = vpack.c.b16 %v1453, %v1450
        %v1502 = vpack.c.b16 %v1454, %v1451
        %v1503 = vpack.c.b16 %v1455, %v1452
        %v1504 = vpack.c.b16 %v1459, %v1456
        %v1505 = vpack.c.b16 %v1460, %v1457
        %v1506 = vpack.c.b16 %v1461, %v1458
        %v1507 = vpack.c.b16 %v1465, %v1462
        %v1508 = vpack.c.b16 %v1466, %v1463
        %v1509 = vpack.c.b16 %v1467, %v1464
        %v1510 = vpack.c.b16 %v1471, %v1468
        %v1511 = vpack.c.b16 %v1472, %v1469
        %v1512 = vpack.c.b16 %v1473, %v1470
        %v1513 = vpack.c.b16 %v1477, %v1474
        %v1514 = vpack.c.b16 %v1478, %v1475
        %v1515 = vpack.c.b16 %v1479, %v1476
        %v1516 = vpack.c.b16 %v1483, %v1480
        %v1517 = vpack.c.b16 %v1484, %v1481
        %v1518 = vpack.c.b16 %v1485, %v1482
        %v1519 = vpack.c.b16 %v1489, %v1486
        %v1520 = vpack.c.b16 %v1490, %v1487
        %v1521 = vpack.c.b16 %v1491, %v1488
        %vm1552 = vcmask 261120
        %v1554 = vsel %vm1552, %v1388, 0
        %1556 = vmatprep.subr.bf16.mxu0 %v1514
        %1557 = vmatpush1.bf16.msra.mxu0 %v1513
        %1558 = vmatprep.subr.bf16.mxu0 %v1511
        %1559 = vmatpush1.bf16.msra.mxu0 %v1510
        %1560 = vmatprep.subr.bf16.mxu0 %v1508
        %1561 = vmatpush1.bf16.msra.mxu0 %v1507
        %1562 = vmatprep.subr.bf16.mxu0 %v1505
        %1563 = vmatpush1.bf16.msra.mxu0 %v1504
        %1564 = vmatprep.subr.bf16.mxu0 %v1502
        %1565 = vmatpush1.bf16.msra.mxu0 %v1501
        %1566 = vmatprep.subr.bf16.mxu0 %v1499
        %1567 = vmatpush1.bf16.msra.mxu0 %v1498
        %1568 = vmatprep.subr.bf16.mxu0 %v1496
        %1569 = vmatpush1.bf16.msra.mxu0 %v1495
        %1570 = vmatprep.subr.bf16.mxu0 %v1493
        %1571 = vmatpush1.bf16.msra.mxu0 %v1492
        %1572 = vmatprep.subr.bf16.mxu0 0
        %1573 = vmatpush2.bf16.msra.mxu0 0
        %1574 = vmatprep.subr.bf16.mxu0 0
        %1575 = vmatpush2.bf16.msra.mxu0 0
        %1576 = vmatprep.subr.bf16.mxu0 0
        %1577 = vmatpush2.bf16.msra.mxu0 0
        %1578 = vmatprep.subr.bf16.mxu0 0
        %1579 = vmatpush2.bf16.msra.mxu0 0
        %1580 = vmatprep.subr.bf16.mxu0 0
        %1581 = vmatpush2.bf16.msra.mxu0 0
        %1582 = vmatprep.subr.bf16.mxu0 0
        %1583 = vmatpush2.bf16.msra.mxu0 0
        %1584 = vmatprep.subr.bf16.mxu0 %v1520
        %1585 = vmatpush2.bf16.msra.mxu0 %v1519
        %1586 = vmatprep.subr.bf16.mxu0 %v1517
        %1587 = vmatpush2.bf16.msra.mxu0 %v1516
        %1588 = vmatprep.mubr.bf16.mxu0 %v1554
        %1589 = vmatmul.mubr.bf16.gmra.mxu0 %v1390
        %v1590 = vpop.f32.mrf.mxu0
        %v1591 = vadd.f32 0.0, %v1590
        %v1592 = vpop.f32.mrf.mxu0
        %v1593 = vadd.f32 0.0, %v1592
        %v1594 = vpop.f32.mrf.mxu0
        %v1595 = vadd.f32 0.0, %v1594
        %v1596 = vpop.f32.mrf.mxu0
        %v1597 = vadd.f32 0.0, %v1596
        %1598 = vdwg.mxu0
        %1599 = vmatprep.subr.bf16.mxu0 0
        %1600 = vmatpush1.bf16.msra.mxu0 %v1515
        %1601 = vmatprep.subr.bf16.mxu0 0
        %1602 = vmatpush1.bf16.msra.mxu0 %v1512
        %1603 = vmatprep.subr.bf16.mxu0 0
        %1604 = vmatpush1.bf16.msra.mxu0 %v1509
        %1605 = vmatprep.subr.bf16.mxu0 0
        %1606 = vmatpush1.bf16.msra.mxu0 %v1506
        %1607 = vmatprep.subr.bf16.mxu0 0
        %1608 = vmatpush1.bf16.msra.mxu0 %v1503
        %1609 = vmatprep.subr.bf16.mxu0 0
        %1610 = vmatpush1.bf16.msra.mxu0 %v1500
        %1611 = vmatprep.subr.bf16.mxu0 0
        %1612 = vmatpush1.bf16.msra.mxu0 %v1497
        %1613 = vmatprep.subr.bf16.mxu0 0
        %1614 = vmatpush1.bf16.msra.mxu0 %v1494
        %1615 = vmatprep.subr.bf16.mxu0 0
        %1616 = vmatpush2.bf16.msra.mxu0 0
        %1617 = vmatprep.subr.bf16.mxu0 0
        %1618 = vmatpush2.bf16.msra.mxu0 0
        %1619 = vmatprep.subr.bf16.mxu0 0
        %1620 = vmatpush2.bf16.msra.mxu0 0
        %1621 = vmatprep.subr.bf16.mxu0 0
        %1622 = vmatpush2.bf16.msra.mxu0 0
        %1623 = vmatprep.subr.bf16.mxu0 0
        %1624 = vmatpush2.bf16.msra.mxu0 0
        %1625 = vmatprep.subr.bf16.mxu0 0
        %1626 = vmatpush2.bf16.msra.mxu0 0
        %1627 = vmatprep.subr.bf16.mxu0 0
        %1628 = vmatpush2.bf16.msra.mxu0 %v1521
        %1629 = vmatprep.subr.bf16.mxu0 0
        %1630 = vmatpush2.bf16.msra.mxu0 %v1518
        %1631 = vmatprep.mubr.bf16.mxu0 %v1554
        %1632 = vmatmul.mubr.bf16.gmra.mxu0 %v1390
        %v1633 = vpop.f32.mrf.mxu0
        %v1634 = vadd.f32 0.0, %v1633
        %v1635 = vpop.f32.mrf.mxu0
        %v1636 = vpop.f32.mrf.mxu0
        %v1637 = vadd.f32 0.0, %v1636
        %v1638 = vpop.f32.mrf.mxu0
        %1639 = vdwg.mxu0
        %v1680 = vunpack.c.l.b16 %v1302
        %v1681 = vunpack.c.h.b16 %v1302
        %v1682 = vunpack.c.l.b16 %v1303
        %v1683 = vunpack.c.l.b16 %v1304
        %v1684 = vunpack.c.h.b16 %v1304
        %v1685 = vunpack.c.l.b16 %v1305
        %v1686 = vunpack.c.l.b16 %v1306
        %v1687 = vunpack.c.h.b16 %v1306
        %v1688 = vunpack.c.l.b16 %v1307
        %v1689 = vunpack.c.l.b16 %v1308
        %v1690 = vunpack.c.h.b16 %v1308
        %v1691 = vunpack.c.l.b16 %v1309
        %v1692 = vunpack.c.l.b16 %v1310
        %v1693 = vunpack.c.h.b16 %v1310
        %v1694 = vunpack.c.l.b16 %v1311
        %v1695 = vunpack.c.l.b16 %v1312
        %v1696 = vunpack.c.h.b16 %v1312
        %v1697 = vunpack.c.l.b16 %v1313
        %v1698 = vunpack.c.l.b16 %v1314
        %v1699 = vunpack.c.h.b16 %v1314
        %v1700 = vunpack.c.l.b16 %v1315
        %v1701 = vunpack.c.l.b16 %v1316
        %v1702 = vunpack.c.h.b16 %v1316
        %v1703 = vunpack.c.l.b16 %v1317
        %v1704 = vunpack.c.l.b16 %v1318
        %v1705 = vunpack.c.h.b16 %v1318
        %v1706 = vunpack.c.l.b16 %v1319
        %v1707 = vunpack.c.l.b16 %v1320
        %v1708 = vunpack.c.h.b16 %v1320
        %v1709 = vunpack.c.l.b16 %v1321
        %v1710 = vunpack.c.l.b16 %v1322
        %v1711 = vunpack.c.h.b16 %v1322
        %v1712 = vunpack.c.l.b16 %v1323
        %v1713 = vunpack.c.l.b16 %v1324
        %v1714 = vunpack.c.h.b16 %v1324
        %v1715 = vunpack.c.l.b16 %v1325
        %v1716 = vunpack.c.l.b16 %v1326
        %v1717 = vunpack.c.h.b16 %v1326
        %v1718 = vunpack.c.l.b16 %v1327
        %v1719 = vunpack.c.l.b16 %v1328
        %v1720 = vunpack.c.h.b16 %v1328
        %v1721 = vunpack.c.l.b16 %v1329
        %v1722 = vunpack.c.l.b16 %v1330
        %v1723 = vunpack.c.h.b16 %v1330
        %v1724 = vunpack.c.l.b16 %v1331
        %v1725 = vunpack.c.l.b16 %v1332
        %v1726 = vunpack.c.h.b16 %v1332
        %v1727 = vunpack.c.l.b16 %v1333
        %v1728 = vunpack.c.l.b16 %v1334
        %v1729 = vunpack.c.h.b16 %v1334
        %v1730 = vunpack.c.l.b16 %v1335
        %v1731 = vunpack.c.l.b16 %v1336
        %v1732 = vunpack.c.h.b16 %v1336
        %v1733 = vunpack.c.l.b16 %v1337
        %v1734 = vunpack.c.l.b16 %v1338
        %v1735 = vunpack.c.h.b16 %v1338
        %v1736 = vunpack.c.l.b16 %v1339
        %v1737 = vunpack.c.l.b16 %v1340
        %v1738 = vunpack.c.h.b16 %v1340
        %v1739 = vunpack.c.l.b16 %v1341
        %v1740 = vpack.c.b16 %v1683, %v1680
        %v1741 = vpack.c.b16 %v1684, %v1681
        %v1742 = vpack.c.b16 %v1685, %v1682
        %v1743 = vpack.c.b16 %v1689, %v1686
        %v1744 = vpack.c.b16 %v1690, %v1687
        %v1745 = vpack.c.b16 %v1691, %v1688
        %v1746 = vpack.c.b16 %v1695, %v1692
        %v1747 = vpack.c.b16 %v1696, %v1693
        %v1748 = vpack.c.b16 %v1697, %v1694
        %v1749 = vpack.c.b16 %v1701, %v1698
        %v1750 = vpack.c.b16 %v1702, %v1699
        %v1751 = vpack.c.b16 %v1703, %v1700
        %v1752 = vpack.c.b16 %v1707, %v1704
        %v1753 = vpack.c.b16 %v1708, %v1705
        %v1754 = vpack.c.b16 %v1709, %v1706
        %v1755 = vpack.c.b16 %v1713, %v1710
        %v1756 = vpack.c.b16 %v1714, %v1711
        %v1757 = vpack.c.b16 %v1715, %v1712
        %v1758 = vpack.c.b16 %v1719, %v1716
        %v1759 = vpack.c.b16 %v1720, %v1717
        %v1760 = vpack.c.b16 %v1721, %v1718
        %v1761 = vpack.c.b16 %v1725, %v1722
        %v1762 = vpack.c.b16 %v1726, %v1723
        %v1763 = vpack.c.b16 %v1727, %v1724
        %v1764 = vpack.c.b16 %v1731, %v1728
        %v1765 = vpack.c.b16 %v1732, %v1729
        %v1766 = vpack.c.b16 %v1733, %v1730
        %v1767 = vpack.c.b16 %v1737, %v1734
        %v1768 = vpack.c.b16 %v1738, %v1735
        %v1769 = vpack.c.b16 %v1739, %v1736
        %v1801 = vsel %vm1552, %v1301, 0
        %1803 = vmatprep.subr.bf16.mxu0 %v1762
        %1804 = vmatpush1.bf16.msra.mxu0 %v1761
        %1805 = vmatprep.subr.bf16.mxu0 %v1759
        %1806 = vmatpush1.bf16.msra.mxu0 %v1758
        %1807 = vmatprep.subr.bf16.mxu0 %v1756
        %1808 = vmatpush1.bf16.msra.mxu0 %v1755
        %1809 = vmatprep.subr.bf16.mxu0 %v1753
        %1810 = vmatpush1.bf16.msra.mxu0 %v1752
        %1811 = vmatprep.subr.bf16.mxu0 %v1750
        %1812 = vmatpush1.bf16.msra.mxu0 %v1749
        %1813 = vmatprep.subr.bf16.mxu0 %v1747
        %1814 = vmatpush1.bf16.msra.mxu0 %v1746
        %1815 = vmatprep.subr.bf16.mxu0 %v1744
        %1816 = vmatpush1.bf16.msra.mxu0 %v1743
        %1817 = vmatprep.subr.bf16.mxu0 %v1741
        %1818 = vmatpush1.bf16.msra.mxu0 %v1740
        %1819 = vmatprep.subr.bf16.mxu0 0
        %1820 = vmatpush2.bf16.msra.mxu0 0
        %1821 = vmatprep.subr.bf16.mxu0 0
        %1822 = vmatpush2.bf16.msra.mxu0 0
        %1823 = vmatprep.subr.bf16.mxu0 0
        %1824 = vmatpush2.bf16.msra.mxu0 0
        %1825 = vmatprep.subr.bf16.mxu0 0
        %1826 = vmatpush2.bf16.msra.mxu0 0
        %1827 = vmatprep.subr.bf16.mxu0 0
        %1828 = vmatpush2.bf16.msra.mxu0 0
        %1829 = vmatprep.subr.bf16.mxu0 0
        %1830 = vmatpush2.bf16.msra.mxu0 0
        %1831 = vmatprep.subr.bf16.mxu0 %v1768
        %1832 = vmatpush2.bf16.msra.mxu0 %v1767
        %1833 = vmatprep.subr.bf16.mxu0 %v1765
        %1834 = vmatpush2.bf16.msra.mxu0 %v1764
        %1835 = vmatprep.mubr.bf16.mxu0 %v1801
        %1836 = vmatmul.mubr.bf16.gmra.mxu0 %v1300
        %v1837 = vpop.f32.mrf.mxu0
        %v1838 = vadd.f32 %v1591, %v1837
        %v1839 = vpop.f32.mrf.mxu0
        %v1840 = vadd.f32 %v1593, %v1839
        %v1841 = vpop.f32.mrf.mxu0
        %v1842 = vadd.f32 %v1595, %v1841
        %v1843 = vpop.f32.mrf.mxu0
        %v1844 = vadd.f32 %v1597, %v1843
        %1845 = vdwg.mxu0
        %1846 = vmatprep.subr.bf16.mxu0 0
        %1847 = vmatpush1.bf16.msra.mxu0 %v1763
        %1848 = vmatprep.subr.bf16.mxu0 0
        %1849 = vmatpush1.bf16.msra.mxu0 %v1760
        %1850 = vmatprep.subr.bf16.mxu0 0
        %1851 = vmatpush1.bf16.msra.mxu0 %v1757
        %1852 = vmatprep.subr.bf16.mxu0 0
        %1853 = vmatpush1.bf16.msra.mxu0 %v1754
        %1854 = vmatprep.subr.bf16.mxu0 0
        %1855 = vmatpush1.bf16.msra.mxu0 %v1751
        %1856 = vmatprep.subr.bf16.mxu0 0
        %1857 = vmatpush1.bf16.msra.mxu0 %v1748
        %1858 = vmatprep.subr.bf16.mxu0 0
        %1859 = vmatpush1.bf16.msra.mxu0 %v1745
        %1860 = vmatprep.subr.bf16.mxu0 0
        %1861 = vmatpush1.bf16.msra.mxu0 %v1742
        %1862 = vmatprep.subr.bf16.mxu0 0
        %1863 = vmatpush2.bf16.msra.mxu0 0
        %1864 = vmatprep.subr.bf16.mxu0 0
        %1865 = vmatpush2.bf16.msra.mxu0 0
        %1866 = vmatprep.subr.bf16.mxu0 0
        %1867 = vmatpush2.bf16.msra.mxu0 0
        %1868 = vmatprep.subr.bf16.mxu0 0
        %1869 = vmatpush2.bf16.msra.mxu0 0
        %1870 = vmatprep.subr.bf16.mxu0 0
        %1871 = vmatpush2.bf16.msra.mxu0 0
        %1872 = vmatprep.subr.bf16.mxu0 0
        %1873 = vmatpush2.bf16.msra.mxu0 0
        %1874 = vmatprep.subr.bf16.mxu0 0
        %1875 = vmatpush2.bf16.msra.mxu0 %v1769
        %1876 = vmatprep.subr.bf16.mxu0 0
        %1877 = vmatpush2.bf16.msra.mxu0 %v1766
        %1878 = vmatprep.mubr.bf16.mxu0 %v1801
        %1879 = vmatmul.mubr.bf16.gmra.mxu0 %v1300
        %v1880 = vpop.f32.mrf.mxu0
        %v1881 = vadd.f32 %v1634, %v1880
        %v1882 = vpop.f32.mrf.mxu0
        %v1883 = vpop.f32.mrf.mxu0
        %v1884 = vadd.f32 %v1637, %v1883
        %v1885 = vpop.f32.mrf.mxu0
        %1886 = vdwg.mxu0
        %v1887 = vld [vmem:[#allocation3] sm:$0xfe]
        %v1888 = vld [vmem:[#allocation3 + $0x8] sm:$0xfe]
        %v1889 = vld [vmem:[#allocation3 + $0x10] sm:$0x3f]
        %v1890 = vld [vmem:[#allocation3 + $0x18] sm:$0x3f]
        %v1891 = vpack.c.bf16 %v1889, %v1887
        %v1892 = vpack.c.bf16 %v1890, %v1888
        %s1893 = scalar_lea.vmem %s5, 480
        %v1894 = vld [vmem:[%s1893] sm:$0xff]
        %v1895 = vld [vmem:[%s1893 + $0x8] sm:$0xf]
        %v1896 = vld [vmem:[%s1893 + $0xc] sm:$0xff]
        %v1897 = vld [vmem:[%s1893 + $0x14] sm:$0xf]
        %v1898 = vld [vmem:[%s1893 + $0x18] sm:$0xff]
        %v1899 = vld [vmem:[%s1893 + $0x20] sm:$0xf]
        %v1900 = vld [vmem:[%s1893 + $0x24] sm:$0xff]
        %v1901 = vld [vmem:[%s1893 + $0x2c] sm:$0xf]
        %v1902 = vld [vmem:[%s1893 + $0x30] sm:$0xff]
        %v1903 = vld [vmem:[%s1893 + $0x38] sm:$0xf]
        %v1904 = vld [vmem:[%s1893 + $0x3c] sm:$0xff]
        %v1905 = vld [vmem:[%s1893 + $0x44] sm:$0xf]
        %v1906 = vld [vmem:[%s1893 + $0x48] sm:$0xff]
        %v1907 = vld [vmem:[%s1893 + $0x50] sm:$0xf]
        %v1908 = vld [vmem:[%s1893 + $0x54] sm:$0xff]
        %v1909 = vld [vmem:[%s1893 + $0x5c] sm:$0xf]
        %v1910 = vld [vmem:[%s1893 + $0x60] sm:$0xff]
        %v1911 = vld [vmem:[%s1893 + $0x68] sm:$0xf]
        %v1912 = vld [vmem:[%s1893 + $0x6c] sm:$0xff]
        %v1913 = vld [vmem:[%s1893 + $0x74] sm:$0xf]
        %v1914 = vld [vmem:[%s1893 + $0x78] sm:$0xff]
        %v1915 = vld [vmem:[%s1893 + $0x80] sm:$0xf]
        %v1916 = vld [vmem:[%s1893 + $0x84] sm:$0xff]
        %v1917 = vld [vmem:[%s1893 + $0x8c] sm:$0xf]
        %v1918 = vld [vmem:[%s1893 + $0x90] sm:$0xff]
        %v1919 = vld [vmem:[%s1893 + $0x98] sm:$0xf]
        %v1920 = vld [vmem:[%s1893 + $0x9c] sm:$0xff]
        %v1921 = vld [vmem:[%s1893 + $0xa4] sm:$0xf]
        %v1922 = vld [vmem:[%s1893 + $0xa8] sm:$0xff]
        %v1923 = vld [vmem:[%s1893 + $0xb0] sm:$0xf]
        %v1924 = vld [vmem:[%s1893 + $0xb4] sm:$0xff]
        %v1925 = vld [vmem:[%s1893 + $0xbc] sm:$0xf]
        %v1926 = vld [vmem:[%s1893 + $0xc0] sm:$0xff]
        %v1927 = vld [vmem:[%s1893 + $0xc8] sm:$0xf]
        %v1928 = vld [vmem:[%s1893 + $0xcc] sm:$0xff]
        %v1929 = vld [vmem:[%s1893 + $0xd4] sm:$0xf]
        %v1930 = vld [vmem:[%s1893 + $0xd8] sm:$0xff]
        %v1931 = vld [vmem:[%s1893 + $0xe0] sm:$0xf]
        %v1932 = vld [vmem:[%s1893 + $0xe4] sm:$0xff]
        %v1933 = vld [vmem:[%s1893 + $0xec] sm:$0xf]
        %v1935 = vshrl.u32 %v1891, 16
        %v1937 = vshll.u32 %v1891, 16
        %v1939 = vrot.slane %v1937, 1
        %v1940 = vor.u32 %v1935, %v1939
        %v1942 = vshrl.u32 %v1892, 16
        %v1944 = vshll.u32 %v1892, 16
        %v1946 = vrot.slane %v1944, 1
        %v1947 = vor.u32 %v1942, %v1946
        %v1989 = vunpack.c.l.b16 %v1894
        %v1990 = vunpack.c.h.b16 %v1894
        %v1991 = vunpack.c.l.b16 %v1895
        %v1992 = vunpack.c.l.b16 %v1896
        %v1993 = vunpack.c.h.b16 %v1896
        %v1994 = vunpack.c.l.b16 %v1897
        %v1995 = vunpack.c.l.b16 %v1898
        %v1996 = vunpack.c.h.b16 %v1898
        %v1997 = vunpack.c.l.b16 %v1899
        %v1998 = vunpack.c.l.b16 %v1900
        %v1999 = vunpack.c.h.b16 %v1900
        %v2000 = vunpack.c.l.b16 %v1901
        %v2001 = vunpack.c.l.b16 %v1902
        %v2002 = vunpack.c.h.b16 %v1902
        %v2003 = vunpack.c.l.b16 %v1903
        %v2004 = vunpack.c.l.b16 %v1904
        %v2005 = vunpack.c.h.b16 %v1904
        %v2006 = vunpack.c.l.b16 %v1905
        %v2007 = vunpack.c.l.b16 %v1906
        %v2008 = vunpack.c.h.b16 %v1906
        %v2009 = vunpack.c.l.b16 %v1907
        %v2010 = vunpack.c.l.b16 %v1908
        %v2011 = vunpack.c.h.b16 %v1908
        %v2012 = vunpack.c.l.b16 %v1909
        %v2013 = vunpack.c.l.b16 %v1910
        %v2014 = vunpack.c.h.b16 %v1910
        %v2015 = vunpack.c.l.b16 %v1911
        %v2016 = vunpack.c.l.b16 %v1912
        %v2017 = vunpack.c.h.b16 %v1912
        %v2018 = vunpack.c.l.b16 %v1913
        %v2019 = vunpack.c.l.b16 %v1914
        %v2020 = vunpack.c.h.b16 %v1914
        %v2021 = vunpack.c.l.b16 %v1915
        %v2022 = vunpack.c.l.b16 %v1916
        %v2023 = vunpack.c.h.b16 %v1916
        %v2024 = vunpack.c.l.b16 %v1917
        %v2025 = vunpack.c.l.b16 %v1918
        %v2026 = vunpack.c.h.b16 %v1918
        %v2027 = vunpack.c.l.b16 %v1919
        %v2028 = vunpack.c.l.b16 %v1920
        %v2029 = vunpack.c.h.b16 %v1920
        %v2030 = vunpack.c.l.b16 %v1921
        %v2031 = vunpack.c.l.b16 %v1922
        %v2032 = vunpack.c.h.b16 %v1922
        %v2033 = vunpack.c.l.b16 %v1923
        %v2034 = vunpack.c.l.b16 %v1924
        %v2035 = vunpack.c.h.b16 %v1924
        %v2036 = vunpack.c.l.b16 %v1925
        %v2037 = vunpack.c.l.b16 %v1926
        %v2038 = vunpack.c.h.b16 %v1926
        %v2039 = vunpack.c.l.b16 %v1927
        %v2040 = vunpack.c.l.b16 %v1928
        %v2041 = vunpack.c.h.b16 %v1928
        %v2042 = vunpack.c.l.b16 %v1929
        %v2043 = vunpack.c.l.b16 %v1930
        %v2044 = vunpack.c.h.b16 %v1930
        %v2045 = vunpack.c.l.b16 %v1931
        %v2046 = vunpack.c.l.b16 %v1932
        %v2047 = vunpack.c.h.b16 %v1932
        %v2048 = vunpack.c.l.b16 %v1933
        %v2049 = vpack.c.b16 %v1992, %v1989
        %v2050 = vpack.c.b16 %v1993, %v1990
        %v2051 = vpack.c.b16 %v1994, %v1991
        %v2052 = vpack.c.b16 %v1998, %v1995
        %v2053 = vpack.c.b16 %v1999, %v1996
        %v2054 = vpack.c.b16 %v2000, %v1997
        %v2055 = vpack.c.b16 %v2004, %v2001
        %v2056 = vpack.c.b16 %v2005, %v2002
        %v2057 = vpack.c.b16 %v2006, %v2003
        %v2058 = vpack.c.b16 %v2010, %v2007
        %v2059 = vpack.c.b16 %v2011, %v2008
        %v2060 = vpack.c.b16 %v2012, %v2009
        %v2061 = vpack.c.b16 %v2016, %v2013
        %v2062 = vpack.c.b16 %v2017, %v2014
        %v2063 = vpack.c.b16 %v2018, %v2015
        %v2064 = vpack.c.b16 %v2022, %v2019
        %v2065 = vpack.c.b16 %v2023, %v2020
        %v2066 = vpack.c.b16 %v2024, %v2021
        %v2067 = vpack.c.b16 %v2028, %v2025
        %v2068 = vpack.c.b16 %v2029, %v2026
        %v2069 = vpack.c.b16 %v2030, %v2027
        %v2070 = vpack.c.b16 %v2034, %v2031
        %v2071 = vpack.c.b16 %v2035, %v2032
        %v2072 = vpack.c.b16 %v2036, %v2033
        %v2073 = vpack.c.b16 %v2040, %v2037
        %v2074 = vpack.c.b16 %v2041, %v2038
        %v2075 = vpack.c.b16 %v2042, %v2039
        %v2076 = vpack.c.b16 %v2046, %v2043
        %v2077 = vpack.c.b16 %v2047, %v2044
        %v2078 = vpack.c.b16 %v2048, %v2045
        %v2110 = vsel %vm1552, %v1947, 0
        %2112 = vmatprep.subr.bf16.mxu0 %v2071
        %2113 = vmatpush1.bf16.msra.mxu0 %v2070
        %2114 = vmatprep.subr.bf16.mxu0 %v2068
        %2115 = vmatpush1.bf16.msra.mxu0 %v2067
        %2116 = vmatprep.subr.bf16.mxu0 %v2065
        %2117 = vmatpush1.bf16.msra.mxu0 %v2064
        %2118 = vmatprep.subr.bf16.mxu0 %v2062
        %2119 = vmatpush1.bf16.msra.mxu0 %v2061
        %2120 = vmatprep.subr.bf16.mxu0 %v2059
        %2121 = vmatpush1.bf16.msra.mxu0 %v2058
        %2122 = vmatprep.subr.bf16.mxu0 %v2056
        %2123 = vmatpush1.bf16.msra.mxu0 %v2055
        %2124 = vmatprep.subr.bf16.mxu0 %v2053
        %2125 = vmatpush1.bf16.msra.mxu0 %v2052
        %2126 = vmatprep.subr.bf16.mxu0 %v2050
        %2127 = vmatpush1.bf16.msra.mxu0 %v2049
        %2128 = vmatprep.subr.bf16.mxu0 0
        %2129 = vmatpush2.bf16.msra.mxu0 0
        %2130 = vmatprep.subr.bf16.mxu0 0
        %2131 = vmatpush2.bf16.msra.mxu0 0
        %2132 = vmatprep.subr.bf16.mxu0 0
        %2133 = vmatpush2.bf16.msra.mxu0 0
        %2134 = vmatprep.subr.bf16.mxu0 0
        %2135 = vmatpush2.bf16.msra.mxu0 0
        %2136 = vmatprep.subr.bf16.mxu0 0
        %2137 = vmatpush2.bf16.msra.mxu0 0
        %2138 = vmatprep.subr.bf16.mxu0 0
        %2139 = vmatpush2.bf16.msra.mxu0 0
        %2140 = vmatprep.subr.bf16.mxu0 %v2077
        %2141 = vmatpush2.bf16.msra.mxu0 %v2076
        %2142 = vmatprep.subr.bf16.mxu0 %v2074
        %2143 = vmatpush2.bf16.msra.mxu0 %v2073
        %2144 = vmatprep.mubr.bf16.mxu0 %v2110
        %2145 = vmatmul.mubr.bf16.gmra.mxu0 %v1940
        %v2146 = vpop.f32.mrf.mxu0
        %v2147 = vadd.f32 0.0, %v2146
        %v2148 = vpop.f32.mrf.mxu0
        %v2149 = vadd.f32 0.0, %v2148
        %v2150 = vpop.f32.mrf.mxu0
        %v2151 = vadd.f32 0.0, %v2150
        %v2152 = vpop.f32.mrf.mxu0
        %v2153 = vadd.f32 0.0, %v2152
        %2154 = vdwg.mxu0
        %2155 = vmatprep.subr.bf16.mxu0 0
        %2156 = vmatpush1.bf16.msra.mxu0 %v2072
        %2157 = vmatprep.subr.bf16.mxu0 0
        %2158 = vmatpush1.bf16.msra.mxu0 %v2069
        %2159 = vmatprep.subr.bf16.mxu0 0
        %2160 = vmatpush1.bf16.msra.mxu0 %v2066
        %2161 = vmatprep.subr.bf16.mxu0 0
        %2162 = vmatpush1.bf16.msra.mxu0 %v2063
        %2163 = vmatprep.subr.bf16.mxu0 0
        %2164 = vmatpush1.bf16.msra.mxu0 %v2060
        %2165 = vmatprep.subr.bf16.mxu0 0
        %2166 = vmatpush1.bf16.msra.mxu0 %v2057
        %2167 = vmatprep.subr.bf16.mxu0 0
        %2168 = vmatpush1.bf16.msra.mxu0 %v2054
        %2169 = vmatprep.subr.bf16.mxu0 0
        %2170 = vmatpush1.bf16.msra.mxu0 %v2051
        %2171 = vmatprep.subr.bf16.mxu0 0
        %2172 = vmatpush2.bf16.msra.mxu0 0
        %2173 = vmatprep.subr.bf16.mxu0 0
        %2174 = vmatpush2.bf16.msra.mxu0 0
        %2175 = vmatprep.subr.bf16.mxu0 0
        %2176 = vmatpush2.bf16.msra.mxu0 0
        %2177 = vmatprep.subr.bf16.mxu0 0
        %2178 = vmatpush2.bf16.msra.mxu0 0
        %2179 = vmatprep.subr.bf16.mxu0 0
        %2180 = vmatpush2.bf16.msra.mxu0 0
        %2181 = vmatprep.subr.bf16.mxu0 0
        %2182 = vmatpush2.bf16.msra.mxu0 0
        %2183 = vmatprep.subr.bf16.mxu0 0
        %2184 = vmatpush2.bf16.msra.mxu0 %v2078
        %2185 = vmatprep.subr.bf16.mxu0 0
        %2186 = vmatpush2.bf16.msra.mxu0 %v2075
        %2187 = vmatprep.mubr.bf16.mxu0 %v2110
        %2188 = vmatmul.mubr.bf16.gmra.mxu0 %v1940
        %v2189 = vpop.f32.mrf.mxu0
        %v2190 = vadd.f32 0.0, %v2189
        %v2191 = vpop.f32.mrf.mxu0
        %v2192 = vpop.f32.mrf.mxu0
        %v2193 = vadd.f32 0.0, %v2192
        %v2194 = vpop.f32.mrf.mxu0
        %2195 = vdwg.mxu0
        %v2196 = vadd.f32 %v1838, %v2147
        %v2197 = vadd.f32 %v1840, %v2149
        %v2198 = vadd.f32 %v1881, %v2190
        %v2199 = vadd.f32 %v1842, %v2151
        %v2200 = vadd.f32 %v1844, %v2153
        %v2201 = vadd.f32 %v1884, %v2193
        %s2202 = scalar_lea.vmem %s5, 720
        %v2203 = vld [vmem:[%s2202] sm:$0xff]
        %v2204 = vld [vmem:[%s2202 + $0x8] sm:$0xf]
        %v2205 = vld [vmem:[%s2202 + $0xc] sm:$0xff]
        %v2206 = vld [vmem:[%s2202 + $0x14] sm:$0xf]
        %v2207 = vld [vmem:[%s2202 + $0x18] sm:$0xff]
        %v2208 = vld [vmem:[%s2202 + $0x20] sm:$0xf]
        %v2209 = vld [vmem:[%s2202 + $0x24] sm:$0xff]
        %v2210 = vld [vmem:[%s2202 + $0x2c] sm:$0xf]
        %v2211 = vld [vmem:[%s2202 + $0x30] sm:$0xff]
        %v2212 = vld [vmem:[%s2202 + $0x38] sm:$0xf]
        %v2213 = vld [vmem:[%s2202 + $0x3c] sm:$0xff]
        %v2214 = vld [vmem:[%s2202 + $0x44] sm:$0xf]
        %v2215 = vld [vmem:[%s2202 + $0x48] sm:$0xff]
        %v2216 = vld [vmem:[%s2202 + $0x50] sm:$0xf]
        %v2217 = vld [vmem:[%s2202 + $0x54] sm:$0xff]
        %v2218 = vld [vmem:[%s2202 + $0x5c] sm:$0xf]
        %v2219 = vld [vmem:[%s2202 + $0x60] sm:$0xff]
        %v2220 = vld [vmem:[%s2202 + $0x68] sm:$0xf]
        %v2221 = vld [vmem:[%s2202 + $0x6c] sm:$0xff]
        %v2222 = vld [vmem:[%s2202 + $0x74] sm:$0xf]
        %v2223 = vld [vmem:[%s2202 + $0x78] sm:$0xff]
        %v2224 = vld [vmem:[%s2202 + $0x80] sm:$0xf]
        %v2225 = vld [vmem:[%s2202 + $0x84] sm:$0xff]
        %v2226 = vld [vmem:[%s2202 + $0x8c] sm:$0xf]
        %v2227 = vld [vmem:[%s2202 + $0x90] sm:$0xff]
        %v2228 = vld [vmem:[%s2202 + $0x98] sm:$0xf]
        %v2229 = vld [vmem:[%s2202 + $0x9c] sm:$0xff]
        %v2230 = vld [vmem:[%s2202 + $0xa4] sm:$0xf]
        %v2231 = vld [vmem:[%s2202 + $0xa8] sm:$0xff]
        %v2232 = vld [vmem:[%s2202 + $0xb0] sm:$0xf]
        %v2233 = vld [vmem:[%s2202 + $0xb4] sm:$0xff]
        %v2234 = vld [vmem:[%s2202 + $0xbc] sm:$0xf]
        %v2235 = vld [vmem:[%s2202 + $0xc0] sm:$0xff]
        %v2236 = vld [vmem:[%s2202 + $0xc8] sm:$0xf]
        %v2237 = vld [vmem:[%s2202 + $0xcc] sm:$0xff]
        %v2238 = vld [vmem:[%s2202 + $0xd4] sm:$0xf]
        %v2239 = vld [vmem:[%s2202 + $0xd8] sm:$0xff]
        %v2240 = vld [vmem:[%s2202 + $0xe0] sm:$0xf]
        %v2241 = vld [vmem:[%s2202 + $0xe4] sm:$0xff]
        %v2242 = vld [vmem:[%s2202 + $0xec] sm:$0xf]
        %2243 = vrot.lane.b32.xlu0 %v1940, 96
        %v2244 = vpop.permute.xlu0 %2243
        %2245 = vrot.lane.b32.xlu0 %v1947, 96
        %v2246 = vpop.permute.xlu0 %2245
        %v2247 = vsel %vm1389, %v2244, %v2246
        %v2289 = vunpack.c.l.b16 %v2203
        %v2290 = vunpack.c.h.b16 %v2203
        %v2291 = vunpack.c.l.b16 %v2204
        %v2292 = vunpack.c.l.b16 %v2205
        %v2293 = vunpack.c.h.b16 %v2205
        %v2294 = vunpack.c.l.b16 %v2206
        %v2295 = vunpack.c.l.b16 %v2207
        %v2296 = vunpack.c.h.b16 %v2207
        %v2297 = vunpack.c.l.b16 %v2208
        %v2298 = vunpack.c.l.b16 %v2209
        %v2299 = vunpack.c.h.b16 %v2209
        %v2300 = vunpack.c.l.b16 %v2210
        %v2301 = vunpack.c.l.b16 %v2211
        %v2302 = vunpack.c.h.b16 %v2211
        %v2303 = vunpack.c.l.b16 %v2212
        %v2304 = vunpack.c.l.b16 %v2213
        %v2305 = vunpack.c.h.b16 %v2213
        %v2306 = vunpack.c.l.b16 %v2214
        %v2307 = vunpack.c.l.b16 %v2215
        %v2308 = vunpack.c.h.b16 %v2215
        %v2309 = vunpack.c.l.b16 %v2216
        %v2310 = vunpack.c.l.b16 %v2217
        %v2311 = vunpack.c.h.b16 %v2217
        %v2312 = vunpack.c.l.b16 %v2218
        %v2313 = vunpack.c.l.b16 %v2219
        %v2314 = vunpack.c.h.b16 %v2219
        %v2315 = vunpack.c.l.b16 %v2220
        %v2316 = vunpack.c.l.b16 %v2221
        %v2317 = vunpack.c.h.b16 %v2221
        %v2318 = vunpack.c.l.b16 %v2222
        %v2319 = vunpack.c.l.b16 %v2223
        %v2320 = vunpack.c.h.b16 %v2223
        %v2321 = vunpack.c.l.b16 %v2224
        %v2322 = vunpack.c.l.b16 %v2225
        %v2323 = vunpack.c.h.b16 %v2225
        %v2324 = vunpack.c.l.b16 %v2226
        %v2325 = vunpack.c.l.b16 %v2227
        %v2326 = vunpack.c.h.b16 %v2227
        %v2327 = vunpack.c.l.b16 %v2228
        %v2328 = vunpack.c.l.b16 %v2229
        %v2329 = vunpack.c.h.b16 %v2229
        %v2330 = vunpack.c.l.b16 %v2230
        %v2331 = vunpack.c.l.b16 %v2231
        %v2332 = vunpack.c.h.b16 %v2231
        %v2333 = vunpack.c.l.b16 %v2232
        %v2334 = vunpack.c.l.b16 %v2233
        %v2335 = vunpack.c.h.b16 %v2233
        %v2336 = vunpack.c.l.b16 %v2234
        %v2337 = vunpack.c.l.b16 %v2235
        %v2338 = vunpack.c.h.b16 %v2235
        %v2339 = vunpack.c.l.b16 %v2236
        %v2340 = vunpack.c.l.b16 %v2237
        %v2341 = vunpack.c.h.b16 %v2237
        %v2342 = vunpack.c.l.b16 %v2238
        %v2343 = vunpack.c.l.b16 %v2239
        %v2344 = vunpack.c.h.b16 %v2239
        %v2345 = vunpack.c.l.b16 %v2240
        %v2346 = vunpack.c.l.b16 %v2241
        %v2347 = vunpack.c.h.b16 %v2241
        %v2348 = vunpack.c.l.b16 %v2242
        %v2349 = vpack.c.b16 %v2292, %v2289
        %v2350 = vpack.c.b16 %v2293, %v2290
        %v2351 = vpack.c.b16 %v2294, %v2291
        %v2352 = vpack.c.b16 %v2298, %v2295
        %v2353 = vpack.c.b16 %v2299, %v2296
        %v2354 = vpack.c.b16 %v2300, %v2297
        %v2355 = vpack.c.b16 %v2304, %v2301
        %v2356 = vpack.c.b16 %v2305, %v2302
        %v2357 = vpack.c.b16 %v2306, %v2303
        %v2358 = vpack.c.b16 %v2310, %v2307
        %v2359 = vpack.c.b16 %v2311, %v2308
        %v2360 = vpack.c.b16 %v2312, %v2309
        %v2361 = vpack.c.b16 %v2316, %v2313
        %v2362 = vpack.c.b16 %v2317, %v2314
        %v2363 = vpack.c.b16 %v2318, %v2315
        %v2364 = vpack.c.b16 %v2322, %v2319
        %v2365 = vpack.c.b16 %v2323, %v2320
        %v2366 = vpack.c.b16 %v2324, %v2321
        %v2367 = vpack.c.b16 %v2328, %v2325
        %v2368 = vpack.c.b16 %v2329, %v2326
        %v2369 = vpack.c.b16 %v2330, %v2327
        %v2370 = vpack.c.b16 %v2334, %v2331
        %v2371 = vpack.c.b16 %v2335, %v2332
        %v2372 = vpack.c.b16 %v2336, %v2333
        %v2373 = vpack.c.b16 %v2340, %v2337
        %v2374 = vpack.c.b16 %v2341, %v2338
        %v2375 = vpack.c.b16 %v2342, %v2339
        %v2376 = vpack.c.b16 %v2346, %v2343
        %v2377 = vpack.c.b16 %v2347, %v2344
        %v2378 = vpack.c.b16 %v2348, %v2345
        %v2410 = vsel %vm1552, %v2246, 0
        %2412 = vmatprep.subr.bf16.mxu0 %v2371
        %2413 = vmatpush1.bf16.msra.mxu0 %v2370
        %2414 = vmatprep.subr.bf16.mxu0 %v2368
        %2415 = vmatpush1.bf16.msra.mxu0 %v2367
        %2416 = vmatprep.subr.bf16.mxu0 %v2365
        %2417 = vmatpush1.bf16.msra.mxu0 %v2364
        %2418 = vmatprep.subr.bf16.mxu0 %v2362
        %2419 = vmatpush1.bf16.msra.mxu0 %v2361
        %2420 = vmatprep.subr.bf16.mxu0 %v2359
        %2421 = vmatpush1.bf16.msra.mxu0 %v2358
        %2422 = vmatprep.subr.bf16.mxu0 %v2356
        %2423 = vmatpush1.bf16.msra.mxu0 %v2355
        %2424 = vmatprep.subr.bf16.mxu0 %v2353
        %2425 = vmatpush1.bf16.msra.mxu0 %v2352
        %2426 = vmatprep.subr.bf16.mxu0 %v2350
        %2427 = vmatpush1.bf16.msra.mxu0 %v2349
        %2428 = vmatprep.subr.bf16.mxu0 0
        %2429 = vmatpush2.bf16.msra.mxu0 0
        %2430 = vmatprep.subr.bf16.mxu0 0
        %2431 = vmatpush2.bf16.msra.mxu0 0
        %2432 = vmatprep.subr.bf16.mxu0 0
        %2433 = vmatpush2.bf16.msra.mxu0 0
        %2434 = vmatprep.subr.bf16.mxu0 0
        %2435 = vmatpush2.bf16.msra.mxu0 0
        %2436 = vmatprep.subr.bf16.mxu0 0
        %2437 = vmatpush2.bf16.msra.mxu0 0
        %2438 = vmatprep.subr.bf16.mxu0 0
        %2439 = vmatpush2.bf16.msra.mxu0 0
        %2440 = vmatprep.subr.bf16.mxu0 %v2377
        %2441 = vmatpush2.bf16.msra.mxu0 %v2376
        %2442 = vmatprep.subr.bf16.mxu0 %v2374
        %2443 = vmatpush2.bf16.msra.mxu0 %v2373
        %2444 = vmatprep.mubr.bf16.mxu0 %v2410
        %2445 = vmatmul.mubr.bf16.gmra.mxu0 %v2247
        %v2446 = vpop.f32.mrf.mxu0
        %v2447 = vadd.f32 0.0, %v2446
        %v2448 = vpop.f32.mrf.mxu0
        %v2449 = vadd.f32 0.0, %v2448
        %v2450 = vpop.f32.mrf.mxu0
        %v2451 = vadd.f32 0.0, %v2450
        %v2452 = vpop.f32.mrf.mxu0
        %v2453 = vadd.f32 0.0, %v2452
        %2454 = vdwg.mxu0
        %2455 = vmatprep.subr.bf16.mxu0 0
        %2456 = vmatpush1.bf16.msra.mxu0 %v2372
        %2457 = vmatprep.subr.bf16.mxu0 0
        %2458 = vmatpush1.bf16.msra.mxu0 %v2369
        %2459 = vmatprep.subr.bf16.mxu0 0
        %2460 = vmatpush1.bf16.msra.mxu0 %v2366
        %2461 = vmatprep.subr.bf16.mxu0 0
        %2462 = vmatpush1.bf16.msra.mxu0 %v2363
        %2463 = vmatprep.subr.bf16.mxu0 0
        %2464 = vmatpush1.bf16.msra.mxu0 %v2360
        %2465 = vmatprep.subr.bf16.mxu0 0
        %2466 = vmatpush1.bf16.msra.mxu0 %v2357
        %2467 = vmatprep.subr.bf16.mxu0 0
        %2468 = vmatpush1.bf16.msra.mxu0 %v2354
        %2469 = vmatprep.subr.bf16.mxu0 0
        %2470 = vmatpush1.bf16.msra.mxu0 %v2351
        %2471 = vmatprep.subr.bf16.mxu0 0
        %2472 = vmatpush2.bf16.msra.mxu0 0
        %2473 = vmatprep.subr.bf16.mxu0 0
        %2474 = vmatpush2.bf16.msra.mxu0 0
        %2475 = vmatprep.subr.bf16.mxu0 0
        %2476 = vmatpush2.bf16.msra.mxu0 0
        %2477 = vmatprep.subr.bf16.mxu0 0
        %2478 = vmatpush2.bf16.msra.mxu0 0
        %2479 = vmatprep.subr.bf16.mxu0 0
        %2480 = vmatpush2.bf16.msra.mxu0 0
        %2481 = vmatprep.subr.bf16.mxu0 0
        %2482 = vmatpush2.bf16.msra.mxu0 0
        %2483 = vmatprep.subr.bf16.mxu0 0
        %2484 = vmatpush2.bf16.msra.mxu0 %v2378
        %2485 = vmatprep.subr.bf16.mxu0 0
        %2486 = vmatpush2.bf16.msra.mxu0 %v2375
        %2487 = vmatprep.mubr.bf16.mxu0 %v2410
        %2488 = vmatmul.mubr.bf16.gmra.mxu0 %v2247
        %v2489 = vpop.f32.mrf.mxu0
        %v2490 = vadd.f32 0.0, %v2489
        %v2491 = vpop.f32.mrf.mxu0
        %v2492 = vpop.f32.mrf.mxu0
        %v2493 = vadd.f32 0.0, %v2492
        %v2494 = vpop.f32.mrf.mxu0
        %2495 = vdwg.mxu0
        %v2496 = vadd.f32 %v2196, %v2447
        %v2497 = vadd.f32 %v2197, %v2449
        %v2498 = vadd.f32 %v2198, %v2490
        %v2499 = vadd.f32 %v2199, %v2451
        %v2500 = vadd.f32 %v2200, %v2453
        %v2501 = vadd.f32 %v2201, %v2493
        %v2502 = vld [vmem:[%s6] sm:$0x7]
        %v2504 = vlaneseq
        %v2505 = vshrl.u32 %v2504, 7
        %v2506 = vsub.s32 0, %v2505
        %v2507 = vrot.slane %v2502, %v2506
        %v2508 = vlaneseq
        %v2509 = vshrl.u32 %v2508, 7
        %v2510 = vsub.s32 1, %v2509
        %v2511 = vrot.slane %v2502, %v2510
        %v2512 = vlaneseq
        %v2513 = vshrl.u32 %v2512, 7
        %v2514 = vsub.s32 2, %v2513
        %v2515 = vrot.slane %v2502, %v2514
        %v2519 = vadd.f32 %v2496, %v2507
        %v2520 = vadd.f32 %v2497, %v2511
        %v2521 = vadd.f32 %v2498, %v2515
        %v2522 = vadd.f32 %v2499, %v2507
        %v2523 = vadd.f32 %v2500, %v2511
        %v2524 = vadd.f32 %v2501, %v2515
        %vm2525 = vcmp.ge.f32.partialorder %v2519, 0.0
        %vm2526 = vcmp.ge.f32.partialorder %v2520, 0.0
        %vm2527 = vcmp.ge.f32.partialorder %v2521, 0.0
        %vm2528 = vcmp.ge.f32.partialorder %v2522, 0.0
        %vm2529 = vcmp.ge.f32.partialorder %v2523, 0.0
        %vm2530 = vcmp.ge.f32.partialorder %v2524, 0.0
        %v2531 = vmul.f32 %v2519, 0.1
        %v2532 = vmul.f32 %v2520, 0.1
        %v2533 = vmul.f32 %v2521, 0.1
        %v2534 = vmul.f32 %v2522, 0.1
        %v2535 = vmul.f32 %v2523, 0.1
        %v2536 = vmul.f32 %v2524, 0.1
        %v2537 = vsel %vm2525, %v2519, %v2531
        %v2538 = vsel %vm2526, %v2520, %v2532
        %v2539 = vsel %vm2527, %v2521, %v2533
        %v2540 = vsel %vm2528, %v2522, %v2534
        %v2541 = vsel %vm2529, %v2523, %v2535
        %v2542 = vsel %vm2530, %v2524, %v2536
        %2543 = vst [vmem:[#allocation4] sm:$0xff] 0.0
        %2544 = vst [vmem:[#allocation4 + $0x8] sm:$0xff] 0.0
        %2545 = vst [vmem:[#allocation4 + $0x10] sm:$0xff] 0.0
        %2546 = vst.msk [vmem:[#allocation4 + $0x18] sm:$0xff] %vm1291, 0.0
        %2547 = vst [vmem:[#allocation4 + $0x20] sm:$0x7f] 0.0
        %2548 = vst [vmem:[#allocation4 + $0x28] sm:$0x7f] 0.0
        %2549 = vst [vmem:[#allocation4 + $0x30] sm:$0x7f] 0.0
        %vm2550 = vcmask 522240
        %2551 = vst.msk [vmem:[#allocation4 + $0x38] sm:$0x7f] %vm2550, 0.0
        %vm2558 = vcmask 1040384
        %v2559 = vrot.slane %v2537, 7
        %v2560 = vrot.slane %v2538, 7
        %v2561 = vrot.slane %v2539, 7
        %v2562 = vrot.slane %v2540, 7
        %v2563 = vsel %vm2558, %v2559, %v2562
        %v2564 = vrot.slane %v2541, 7
        %v2565 = vsel %vm2558, %v2560, %v2564
        %v2566 = vrot.slane %v2542, 7
        %v2567 = vsel %vm2558, %v2561, %v2566
        %2568 = vrot.lane.b32.xlu0 %v2559, 64
        %v2569 = vpop.permute.xlu0 %2568
        %2570 = vrot.lane.b32.xlu0 %v2560, 64
        %v2571 = vpop.permute.xlu0 %2570
        %2572 = vrot.lane.b32.xlu0 %v2561, 64
        %v2573 = vpop.permute.xlu0 %2572
        %2574 = vrot.lane.b32.xlu0 %v2563, 64
        %v2575 = vpop.permute.xlu0 %2574
        %2576 = vrot.lane.b32.xlu0 %v2565, 64
        %v2577 = vpop.permute.xlu0 %2576
        %2578 = vrot.lane.b32.xlu0 %v2567, 64
        %v2579 = vpop.permute.xlu0 %2578
        %v2580 = vsel %vm1291, %v2569, %v2571
        %v2581 = vsel %vm1291, %v2571, %v2573
        %v2582 = vsel %vm1291, %v2575, %v2577
        %v2583 = vsel %vm1291, %v2577, %v2579
        %vm2590 = vcmask 1048065
        %2591 = vst.msk [vmem:[#allocation4] sm:$0xfe] %vm2590, %v2569
        %2592 = vst [vmem:[#allocation4 + $0x8] sm:$0xfe] %v2580
        %2593 = vst [vmem:[#allocation4 + $0x10] sm:$0xfe] %v2581
        %vm2594 = vcmask 1046016
        %2595 = vst.msk [vmem:[#allocation4 + $0x20] sm:$0x3f] %vm2594, %v2575
        %2596 = vst [vmem:[#allocation4 + $0x28] sm:$0x3f] %v2582
        %2597 = vst [vmem:[#allocation4 + $0x30] sm:$0x3f] %v2583
        %v2598 = vld [vmem:[#allocation4] sm:$0xff]
        %v2599 = vld [vmem:[#allocation4 + $0x8] sm:$0xff]
        %v2600 = vld [vmem:[#allocation4 + $0x10] sm:$0xff]
        %v2601 = vld [vmem:[#allocation4 + $0x20] sm:$0x3f]
        %v2602 = vld [vmem:[#allocation4 + $0x28] sm:$0x3f]
        %v2603 = vld [vmem:[#allocation4 + $0x30] sm:$0x3f]
        %v2604 = vpack.c.bf16 %v2601, %v2598
        %v2605 = vpack.c.bf16 %v2602, %v2599
        %v2606 = vpack.c.bf16 %v2603, %v2600
        %v2607 = vld [vmem:[%s7] sm:$0xff]
        %v2608 = vld [vmem:[%s7 + $0x8] sm:$0xff]
        %v2609 = vld [vmem:[%s7 + $0x10] sm:$0xff]
        %v2610 = vld [vmem:[%s7 + $0x18] sm:$0xff]
        %v2611 = vld [vmem:[%s7 + $0x20] sm:$0xff]
        %v2612 = vld [vmem:[%s7 + $0x28] sm:$0xff]
        %v2613 = vld [vmem:[%s7 + $0x30] sm:$0xff]
        %v2614 = vld [vmem:[%s7 + $0x38] sm:$0xff]
        %v2615 = vld [vmem:[%s7 + $0x40] sm:$0xff]
        %v2616 = vld [vmem:[%s7 + $0x48] sm:$0xff]
        %v2617 = vld [vmem:[%s7 + $0x50] sm:$0xff]
        %v2618 = vld [vmem:[%s7 + $0x58] sm:$0xff]
        %v2619 = vld [vmem:[%s7 + $0x60] sm:$0xff]
        %v2620 = vld [vmem:[%s7 + $0x68] sm:$0xff]
        %v2621 = vld [vmem:[%s7 + $0x70] sm:$0xff]
        %v2622 = vld [vmem:[%s7 + $0x78] sm:$0xff]
        %v2623 = vld [vmem:[%s7 + $0x80] sm:$0xff]
        %v2624 = vld [vmem:[%s7 + $0x88] sm:$0xff]
        %v2625 = vld [vmem:[%s7 + $0x90] sm:$0xff]
        %v2626 = vld [vmem:[%s7 + $0x98] sm:$0xff]
        %v2627 = vld [vmem:[%s7 + $0xa0] sm:$0xff]
        %v2628 = vld [vmem:[%s7 + $0xa8] sm:$0xff]
        %v2629 = vld [vmem:[%s7 + $0xb0] sm:$0xff]
        %v2630 = vld [vmem:[%s7 + $0xb8] sm:$0xff]
        %v2631 = vld [vmem:[%s7 + $0xc0] sm:$0xff]
        %v2632 = vld [vmem:[%s7 + $0xc8] sm:$0xff]
        %v2633 = vld [vmem:[%s7 + $0xd0] sm:$0xff]
        %v2634 = vld [vmem:[%s7 + $0xd8] sm:$0xff]
        %v2635 = vld [vmem:[%s7 + $0xe0] sm:$0xff]
        %v2636 = vld [vmem:[%s7 + $0xe8] sm:$0xff]
        %v2637 = vld [vmem:[%s7 + $0xf0] sm:$0xff]
        %v2638 = vld [vmem:[%s7 + $0xf8] sm:$0xff]
        %v2639 = vld [vmem:[%s7 + $0x100] sm:$0xff]
        %v2640 = vld [vmem:[%s7 + $0x108] sm:$0xff]
        %v2641 = vld [vmem:[%s7 + $0x110] sm:$0xff]
        %v2642 = vld [vmem:[%s7 + $0x118] sm:$0xff]
        %v2643 = vld [vmem:[%s7 + $0x120] sm:$0xff]
        %v2644 = vld [vmem:[%s7 + $0x128] sm:$0xff]
        %v2645 = vld [vmem:[%s7 + $0x130] sm:$0xff]
        %v2646 = vld [vmem:[%s7 + $0x138] sm:$0xff]
        %v2647 = vld [vmem:[%s7 + $0x140] sm:$0xff]
        %v2648 = vld [vmem:[%s7 + $0x148] sm:$0xff]
        %v2649 = vld [vmem:[%s7 + $0x150] sm:$0xff]
        %v2650 = vld [vmem:[%s7 + $0x158] sm:$0xff]
        %v2651 = vld [vmem:[%s7 + $0x160] sm:$0xff]
        %v2652 = vld [vmem:[%s7 + $0x168] sm:$0xff]
        %v2653 = vld [vmem:[%s7 + $0x170] sm:$0xff]
        %v2654 = vld [vmem:[%s7 + $0x178] sm:$0xff]
        %v2655 = vld [vmem:[#allocation4 + $0x18] sm:$0xff]
        %v2656 = vld [vmem:[#allocation4 + $0x38] sm:$0x3f]
        %v2657 = vpack.c.bf16 %v2656, %v2655
        %s2658 = scalar_lea.vmem %s7, 384
        %v2659 = vld [vmem:[%s2658] sm:$0xff]
        %v2660 = vld [vmem:[%s2658 + $0x8] sm:$0xff]
        %v2661 = vld [vmem:[%s2658 + $0x10] sm:$0xff]
        %v2662 = vld [vmem:[%s2658 + $0x18] sm:$0xff]
        %v2663 = vld [vmem:[%s2658 + $0x20] sm:$0xff]
        %v2664 = vld [vmem:[%s2658 + $0x28] sm:$0xff]
        %v2665 = vld [vmem:[%s2658 + $0x30] sm:$0xff]
        %v2666 = vld [vmem:[%s2658 + $0x38] sm:$0xff]
        %v2667 = vld [vmem:[%s2658 + $0x40] sm:$0xff]
        %v2668 = vld [vmem:[%s2658 + $0x48] sm:$0xff]
        %v2669 = vld [vmem:[%s2658 + $0x50] sm:$0xff]
        %v2670 = vld [vmem:[%s2658 + $0x58] sm:$0xff]
        %v2671 = vld [vmem:[%s2658 + $0x60] sm:$0xff]
        %v2672 = vld [vmem:[%s2658 + $0x68] sm:$0xff]
        %v2673 = vld [vmem:[%s2658 + $0x70] sm:$0xff]
        %v2674 = vld [vmem:[%s2658 + $0x78] sm:$0xff]
        %v2675 = vld [vmem:[%s2658 + $0x80] sm:$0xff]
        %v2676 = vld [vmem:[%s2658 + $0x88] sm:$0xff]
        %v2677 = vld [vmem:[%s2658 + $0x90] sm:$0xff]
        %v2678 = vld [vmem:[%s2658 + $0x98] sm:$0xff]
        %v2679 = vld [vmem:[%s2658 + $0xa0] sm:$0xff]
        %v2680 = vld [vmem:[%s2658 + $0xa8] sm:$0xff]
        %v2681 = vld [vmem:[%s2658 + $0xb0] sm:$0xff]
        %v2682 = vld [vmem:[%s2658 + $0xb8] sm:$0xff]
        %v2683 = vld [vmem:[%s2658 + $0xc0] sm:$0xff]
        %v2684 = vld [vmem:[%s2658 + $0xc8] sm:$0xff]
        %v2685 = vld [vmem:[%s2658 + $0xd0] sm:$0xff]
        %v2686 = vld [vmem:[%s2658 + $0xd8] sm:$0xff]
        %v2687 = vld [vmem:[%s2658 + $0xe0] sm:$0xff]
        %v2688 = vld [vmem:[%s2658 + $0xe8] sm:$0xff]
        %v2689 = vld [vmem:[%s2658 + $0xf0] sm:$0xff]
        %v2690 = vld [vmem:[%s2658 + $0xf8] sm:$0xff]
        %v2691 = vld [vmem:[%s2658 + $0x100] sm:$0xff]
        %v2692 = vld [vmem:[%s2658 + $0x108] sm:$0xff]
        %v2693 = vld [vmem:[%s2658 + $0x110] sm:$0xff]
        %v2694 = vld [vmem:[%s2658 + $0x118] sm:$0xff]
        %v2695 = vld [vmem:[%s2658 + $0x120] sm:$0xff]
        %v2696 = vld [vmem:[%s2658 + $0x128] sm:$0xff]
        %v2697 = vld [vmem:[%s2658 + $0x130] sm:$0xff]
        %v2698 = vld [vmem:[%s2658 + $0x138] sm:$0xff]
        %v2699 = vld [vmem:[%s2658 + $0x140] sm:$0xff]
        %v2700 = vld [vmem:[%s2658 + $0x148] sm:$0xff]
        %v2701 = vld [vmem:[%s2658 + $0x150] sm:$0xff]
        %v2702 = vld [vmem:[%s2658 + $0x158] sm:$0xff]
        %v2703 = vld [vmem:[%s2658 + $0x160] sm:$0xff]
        %v2704 = vld [vmem:[%s2658 + $0x168] sm:$0xff]
        %v2705 = vld [vmem:[%s2658 + $0x170] sm:$0xff]
        %v2706 = vld [vmem:[%s2658 + $0x178] sm:$0xff]
        %2711 = vrot.lane.b32.xlu0 %v2604, 64
        %v2712 = vpop.permute.xlu0 %2711
        %2713 = vrot.lane.b32.xlu0 %v2605, 64
        %v2714 = vpop.permute.xlu0 %2713
        %2715 = vrot.lane.b32.xlu0 %v2606, 64
        %v2716 = vpop.permute.xlu0 %2715
        %2717 = vrot.lane.b32.xlu0 %v2657, 64
        %v2718 = vpop.permute.xlu0 %2717
        %vm2719 = vcmask 523264
        %v2720 = vsel %vm2719, %v2712, %v2714
        %v2721 = vsel %vm2719, %v2714, %v2716
        %v2722 = vsel %vm2719, %v2716, %v2718
        %v2774 = vunpack.c.l.b16 %v2659
        %v2775 = vunpack.c.h.b16 %v2659
        %v2776 = vunpack.c.l.b16 %v2660
        %v2777 = vunpack.c.h.b16 %v2660
        %v2778 = vunpack.c.l.b16 %v2661
        %v2779 = vunpack.c.h.b16 %v2661
        %v2780 = vunpack.c.l.b16 %v2662
        %v2781 = vunpack.c.h.b16 %v2662
        %v2782 = vunpack.c.l.b16 %v2663
        %v2783 = vunpack.c.h.b16 %v2663
        %v2784 = vunpack.c.l.b16 %v2664
        %v2785 = vunpack.c.h.b16 %v2664
        %v2786 = vunpack.c.l.b16 %v2665
        %v2787 = vunpack.c.h.b16 %v2665
        %v2788 = vunpack.c.l.b16 %v2666
        %v2789 = vunpack.c.h.b16 %v2666
        %v2790 = vunpack.c.l.b16 %v2667
        %v2791 = vunpack.c.h.b16 %v2667
        %v2792 = vunpack.c.l.b16 %v2668
        %v2793 = vunpack.c.h.b16 %v2668
        %v2794 = vunpack.c.l.b16 %v2669
        %v2795 = vunpack.c.h.b16 %v2669
        %v2796 = vunpack.c.l.b16 %v2670
        %v2797 = vunpack.c.h.b16 %v2670
        %v2798 = vunpack.c.l.b16 %v2671
        %v2799 = vunpack.c.h.b16 %v2671
        %v2800 = vunpack.c.l.b16 %v2672
        %v2801 = vunpack.c.h.b16 %v2672
        %v2802 = vunpack.c.l.b16 %v2673
        %v2803 = vunpack.c.h.b16 %v2673
        %v2804 = vunpack.c.l.b16 %v2674
        %v2805 = vunpack.c.h.b16 %v2674
        %v2806 = vunpack.c.l.b16 %v2675
        %v2807 = vunpack.c.h.b16 %v2675
        %v2808 = vunpack.c.l.b16 %v2676
        %v2809 = vunpack.c.h.b16 %v2676
        %v2810 = vunpack.c.l.b16 %v2677
        %v2811 = vunpack.c.h.b16 %v2677
        %v2812 = vunpack.c.l.b16 %v2678
        %v2813 = vunpack.c.h.b16 %v2678
        %v2814 = vunpack.c.l.b16 %v2679
        %v2815 = vunpack.c.h.b16 %v2679
        %v2816 = vunpack.c.l.b16 %v2680
        %v2817 = vunpack.c.h.b16 %v2680
        %v2818 = vunpack.c.l.b16 %v2681
        %v2819 = vunpack.c.h.b16 %v2681
        %v2820 = vunpack.c.l.b16 %v2682
        %v2821 = vunpack.c.h.b16 %v2682
        %v2822 = vunpack.c.l.b16 %v2683
        %v2823 = vunpack.c.h.b16 %v2683
        %v2824 = vunpack.c.l.b16 %v2684
        %v2825 = vunpack.c.h.b16 %v2684
        %v2826 = vunpack.c.l.b16 %v2685
        %v2827 = vunpack.c.h.b16 %v2685
        %v2828 = vunpack.c.l.b16 %v2686
        %v2829 = vunpack.c.h.b16 %v2686
        %v2830 = vunpack.c.l.b16 %v2687
        %v2831 = vunpack.c.h.b16 %v2687
        %v2832 = vunpack.c.l.b16 %v2688
        %v2833 = vunpack.c.h.b16 %v2688
        %v2834 = vunpack.c.l.b16 %v2689
        %v2835 = vunpack.c.h.b16 %v2689
        %v2836 = vunpack.c.l.b16 %v2690
        %v2837 = vunpack.c.h.b16 %v2690
        %v2838 = vunpack.c.l.b16 %v2691
        %v2839 = vunpack.c.h.b16 %v2691
        %v2840 = vunpack.c.l.b16 %v2692
        %v2841 = vunpack.c.h.b16 %v2692
        %v2842 = vunpack.c.l.b16 %v2693
        %v2843 = vunpack.c.h.b16 %v2693
        %v2844 = vunpack.c.l.b16 %v2694
        %v2845 = vunpack.c.h.b16 %v2694
        %v2846 = vunpack.c.l.b16 %v2695
        %v2847 = vunpack.c.h.b16 %v2695
        %v2848 = vunpack.c.l.b16 %v2696
        %v2849 = vunpack.c.h.b16 %v2696
        %v2850 = vunpack.c.l.b16 %v2697
        %v2851 = vunpack.c.h.b16 %v2697
        %v2852 = vunpack.c.l.b16 %v2698
        %v2853 = vunpack.c.h.b16 %v2698
        %v2854 = vunpack.c.l.b16 %v2699
        %v2855 = vunpack.c.h.b16 %v2699
        %v2856 = vunpack.c.l.b16 %v2700
        %v2857 = vunpack.c.h.b16 %v2700
        %v2858 = vunpack.c.l.b16 %v2701
        %v2859 = vunpack.c.h.b16 %v2701
        %v2860 = vunpack.c.l.b16 %v2702
        %v2861 = vunpack.c.h.b16 %v2702
        %v2862 = vunpack.c.l.b16 %v2703
        %v2863 = vunpack.c.h.b16 %v2703
        %v2864 = vunpack.c.l.b16 %v2704
        %v2865 = vunpack.c.h.b16 %v2704
        %v2866 = vunpack.c.l.b16 %v2705
        %v2867 = vunpack.c.h.b16 %v2705
        %v2868 = vunpack.c.l.b16 %v2706
        %v2869 = vunpack.c.h.b16 %v2706
        %v2870 = vpack.c.b16 %v2776, %v2774
        %v2871 = vpack.c.b16 %v2777, %v2775
        %v2872 = vpack.c.b16 %v2780, %v2778
        %v2873 = vpack.c.b16 %v2781, %v2779
        %v2874 = vpack.c.b16 %v2784, %v2782
        %v2875 = vpack.c.b16 %v2785, %v2783
        %v2876 = vpack.c.b16 %v2788, %v2786
        %v2877 = vpack.c.b16 %v2789, %v2787
        %v2878 = vpack.c.b16 %v2792, %v2790
        %v2879 = vpack.c.b16 %v2793, %v2791
        %v2880 = vpack.c.b16 %v2796, %v2794
        %v2881 = vpack.c.b16 %v2797, %v2795
        %v2882 = vpack.c.b16 %v2800, %v2798
        %v2883 = vpack.c.b16 %v2801, %v2799
        %v2884 = vpack.c.b16 %v2804, %v2802
        %v2885 = vpack.c.b16 %v2805, %v2803
        %v2886 = vpack.c.b16 %v2808, %v2806
        %v2887 = vpack.c.b16 %v2809, %v2807
        %v2888 = vpack.c.b16 %v2812, %v2810
        %v2889 = vpack.c.b16 %v2813, %v2811
        %v2890 = vpack.c.b16 %v2816, %v2814
        %v2891 = vpack.c.b16 %v2817, %v2815
        %v2892 = vpack.c.b16 %v2820, %v2818
        %v2893 = vpack.c.b16 %v2821, %v2819
        %v2894 = vpack.c.b16 %v2824, %v2822
        %v2895 = vpack.c.b16 %v2825, %v2823
        %v2896 = vpack.c.b16 %v2828, %v2826
        %v2897 = vpack.c.b16 %v2829, %v2827
        %v2898 = vpack.c.b16 %v2832, %v2830
        %v2899 = vpack.c.b16 %v2833, %v2831
        %v2900 = vpack.c.b16 %v2836, %v2834
        %v2901 = vpack.c.b16 %v2837, %v2835
        %v2902 = vpack.c.b16 %v2840, %v2838
        %v2903 = vpack.c.b16 %v2841, %v2839
        %v2904 = vpack.c.b16 %v2844, %v2842
        %v2905 = vpack.c.b16 %v2845, %v2843
        %v2906 = vpack.c.b16 %v2848, %v2846
        %v2907 = vpack.c.b16 %v2849, %v2847
        %v2908 = vpack.c.b16 %v2852, %v2850
        %v2909 = vpack.c.b16 %v2853, %v2851
        %v2910 = vpack.c.b16 %v2856, %v2854
        %v2911 = vpack.c.b16 %v2857, %v2855
        %v2912 = vpack.c.b16 %v2860, %v2858
        %v2913 = vpack.c.b16 %v2861, %v2859
        %v2914 = vpack.c.b16 %v2864, %v2862
        %v2915 = vpack.c.b16 %v2865, %v2863
        %v2916 = vpack.c.b16 %v2868, %v2866
        %v2917 = vpack.c.b16 %v2869, %v2867
        %2966 = vmatprep.subr.bf16.mxu0 %v2885
        %2967 = vmatpush1.bf16.msra.mxu0 %v2884
        %2968 = vmatprep.subr.bf16.mxu0 %v2883
        %2969 = vmatpush1.bf16.msra.mxu0 %v2882
        %2970 = vmatprep.subr.bf16.mxu0 %v2881
        %2971 = vmatpush1.bf16.msra.mxu0 %v2880
        %2972 = vmatprep.subr.bf16.mxu0 %v2879
        %2973 = vmatpush1.bf16.msra.mxu0 %v2878
        %2974 = vmatprep.subr.bf16.mxu0 %v2877
        %2975 = vmatpush1.bf16.msra.mxu0 %v2876
        %2976 = vmatprep.subr.bf16.mxu0 %v2875
        %2977 = vmatpush1.bf16.msra.mxu0 %v2874
        %2978 = vmatprep.subr.bf16.mxu0 %v2873
        %2979 = vmatpush1.bf16.msra.mxu0 %v2872
        %2980 = vmatprep.subr.bf16.mxu0 %v2871
        %2981 = vmatpush1.bf16.msra.mxu0 %v2870
        %2982 = vmatprep.subr.bf16.mxu0 %v2901
        %2983 = vmatpush2.bf16.msra.mxu0 %v2900
        %2984 = vmatprep.subr.bf16.mxu0 %v2899
        %2985 = vmatpush2.bf16.msra.mxu0 %v2898
        %2986 = vmatprep.subr.bf16.mxu0 %v2897
        %2987 = vmatpush2.bf16.msra.mxu0 %v2896
        %2988 = vmatprep.subr.bf16.mxu0 %v2895
        %2989 = vmatpush2.bf16.msra.mxu0 %v2894
        %2990 = vmatprep.subr.bf16.mxu0 %v2893
        %2991 = vmatpush2.bf16.msra.mxu0 %v2892
        %2992 = vmatprep.subr.bf16.mxu0 %v2891
        %2993 = vmatpush2.bf16.msra.mxu0 %v2890
        %2994 = vmatprep.subr.bf16.mxu0 %v2889
        %2995 = vmatpush2.bf16.msra.mxu0 %v2888
        %2996 = vmatprep.subr.bf16.mxu0 %v2887
        %2997 = vmatpush2.bf16.msra.mxu0 %v2886
        %2998 = vmatprep.mubr.bf16.mxu0 %v2721
        %2999 = vmatmul.mubr.bf16.gmra.mxu0 %v2720
        %v3000 = vpop.f32.mrf.mxu0
        %v3001 = vadd.f32 0.0, %v3000
        %v3002 = vpop.f32.mrf.mxu0
        %v3003 = vadd.f32 0.0, %v3002
        %v3004 = vpop.f32.mrf.mxu0
        %v3005 = vadd.f32 0.0, %v3004
        %v3006 = vpop.f32.mrf.mxu0
        %v3007 = vadd.f32 0.0, %v3006
        %3008 = vdwg.mxu0
        %3009 = vmatprep.subr.bf16.mxu0 %v2917
        %3010 = vmatpush1.bf16.msra.mxu0 %v2916
        %3011 = vmatprep.subr.bf16.mxu0 %v2915
        %3012 = vmatpush1.bf16.msra.mxu0 %v2914
        %3013 = vmatprep.subr.bf16.mxu0 %v2913
        %3014 = vmatpush1.bf16.msra.mxu0 %v2912
        %3015 = vmatprep.subr.bf16.mxu0 %v2911
        %3016 = vmatpush1.bf16.msra.mxu0 %v2910
        %3017 = vmatprep.subr.bf16.mxu0 %v2909
        %3018 = vmatpush1.bf16.msra.mxu0 %v2908
        %3019 = vmatprep.subr.bf16.mxu0 %v2907
        %3020 = vmatpush1.bf16.msra.mxu0 %v2906
        %3021 = vmatprep.subr.bf16.mxu0 %v2905
        %3022 = vmatpush1.bf16.msra.mxu0 %v2904
        %3023 = vmatprep.subr.bf16.mxu0 %v2903
        %3024 = vmatpush1.bf16.msra.mxu0 %v2902
        %3025 = vmatprep.subr.bf16.mxu0 0
        %3026 = vmatpush2.bf16.msra.mxu0 0
        %3027 = vmatprep.subr.bf16.mxu0 0
        %3028 = vmatpush2.bf16.msra.mxu0 0
        %3029 = vmatprep.subr.bf16.mxu0 0
        %3030 = vmatpush2.bf16.msra.mxu0 0
        %3031 = vmatprep.subr.bf16.mxu0 0
        %3032 = vmatpush2.bf16.msra.mxu0 0
        %3033 = vmatprep.subr.bf16.mxu0 0
        %3034 = vmatpush2.bf16.msra.mxu0 0
        %3035 = vmatprep.subr.bf16.mxu0 0
        %3036 = vmatpush2.bf16.msra.mxu0 0
        %3037 = vmatprep.subr.bf16.mxu0 0
        %3038 = vmatpush2.bf16.msra.mxu0 0
        %3039 = vmatprep.subr.bf16.mxu0 0
        %3040 = vmatpush2.bf16.msra.mxu0 0
        %3041 = vmatprep.mubr.bf16.mxu0 0
        %3042 = vmatmul.mubr.bf16.gmra.mxu0 %v2722
        %v3043 = vpop.f32.mrf.mxu0
        %v3044 = vadd.f32 %v3001, %v3043
        %v3045 = vpop.f32.mrf.mxu0
        %v3046 = vadd.f32 %v3003, %v3045
        %v3047 = vpop.f32.mrf.mxu0
        %v3048 = vadd.f32 %v3005, %v3047
        %v3049 = vpop.f32.mrf.mxu0
        %v3050 = vadd.f32 %v3007, %v3049
        %3051 = vdwg.mxu0
        %v3100 = vunpack.c.l.b16 %v2607
        %v3101 = vunpack.c.h.b16 %v2607
        %v3102 = vunpack.c.l.b16 %v2608
        %v3103 = vunpack.c.h.b16 %v2608
        %v3104 = vunpack.c.l.b16 %v2609
        %v3105 = vunpack.c.h.b16 %v2609
        %v3106 = vunpack.c.l.b16 %v2610
        %v3107 = vunpack.c.h.b16 %v2610
        %v3108 = vunpack.c.l.b16 %v2611
        %v3109 = vunpack.c.h.b16 %v2611
        %v3110 = vunpack.c.l.b16 %v2612
        %v3111 = vunpack.c.h.b16 %v2612
        %v3112 = vunpack.c.l.b16 %v2613
        %v3113 = vunpack.c.h.b16 %v2613
        %v3114 = vunpack.c.l.b16 %v2614
        %v3115 = vunpack.c.h.b16 %v2614
        %v3116 = vunpack.c.l.b16 %v2615
        %v3117 = vunpack.c.h.b16 %v2615
        %v3118 = vunpack.c.l.b16 %v2616
        %v3119 = vunpack.c.h.b16 %v2616
        %v3120 = vunpack.c.l.b16 %v2617
        %v3121 = vunpack.c.h.b16 %v2617
        %v3122 = vunpack.c.l.b16 %v2618
        %v3123 = vunpack.c.h.b16 %v2618
        %v3124 = vunpack.c.l.b16 %v2619
        %v3125 = vunpack.c.h.b16 %v2619
        %v3126 = vunpack.c.l.b16 %v2620
        %v3127 = vunpack.c.h.b16 %v2620
        %v3128 = vunpack.c.l.b16 %v2621
        %v3129 = vunpack.c.h.b16 %v2621
        %v3130 = vunpack.c.l.b16 %v2622
        %v3131 = vunpack.c.h.b16 %v2622
        %v3132 = vunpack.c.l.b16 %v2623
        %v3133 = vunpack.c.h.b16 %v2623
        %v3134 = vunpack.c.l.b16 %v2624
        %v3135 = vunpack.c.h.b16 %v2624
        %v3136 = vunpack.c.l.b16 %v2625
        %v3137 = vunpack.c.h.b16 %v2625
        %v3138 = vunpack.c.l.b16 %v2626
        %v3139 = vunpack.c.h.b16 %v2626
        %v3140 = vunpack.c.l.b16 %v2627
        %v3141 = vunpack.c.h.b16 %v2627
        %v3142 = vunpack.c.l.b16 %v2628
        %v3143 = vunpack.c.h.b16 %v2628
        %v3144 = vunpack.c.l.b16 %v2629
        %v3145 = vunpack.c.h.b16 %v2629
        %v3146 = vunpack.c.l.b16 %v2630
        %v3147 = vunpack.c.h.b16 %v2630
        %v3148 = vunpack.c.l.b16 %v2631
        %v3149 = vunpack.c.h.b16 %v2631
        %v3150 = vunpack.c.l.b16 %v2632
        %v3151 = vunpack.c.h.b16 %v2632
        %v3152 = vunpack.c.l.b16 %v2633
        %v3153 = vunpack.c.h.b16 %v2633
        %v3154 = vunpack.c.l.b16 %v2634
        %v3155 = vunpack.c.h.b16 %v2634
        %v3156 = vunpack.c.l.b16 %v2635
        %v3157 = vunpack.c.h.b16 %v2635
        %v3158 = vunpack.c.l.b16 %v2636
        %v3159 = vunpack.c.h.b16 %v2636
        %v3160 = vunpack.c.l.b16 %v2637
        %v3161 = vunpack.c.h.b16 %v2637
        %v3162 = vunpack.c.l.b16 %v2638
        %v3163 = vunpack.c.h.b16 %v2638
        %v3164 = vunpack.c.l.b16 %v2639
        %v3165 = vunpack.c.h.b16 %v2639
        %v3166 = vunpack.c.l.b16 %v2640
        %v3167 = vunpack.c.h.b16 %v2640
        %v3168 = vunpack.c.l.b16 %v2641
        %v3169 = vunpack.c.h.b16 %v2641
        %v3170 = vunpack.c.l.b16 %v2642
        %v3171 = vunpack.c.h.b16 %v2642
        %v3172 = vunpack.c.l.b16 %v2643
        %v3173 = vunpack.c.h.b16 %v2643
        %v3174 = vunpack.c.l.b16 %v2644
        %v3175 = vunpack.c.h.b16 %v2644
        %v3176 = vunpack.c.l.b16 %v2645
        %v3177 = vunpack.c.h.b16 %v2645
        %v3178 = vunpack.c.l.b16 %v2646
        %v3179 = vunpack.c.h.b16 %v2646
        %v3180 = vunpack.c.l.b16 %v2647
        %v3181 = vunpack.c.h.b16 %v2647
        %v3182 = vunpack.c.l.b16 %v2648
        %v3183 = vunpack.c.h.b16 %v2648
        %v3184 = vunpack.c.l.b16 %v2649
        %v3185 = vunpack.c.h.b16 %v2649
        %v3186 = vunpack.c.l.b16 %v2650
        %v3187 = vunpack.c.h.b16 %v2650
        %v3188 = vunpack.c.l.b16 %v2651
        %v3189 = vunpack.c.h.b16 %v2651
        %v3190 = vunpack.c.l.b16 %v2652
        %v3191 = vunpack.c.h.b16 %v2652
        %v3192 = vunpack.c.l.b16 %v2653
        %v3193 = vunpack.c.h.b16 %v2653
        %v3194 = vunpack.c.l.b16 %v2654
        %v3195 = vunpack.c.h.b16 %v2654
        %v3196 = vpack.c.b16 %v3102, %v3100
        %v3197 = vpack.c.b16 %v3103, %v3101
        %v3198 = vpack.c.b16 %v3106, %v3104
        %v3199 = vpack.c.b16 %v3107, %v3105
        %v3200 = vpack.c.b16 %v3110, %v3108
        %v3201 = vpack.c.b16 %v3111, %v3109
        %v3202 = vpack.c.b16 %v3114, %v3112
        %v3203 = vpack.c.b16 %v3115, %v3113
        %v3204 = vpack.c.b16 %v3118, %v3116
        %v3205 = vpack.c.b16 %v3119, %v3117
        %v3206 = vpack.c.b16 %v3122, %v3120
        %v3207 = vpack.c.b16 %v3123, %v3121
        %v3208 = vpack.c.b16 %v3126, %v3124
        %v3209 = vpack.c.b16 %v3127, %v3125
        %v3210 = vpack.c.b16 %v3130, %v3128
        %v3211 = vpack.c.b16 %v3131, %v3129
        %v3212 = vpack.c.b16 %v3134, %v3132
        %v3213 = vpack.c.b16 %v3135, %v3133
        %v3214 = vpack.c.b16 %v3138, %v3136
        %v3215 = vpack.c.b16 %v3139, %v3137
        %v3216 = vpack.c.b16 %v3142, %v3140
        %v3217 = vpack.c.b16 %v3143, %v3141
        %v3218 = vpack.c.b16 %v3146, %v3144
        %v3219 = vpack.c.b16 %v3147, %v3145
        %v3220 = vpack.c.b16 %v3150, %v3148
        %v3221 = vpack.c.b16 %v3151, %v3149
        %v3222 = vpack.c.b16 %v3154, %v3152
        %v3223 = vpack.c.b16 %v3155, %v3153
        %v3224 = vpack.c.b16 %v3158, %v3156
        %v3225 = vpack.c.b16 %v3159, %v3157
        %v3226 = vpack.c.b16 %v3162, %v3160
        %v3227 = vpack.c.b16 %v3163, %v3161
        %v3228 = vpack.c.b16 %v3166, %v3164
        %v3229 = vpack.c.b16 %v3167, %v3165
        %v3230 = vpack.c.b16 %v3170, %v3168
        %v3231 = vpack.c.b16 %v3171, %v3169
        %v3232 = vpack.c.b16 %v3174, %v3172
        %v3233 = vpack.c.b16 %v3175, %v3173
        %v3234 = vpack.c.b16 %v3178, %v3176
        %v3235 = vpack.c.b16 %v3179, %v3177
        %v3236 = vpack.c.b16 %v3182, %v3180
        %v3237 = vpack.c.b16 %v3183, %v3181
        %v3238 = vpack.c.b16 %v3186, %v3184
        %v3239 = vpack.c.b16 %v3187, %v3185
        %v3240 = vpack.c.b16 %v3190, %v3188
        %v3241 = vpack.c.b16 %v3191, %v3189
        %v3242 = vpack.c.b16 %v3194, %v3192
        %v3243 = vpack.c.b16 %v3195, %v3193
        %3292 = vmatprep.subr.bf16.mxu0 %v3211
        %3293 = vmatpush1.bf16.msra.mxu0 %v3210
        %3294 = vmatprep.subr.bf16.mxu0 %v3209
        %3295 = vmatpush1.bf16.msra.mxu0 %v3208
        %3296 = vmatprep.subr.bf16.mxu0 %v3207
        %3297 = vmatpush1.bf16.msra.mxu0 %v3206
        %3298 = vmatprep.subr.bf16.mxu0 %v3205
        %3299 = vmatpush1.bf16.msra.mxu0 %v3204
        %3300 = vmatprep.subr.bf16.mxu0 %v3203
        %3301 = vmatpush1.bf16.msra.mxu0 %v3202
        %3302 = vmatprep.subr.bf16.mxu0 %v3201
        %3303 = vmatpush1.bf16.msra.mxu0 %v3200
        %3304 = vmatprep.subr.bf16.mxu0 %v3199
        %3305 = vmatpush1.bf16.msra.mxu0 %v3198
        %3306 = vmatprep.subr.bf16.mxu0 %v3197
        %3307 = vmatpush1.bf16.msra.mxu0 %v3196
        %3308 = vmatprep.subr.bf16.mxu0 %v3227
        %3309 = vmatpush2.bf16.msra.mxu0 %v3226
        %3310 = vmatprep.subr.bf16.mxu0 %v3225
        %3311 = vmatpush2.bf16.msra.mxu0 %v3224
        %3312 = vmatprep.subr.bf16.mxu0 %v3223
        %3313 = vmatpush2.bf16.msra.mxu0 %v3222
        %3314 = vmatprep.subr.bf16.mxu0 %v3221
        %3315 = vmatpush2.bf16.msra.mxu0 %v3220
        %3316 = vmatprep.subr.bf16.mxu0 %v3219
        %3317 = vmatpush2.bf16.msra.mxu0 %v3218
        %3318 = vmatprep.subr.bf16.mxu0 %v3217
        %3319 = vmatpush2.bf16.msra.mxu0 %v3216
        %3320 = vmatprep.subr.bf16.mxu0 %v3215
        %3321 = vmatpush2.bf16.msra.mxu0 %v3214
        %3322 = vmatprep.subr.bf16.mxu0 %v3213
        %3323 = vmatpush2.bf16.msra.mxu0 %v3212
        %3324 = vmatprep.mubr.bf16.mxu0 %v2605
        %3325 = vmatmul.mubr.bf16.gmra.mxu0 %v2604
        %v3326 = vpop.f32.mrf.mxu0
        %v3327 = vadd.f32 %v3044, %v3326
        %v3328 = vpop.f32.mrf.mxu0
        %v3329 = vadd.f32 %v3046, %v3328
        %v3330 = vpop.f32.mrf.mxu0
        %v3331 = vadd.f32 %v3048, %v3330
        %v3332 = vpop.f32.mrf.mxu0
        %v3333 = vadd.f32 %v3050, %v3332
        %3334 = vdwg.mxu0
        %3335 = vmatprep.subr.bf16.mxu0 %v3243
        %3336 = vmatpush1.bf16.msra.mxu0 %v3242
        %3337 = vmatprep.subr.bf16.mxu0 %v3241
        %3338 = vmatpush1.bf16.msra.mxu0 %v3240
        %3339 = vmatprep.subr.bf16.mxu0 %v3239
        %3340 = vmatpush1.bf16.msra.mxu0 %v3238
        %3341 = vmatprep.subr.bf16.mxu0 %v3237
        %3342 = vmatpush1.bf16.msra.mxu0 %v3236
        %3343 = vmatprep.subr.bf16.mxu0 %v3235
        %3344 = vmatpush1.bf16.msra.mxu0 %v3234
        %3345 = vmatprep.subr.bf16.mxu0 %v3233
        %3346 = vmatpush1.bf16.msra.mxu0 %v3232
        %3347 = vmatprep.subr.bf16.mxu0 %v3231
        %3348 = vmatpush1.bf16.msra.mxu0 %v3230
        %3349 = vmatprep.subr.bf16.mxu0 %v3229
        %3350 = vmatpush1.bf16.msra.mxu0 %v3228
        %3351 = vmatprep.subr.bf16.mxu0 0
        %3352 = vmatpush2.bf16.msra.mxu0 0
        %3353 = vmatprep.subr.bf16.mxu0 0
        %3354 = vmatpush2.bf16.msra.mxu0 0
        %3355 = vmatprep.subr.bf16.mxu0 0
        %3356 = vmatpush2.bf16.msra.mxu0 0
        %3357 = vmatprep.subr.bf16.mxu0 0
        %3358 = vmatpush2.bf16.msra.mxu0 0
        %3359 = vmatprep.subr.bf16.mxu0 0
        %3360 = vmatpush2.bf16.msra.mxu0 0
        %3361 = vmatprep.subr.bf16.mxu0 0
        %3362 = vmatpush2.bf16.msra.mxu0 0
        %3363 = vmatprep.subr.bf16.mxu0 0
        %3364 = vmatpush2.bf16.msra.mxu0 0
        %3365 = vmatprep.subr.bf16.mxu0 0
        %3366 = vmatpush2.bf16.msra.mxu0 0
        %3367 = vmatprep.mubr.bf16.mxu0 0
        %3368 = vmatmul.mubr.bf16.gmra.mxu0 %v2606
        %v3369 = vpop.f32.mrf.mxu0
        %v3370 = vadd.f32 %v3327, %v3369
        %v3371 = vpop.f32.mrf.mxu0
        %v3372 = vadd.f32 %v3329, %v3371
        %v3373 = vpop.f32.mrf.mxu0
        %v3374 = vadd.f32 %v3331, %v3373
        %v3375 = vpop.f32.mrf.mxu0
        %v3376 = vadd.f32 %v3333, %v3375
        %3377 = vdwg.mxu0
        %v3378 = vld [vmem:[#allocation4] sm:$0xfe]
        %v3379 = vld [vmem:[#allocation4 + $0x8] sm:$0xfe]
        %v3380 = vld [vmem:[#allocation4 + $0x10] sm:$0xfe]
        %v3381 = vld [vmem:[#allocation4 + $0x20] sm:$0x7f]
        %v3382 = vld [vmem:[#allocation4 + $0x28] sm:$0x7f]
        %v3383 = vld [vmem:[#allocation4 + $0x30] sm:$0x7f]
        %v3384 = vpack.c.bf16 %v3381, %v3378
        %v3385 = vpack.c.bf16 %v3382, %v3379
        %v3386 = vpack.c.bf16 %v3383, %v3380
        %s3387 = scalar_lea.vmem %s7, 768
        %v3388 = vld [vmem:[%s3387] sm:$0xff]
        %v3389 = vld [vmem:[%s3387 + $0x8] sm:$0xff]
        %v3390 = vld [vmem:[%s3387 + $0x10] sm:$0xff]
        %v3391 = vld [vmem:[%s3387 + $0x18] sm:$0xff]
        %v3392 = vld [vmem:[%s3387 + $0x20] sm:$0xff]
        %v3393 = vld [vmem:[%s3387 + $0x28] sm:$0xff]
        %v3394 = vld [vmem:[%s3387 + $0x30] sm:$0xff]
        %v3395 = vld [vmem:[%s3387 + $0x38] sm:$0xff]
        %v3396 = vld [vmem:[%s3387 + $0x40] sm:$0xff]
        %v3397 = vld [vmem:[%s3387 + $0x48] sm:$0xff]
        %v3398 = vld [vmem:[%s3387 + $0x50] sm:$0xff]
        %v3399 = vld [vmem:[%s3387 + $0x58] sm:$0xff]
        %v3400 = vld [vmem:[%s3387 + $0x60] sm:$0xff]
        %v3401 = vld [vmem:[%s3387 + $0x68] sm:$0xff]
        %v3402 = vld [vmem:[%s3387 + $0x70] sm:$0xff]
        %v3403 = vld [vmem:[%s3387 + $0x78] sm:$0xff]
        %v3404 = vld [vmem:[%s3387 + $0x80] sm:$0xff]
        %v3405 = vld [vmem:[%s3387 + $0x88] sm:$0xff]
        %v3406 = vld [vmem:[%s3387 + $0x90] sm:$0xff]
        %v3407 = vld [vmem:[%s3387 + $0x98] sm:$0xff]
        %v3408 = vld [vmem:[%s3387 + $0xa0] sm:$0xff]
        %v3409 = vld [vmem:[%s3387 + $0xa8] sm:$0xff]
        %v3410 = vld [vmem:[%s3387 + $0xb0] sm:$0xff]
        %v3411 = vld [vmem:[%s3387 + $0xb8] sm:$0xff]
        %v3412 = vld [vmem:[%s3387 + $0xc0] sm:$0xff]
        %v3413 = vld [vmem:[%s3387 + $0xc8] sm:$0xff]
        %v3414 = vld [vmem:[%s3387 + $0xd0] sm:$0xff]
        %v3415 = vld [vmem:[%s3387 + $0xd8] sm:$0xff]
        %v3416 = vld [vmem:[%s3387 + $0xe0] sm:$0xff]
        %v3417 = vld [vmem:[%s3387 + $0xe8] sm:$0xff]
        %v3418 = vld [vmem:[%s3387 + $0xf0] sm:$0xff]
        %v3419 = vld [vmem:[%s3387 + $0xf8] sm:$0xff]
        %v3420 = vld [vmem:[%s3387 + $0x100] sm:$0xff]
        %v3421 = vld [vmem:[%s3387 + $0x108] sm:$0xff]
        %v3422 = vld [vmem:[%s3387 + $0x110] sm:$0xff]
        %v3423 = vld [vmem:[%s3387 + $0x118] sm:$0xff]
        %v3424 = vld [vmem:[%s3387 + $0x120] sm:$0xff]
        %v3425 = vld [vmem:[%s3387 + $0x128] sm:$0xff]
        %v3426 = vld [vmem:[%s3387 + $0x130] sm:$0xff]
        %v3427 = vld [vmem:[%s3387 + $0x138] sm:$0xff]
        %v3428 = vld [vmem:[%s3387 + $0x140] sm:$0xff]
        %v3429 = vld [vmem:[%s3387 + $0x148] sm:$0xff]
        %v3430 = vld [vmem:[%s3387 + $0x150] sm:$0xff]
        %v3431 = vld [vmem:[%s3387 + $0x158] sm:$0xff]
        %v3432 = vld [vmem:[%s3387 + $0x160] sm:$0xff]
        %v3433 = vld [vmem:[%s3387 + $0x168] sm:$0xff]
        %v3434 = vld [vmem:[%s3387 + $0x170] sm:$0xff]
        %v3435 = vld [vmem:[%s3387 + $0x178] sm:$0xff]
        %v3437 = vshrl.u32 %v3384, 16
        %v3439 = vshll.u32 %v3384, 16
        %v3441 = vrot.slane %v3439, 1
        %v3442 = vor.u32 %v3437, %v3441
        %v3444 = vshrl.u32 %v3385, 16
        %v3446 = vshll.u32 %v3385, 16
        %v3448 = vrot.slane %v3446, 1
        %v3449 = vor.u32 %v3444, %v3448
        %v3451 = vshrl.u32 %v3386, 16
        %v3453 = vshll.u32 %v3386, 16
        %v3455 = vrot.slane %v3453, 1
        %v3456 = vor.u32 %v3451, %v3455
        %v3508 = vunpack.c.l.b16 %v3388
        %v3509 = vunpack.c.h.b16 %v3388
        %v3510 = vunpack.c.l.b16 %v3389
        %v3511 = vunpack.c.h.b16 %v3389
        %v3512 = vunpack.c.l.b16 %v3390
        %v3513 = vunpack.c.h.b16 %v3390
        %v3514 = vunpack.c.l.b16 %v3391
        %v3515 = vunpack.c.h.b16 %v3391
        %v3516 = vunpack.c.l.b16 %v3392
        %v3517 = vunpack.c.h.b16 %v3392
        %v3518 = vunpack.c.l.b16 %v3393
        %v3519 = vunpack.c.h.b16 %v3393
        %v3520 = vunpack.c.l.b16 %v3394
        %v3521 = vunpack.c.h.b16 %v3394
        %v3522 = vunpack.c.l.b16 %v3395
        %v3523 = vunpack.c.h.b16 %v3395
        %v3524 = vunpack.c.l.b16 %v3396
        %v3525 = vunpack.c.h.b16 %v3396
        %v3526 = vunpack.c.l.b16 %v3397
        %v3527 = vunpack.c.h.b16 %v3397
        %v3528 = vunpack.c.l.b16 %v3398
        %v3529 = vunpack.c.h.b16 %v3398
        %v3530 = vunpack.c.l.b16 %v3399
        %v3531 = vunpack.c.h.b16 %v3399
        %v3532 = vunpack.c.l.b16 %v3400
        %v3533 = vunpack.c.h.b16 %v3400
        %v3534 = vunpack.c.l.b16 %v3401
        %v3535 = vunpack.c.h.b16 %v3401
        %v3536 = vunpack.c.l.b16 %v3402
        %v3537 = vunpack.c.h.b16 %v3402
        %v3538 = vunpack.c.l.b16 %v3403
        %v3539 = vunpack.c.h.b16 %v3403
        %v3540 = vunpack.c.l.b16 %v3404
        %v3541 = vunpack.c.h.b16 %v3404
        %v3542 = vunpack.c.l.b16 %v3405
        %v3543 = vunpack.c.h.b16 %v3405
        %v3544 = vunpack.c.l.b16 %v3406
        %v3545 = vunpack.c.h.b16 %v3406
        %v3546 = vunpack.c.l.b16 %v3407
        %v3547 = vunpack.c.h.b16 %v3407
        %v3548 = vunpack.c.l.b16 %v3408
        %v3549 = vunpack.c.h.b16 %v3408
        %v3550 = vunpack.c.l.b16 %v3409
        %v3551 = vunpack.c.h.b16 %v3409
        %v3552 = vunpack.c.l.b16 %v3410
        %v3553 = vunpack.c.h.b16 %v3410
        %v3554 = vunpack.c.l.b16 %v3411
        %v3555 = vunpack.c.h.b16 %v3411
        %v3556 = vunpack.c.l.b16 %v3412
        %v3557 = vunpack.c.h.b16 %v3412
        %v3558 = vunpack.c.l.b16 %v3413
        %v3559 = vunpack.c.h.b16 %v3413
        %v3560 = vunpack.c.l.b16 %v3414
        %v3561 = vunpack.c.h.b16 %v3414
        %v3562 = vunpack.c.l.b16 %v3415
        %v3563 = vunpack.c.h.b16 %v3415
        %v3564 = vunpack.c.l.b16 %v3416
        %v3565 = vunpack.c.h.b16 %v3416
        %v3566 = vunpack.c.l.b16 %v3417
        %v3567 = vunpack.c.h.b16 %v3417
        %v3568 = vunpack.c.l.b16 %v3418
        %v3569 = vunpack.c.h.b16 %v3418
        %v3570 = vunpack.c.l.b16 %v3419
        %v3571 = vunpack.c.h.b16 %v3419
        %v3572 = vunpack.c.l.b16 %v3420
        %v3573 = vunpack.c.h.b16 %v3420
        %v3574 = vunpack.c.l.b16 %v3421
        %v3575 = vunpack.c.h.b16 %v3421
        %v3576 = vunpack.c.l.b16 %v3422
        %v3577 = vunpack.c.h.b16 %v3422
        %v3578 = vunpack.c.l.b16 %v3423
        %v3579 = vunpack.c.h.b16 %v3423
        %v3580 = vunpack.c.l.b16 %v3424
        %v3581 = vunpack.c.h.b16 %v3424
        %v3582 = vunpack.c.l.b16 %v3425
        %v3583 = vunpack.c.h.b16 %v3425
        %v3584 = vunpack.c.l.b16 %v3426
        %v3585 = vunpack.c.h.b16 %v3426
        %v3586 = vunpack.c.l.b16 %v3427
        %v3587 = vunpack.c.h.b16 %v3427
        %v3588 = vunpack.c.l.b16 %v3428
        %v3589 = vunpack.c.h.b16 %v3428
        %v3590 = vunpack.c.l.b16 %v3429
        %v3591 = vunpack.c.h.b16 %v3429
        %v3592 = vunpack.c.l.b16 %v3430
        %v3593 = vunpack.c.h.b16 %v3430
        %v3594 = vunpack.c.l.b16 %v3431
        %v3595 = vunpack.c.h.b16 %v3431
        %v3596 = vunpack.c.l.b16 %v3432
        %v3597 = vunpack.c.h.b16 %v3432
        %v3598 = vunpack.c.l.b16 %v3433
        %v3599 = vunpack.c.h.b16 %v3433
        %v3600 = vunpack.c.l.b16 %v3434
        %v3601 = vunpack.c.h.b16 %v3434
        %v3602 = vunpack.c.l.b16 %v3435
        %v3603 = vunpack.c.h.b16 %v3435
        %v3604 = vpack.c.b16 %v3510, %v3508
        %v3605 = vpack.c.b16 %v3511, %v3509
        %v3606 = vpack.c.b16 %v3514, %v3512
        %v3607 = vpack.c.b16 %v3515, %v3513
        %v3608 = vpack.c.b16 %v3518, %v3516
        %v3609 = vpack.c.b16 %v3519, %v3517
        %v3610 = vpack.c.b16 %v3522, %v3520
        %v3611 = vpack.c.b16 %v3523, %v3521
        %v3612 = vpack.c.b16 %v3526, %v3524
        %v3613 = vpack.c.b16 %v3527, %v3525
        %v3614 = vpack.c.b16 %v3530, %v3528
        %v3615 = vpack.c.b16 %v3531, %v3529
        %v3616 = vpack.c.b16 %v3534, %v3532
        %v3617 = vpack.c.b16 %v3535, %v3533
        %v3618 = vpack.c.b16 %v3538, %v3536
        %v3619 = vpack.c.b16 %v3539, %v3537
        %v3620 = vpack.c.b16 %v3542, %v3540
        %v3621 = vpack.c.b16 %v3543, %v3541
        %v3622 = vpack.c.b16 %v3546, %v3544
        %v3623 = vpack.c.b16 %v3547, %v3545
        %v3624 = vpack.c.b16 %v3550, %v3548
        %v3625 = vpack.c.b16 %v3551, %v3549
        %v3626 = vpack.c.b16 %v3554, %v3552
        %v3627 = vpack.c.b16 %v3555, %v3553
        %v3628 = vpack.c.b16 %v3558, %v3556
        %v3629 = vpack.c.b16 %v3559, %v3557
        %v3630 = vpack.c.b16 %v3562, %v3560
        %v3631 = vpack.c.b16 %v3563, %v3561
        %v3632 = vpack.c.b16 %v3566, %v3564
        %v3633 = vpack.c.b16 %v3567, %v3565
        %v3634 = vpack.c.b16 %v3570, %v3568
        %v3635 = vpack.c.b16 %v3571, %v3569
        %v3636 = vpack.c.b16 %v3574, %v3572
        %v3637 = vpack.c.b16 %v3575, %v3573
        %v3638 = vpack.c.b16 %v3578, %v3576
        %v3639 = vpack.c.b16 %v3579, %v3577
        %v3640 = vpack.c.b16 %v3582, %v3580
        %v3641 = vpack.c.b16 %v3583, %v3581
        %v3642 = vpack.c.b16 %v3586, %v3584
        %v3643 = vpack.c.b16 %v3587, %v3585
        %v3644 = vpack.c.b16 %v3590, %v3588
        %v3645 = vpack.c.b16 %v3591, %v3589
        %v3646 = vpack.c.b16 %v3594, %v3592
        %v3647 = vpack.c.b16 %v3595, %v3593
        %v3648 = vpack.c.b16 %v3598, %v3596
        %v3649 = vpack.c.b16 %v3599, %v3597
        %v3650 = vpack.c.b16 %v3602, %v3600
        %v3651 = vpack.c.b16 %v3603, %v3601
        %3700 = vmatprep.subr.bf16.mxu0 %v3619
        %3701 = vmatpush1.bf16.msra.mxu0 %v3618
        %3702 = vmatprep.subr.bf16.mxu0 %v3617
        %3703 = vmatpush1.bf16.msra.mxu0 %v3616
        %3704 = vmatprep.subr.bf16.mxu0 %v3615
        %3705 = vmatpush1.bf16.msra.mxu0 %v3614
        %3706 = vmatprep.subr.bf16.mxu0 %v3613
        %3707 = vmatpush1.bf16.msra.mxu0 %v3612
        %3708 = vmatprep.subr.bf16.mxu0 %v3611
        %3709 = vmatpush1.bf16.msra.mxu0 %v3610
        %3710 = vmatprep.subr.bf16.mxu0 %v3609
        %3711 = vmatpush1.bf16.msra.mxu0 %v3608
        %3712 = vmatprep.subr.bf16.mxu0 %v3607
        %3713 = vmatpush1.bf16.msra.mxu0 %v3606
        %3714 = vmatprep.subr.bf16.mxu0 %v3605
        %3715 = vmatpush1.bf16.msra.mxu0 %v3604
        %3716 = vmatprep.subr.bf16.mxu0 %v3635
        %3717 = vmatpush2.bf16.msra.mxu0 %v3634
        %3718 = vmatprep.subr.bf16.mxu0 %v3633
        %3719 = vmatpush2.bf16.msra.mxu0 %v3632
        %3720 = vmatprep.subr.bf16.mxu0 %v3631
        %3721 = vmatpush2.bf16.msra.mxu0 %v3630
        %3722 = vmatprep.subr.bf16.mxu0 %v3629
        %3723 = vmatpush2.bf16.msra.mxu0 %v3628
        %3724 = vmatprep.subr.bf16.mxu0 %v3627
        %3725 = vmatpush2.bf16.msra.mxu0 %v3626
        %3726 = vmatprep.subr.bf16.mxu0 %v3625
        %3727 = vmatpush2.bf16.msra.mxu0 %v3624
        %3728 = vmatprep.subr.bf16.mxu0 %v3623
        %3729 = vmatpush2.bf16.msra.mxu0 %v3622
        %3730 = vmatprep.subr.bf16.mxu0 %v3621
        %3731 = vmatpush2.bf16.msra.mxu0 %v3620
        %3732 = vmatprep.mubr.bf16.mxu0 %v3449
        %3733 = vmatmul.mubr.bf16.gmra.mxu0 %v3442
        %v3734 = vpop.f32.mrf.mxu0
        %v3735 = vadd.f32 0.0, %v3734
        %v3736 = vpop.f32.mrf.mxu0
        %v3737 = vadd.f32 0.0, %v3736
        %v3738 = vpop.f32.mrf.mxu0
        %v3739 = vadd.f32 0.0, %v3738
        %v3740 = vpop.f32.mrf.mxu0
        %v3741 = vadd.f32 0.0, %v3740
        %3742 = vdwg.mxu0
        %3743 = vmatprep.subr.bf16.mxu0 %v3651
        %3744 = vmatpush1.bf16.msra.mxu0 %v3650
        %3745 = vmatprep.subr.bf16.mxu0 %v3649
        %3746 = vmatpush1.bf16.msra.mxu0 %v3648
        %3747 = vmatprep.subr.bf16.mxu0 %v3647
        %3748 = vmatpush1.bf16.msra.mxu0 %v3646
        %3749 = vmatprep.subr.bf16.mxu0 %v3645
        %3750 = vmatpush1.bf16.msra.mxu0 %v3644
        %3751 = vmatprep.subr.bf16.mxu0 %v3643
        %3752 = vmatpush1.bf16.msra.mxu0 %v3642
        %3753 = vmatprep.subr.bf16.mxu0 %v3641
        %3754 = vmatpush1.bf16.msra.mxu0 %v3640
        %3755 = vmatprep.subr.bf16.mxu0 %v3639
        %3756 = vmatpush1.bf16.msra.mxu0 %v3638
        %3757 = vmatprep.subr.bf16.mxu0 %v3637
        %3758 = vmatpush1.bf16.msra.mxu0 %v3636
        %3759 = vmatprep.subr.bf16.mxu0 0
        %3760 = vmatpush2.bf16.msra.mxu0 0
        %3761 = vmatprep.subr.bf16.mxu0 0
        %3762 = vmatpush2.bf16.msra.mxu0 0
        %3763 = vmatprep.subr.bf16.mxu0 0
        %3764 = vmatpush2.bf16.msra.mxu0 0
        %3765 = vmatprep.subr.bf16.mxu0 0
        %3766 = vmatpush2.bf16.msra.mxu0 0
        %3767 = vmatprep.subr.bf16.mxu0 0
        %3768 = vmatpush2.bf16.msra.mxu0 0
        %3769 = vmatprep.subr.bf16.mxu0 0
        %3770 = vmatpush2.bf16.msra.mxu0 0
        %3771 = vmatprep.subr.bf16.mxu0 0
        %3772 = vmatpush2.bf16.msra.mxu0 0
        %3773 = vmatprep.subr.bf16.mxu0 0
        %3774 = vmatpush2.bf16.msra.mxu0 0
        %3775 = vmatprep.mubr.bf16.mxu0 0
        %3776 = vmatmul.mubr.bf16.gmra.mxu0 %v3456
        %v3777 = vpop.f32.mrf.mxu0
        %v3778 = vadd.f32 %v3735, %v3777
        %v3779 = vpop.f32.mrf.mxu0
        %v3780 = vadd.f32 %v3737, %v3779
        %v3781 = vpop.f32.mrf.mxu0
        %v3782 = vadd.f32 %v3739, %v3781
        %v3783 = vpop.f32.mrf.mxu0
        %v3784 = vadd.f32 %v3741, %v3783
        %3785 = vdwg.mxu0
        %v3786 = vadd.f32 %v3370, %v3778
        %v3787 = vadd.f32 %v3372, %v3780
        %v3788 = vadd.f32 %v3374, %v3782
        %v3789 = vadd.f32 %v3376, %v3784
        %v3790 = vld [vmem:[#allocation4] sm:$0xfe]
        %v3791 = vld [vmem:[#allocation4 + $0x8] sm:$0xfe]
        %v3792 = vld [vmem:[#allocation4 + $0x10] sm:$0xfe]
        %v3793 = vld [vmem:[#allocation4 + $0x18] sm:$0xfe]
        %v3794 = vld [vmem:[#allocation4 + $0x20] sm:$0x7f]
        %v3795 = vld [vmem:[#allocation4 + $0x28] sm:$0x7f]
        %v3796 = vld [vmem:[#allocation4 + $0x30] sm:$0x7f]
        %v3797 = vld [vmem:[#allocation4 + $0x38] sm:$0x7f]
        %v3798 = vpack.c.bf16 %v3794, %v3790
        %v3799 = vpack.c.bf16 %v3795, %v3791
        %v3800 = vpack.c.bf16 %v3796, %v3792
        %v3801 = vpack.c.bf16 %v3797, %v3793
        %s3802 = scalar_lea.vmem %s7, 1152
        %v3803 = vld [vmem:[%s3802] sm:$0xff]
        %v3804 = vld [vmem:[%s3802 + $0x8] sm:$0xff]
        %v3805 = vld [vmem:[%s3802 + $0x10] sm:$0xff]
        %v3806 = vld [vmem:[%s3802 + $0x18] sm:$0xff]
        %v3807 = vld [vmem:[%s3802 + $0x20] sm:$0xff]
        %v3808 = vld [vmem:[%s3802 + $0x28] sm:$0xff]
        %v3809 = vld [vmem:[%s3802 + $0x30] sm:$0xff]
        %v3810 = vld [vmem:[%s3802 + $0x38] sm:$0xff]
        %v3811 = vld [vmem:[%s3802 + $0x40] sm:$0xff]
        %v3812 = vld [vmem:[%s3802 + $0x48] sm:$0xff]
        %v3813 = vld [vmem:[%s3802 + $0x50] sm:$0xff]
        %v3814 = vld [vmem:[%s3802 + $0x58] sm:$0xff]
        %v3815 = vld [vmem:[%s3802 + $0x60] sm:$0xff]
        %v3816 = vld [vmem:[%s3802 + $0x68] sm:$0xff]
        %v3817 = vld [vmem:[%s3802 + $0x70] sm:$0xff]
        %v3818 = vld [vmem:[%s3802 + $0x78] sm:$0xff]
        %v3819 = vld [vmem:[%s3802 + $0x80] sm:$0xff]
        %v3820 = vld [vmem:[%s3802 + $0x88] sm:$0xff]
        %v3821 = vld [vmem:[%s3802 + $0x90] sm:$0xff]
        %v3822 = vld [vmem:[%s3802 + $0x98] sm:$0xff]
        %v3823 = vld [vmem:[%s3802 + $0xa0] sm:$0xff]
        %v3824 = vld [vmem:[%s3802 + $0xa8] sm:$0xff]
        %v3825 = vld [vmem:[%s3802 + $0xb0] sm:$0xff]
        %v3826 = vld [vmem:[%s3802 + $0xb8] sm:$0xff]
        %v3827 = vld [vmem:[%s3802 + $0xc0] sm:$0xff]
        %v3828 = vld [vmem:[%s3802 + $0xc8] sm:$0xff]
        %v3829 = vld [vmem:[%s3802 + $0xd0] sm:$0xff]
        %v3830 = vld [vmem:[%s3802 + $0xd8] sm:$0xff]
        %v3831 = vld [vmem:[%s3802 + $0xe0] sm:$0xff]
        %v3832 = vld [vmem:[%s3802 + $0xe8] sm:$0xff]
        %v3833 = vld [vmem:[%s3802 + $0xf0] sm:$0xff]
        %v3834 = vld [vmem:[%s3802 + $0xf8] sm:$0xff]
        %v3835 = vld [vmem:[%s3802 + $0x100] sm:$0xff]
        %v3836 = vld [vmem:[%s3802 + $0x108] sm:$0xff]
        %v3837 = vld [vmem:[%s3802 + $0x110] sm:$0xff]
        %v3838 = vld [vmem:[%s3802 + $0x118] sm:$0xff]
        %v3839 = vld [vmem:[%s3802 + $0x120] sm:$0xff]
        %v3840 = vld [vmem:[%s3802 + $0x128] sm:$0xff]
        %v3841 = vld [vmem:[%s3802 + $0x130] sm:$0xff]
        %v3842 = vld [vmem:[%s3802 + $0x138] sm:$0xff]
        %v3843 = vld [vmem:[%s3802 + $0x140] sm:$0xff]
        %v3844 = vld [vmem:[%s3802 + $0x148] sm:$0xff]
        %v3845 = vld [vmem:[%s3802 + $0x150] sm:$0xff]
        %v3846 = vld [vmem:[%s3802 + $0x158] sm:$0xff]
        %v3847 = vld [vmem:[%s3802 + $0x160] sm:$0xff]
        %v3848 = vld [vmem:[%s3802 + $0x168] sm:$0xff]
        %v3849 = vld [vmem:[%s3802 + $0x170] sm:$0xff]
        %v3850 = vld [vmem:[%s3802 + $0x178] sm:$0xff]
        %v3852 = vshrl.u32 %v3798, 16
        %v3854 = vshll.u32 %v3798, 16
        %v3856 = vrot.slane %v3854, 1
        %v3857 = vor.u32 %v3852, %v3856
        %v3859 = vshrl.u32 %v3799, 16
        %v3861 = vshll.u32 %v3799, 16
        %v3863 = vrot.slane %v3861, 1
        %v3864 = vor.u32 %v3859, %v3863
        %v3866 = vshrl.u32 %v3800, 16
        %v3868 = vshll.u32 %v3800, 16
        %v3870 = vrot.slane %v3868, 1
        %v3871 = vor.u32 %v3866, %v3870
        %v3873 = vshrl.u32 %v3801, 16
        %v3875 = vshll.u32 %v3801, 16
        %v3877 = vrot.slane %v3875, 1
        %v3878 = vor.u32 %v3873, %v3877
        %3879 = vrot.lane.b32.xlu0 %v3857, 64
        %v3880 = vpop.permute.xlu0 %3879
        %3881 = vrot.lane.b32.xlu0 %v3864, 64
        %v3882 = vpop.permute.xlu0 %3881
        %3883 = vrot.lane.b32.xlu0 %v3871, 64
        %v3884 = vpop.permute.xlu0 %3883
        %3885 = vrot.lane.b32.xlu0 %v3878, 64
        %v3886 = vpop.permute.xlu0 %3885
        %v3887 = vsel %vm2719, %v3880, %v3882
        %v3888 = vsel %vm2719, %v3882, %v3884
        %v3889 = vsel %vm2719, %v3884, %v3886
        %v3941 = vunpack.c.l.b16 %v3803
        %v3942 = vunpack.c.h.b16 %v3803
        %v3943 = vunpack.c.l.b16 %v3804
        %v3944 = vunpack.c.h.b16 %v3804
        %v3945 = vunpack.c.l.b16 %v3805
        %v3946 = vunpack.c.h.b16 %v3805
        %v3947 = vunpack.c.l.b16 %v3806
        %v3948 = vunpack.c.h.b16 %v3806
        %v3949 = vunpack.c.l.b16 %v3807
        %v3950 = vunpack.c.h.b16 %v3807
        %v3951 = vunpack.c.l.b16 %v3808
        %v3952 = vunpack.c.h.b16 %v3808
        %v3953 = vunpack.c.l.b16 %v3809
        %v3954 = vunpack.c.h.b16 %v3809
        %v3955 = vunpack.c.l.b16 %v3810
        %v3956 = vunpack.c.h.b16 %v3810
        %v3957 = vunpack.c.l.b16 %v3811
        %v3958 = vunpack.c.h.b16 %v3811
        %v3959 = vunpack.c.l.b16 %v3812
        %v3960 = vunpack.c.h.b16 %v3812
        %v3961 = vunpack.c.l.b16 %v3813
        %v3962 = vunpack.c.h.b16 %v3813
        %v3963 = vunpack.c.l.b16 %v3814
        %v3964 = vunpack.c.h.b16 %v3814
        %v3965 = vunpack.c.l.b16 %v3815
        %v3966 = vunpack.c.h.b16 %v3815
        %v3967 = vunpack.c.l.b16 %v3816
        %v3968 = vunpack.c.h.b16 %v3816
        %v3969 = vunpack.c.l.b16 %v3817
        %v3970 = vunpack.c.h.b16 %v3817
        %v3971 = vunpack.c.l.b16 %v3818
        %v3972 = vunpack.c.h.b16 %v3818
        %v3973 = vunpack.c.l.b16 %v3819
        %v3974 = vunpack.c.h.b16 %v3819
        %v3975 = vunpack.c.l.b16 %v3820
        %v3976 = vunpack.c.h.b16 %v3820
        %v3977 = vunpack.c.l.b16 %v3821
        %v3978 = vunpack.c.h.b16 %v3821
        %v3979 = vunpack.c.l.b16 %v3822
        %v3980 = vunpack.c.h.b16 %v3822
        %v3981 = vunpack.c.l.b16 %v3823
        %v3982 = vunpack.c.h.b16 %v3823
        %v3983 = vunpack.c.l.b16 %v3824
        %v3984 = vunpack.c.h.b16 %v3824
        %v3985 = vunpack.c.l.b16 %v3825
        %v3986 = vunpack.c.h.b16 %v3825
        %v3987 = vunpack.c.l.b16 %v3826
        %v3988 = vunpack.c.h.b16 %v3826
        %v3989 = vunpack.c.l.b16 %v3827
        %v3990 = vunpack.c.h.b16 %v3827
        %v3991 = vunpack.c.l.b16 %v3828
        %v3992 = vunpack.c.h.b16 %v3828
        %v3993 = vunpack.c.l.b16 %v3829
        %v3994 = vunpack.c.h.b16 %v3829
        %v3995 = vunpack.c.l.b16 %v3830
        %v3996 = vunpack.c.h.b16 %v3830
        %v3997 = vunpack.c.l.b16 %v3831
        %v3998 = vunpack.c.h.b16 %v3831
        %v3999 = vunpack.c.l.b16 %v3832
        %v4000 = vunpack.c.h.b16 %v3832
        %v4001 = vunpack.c.l.b16 %v3833
        %v4002 = vunpack.c.h.b16 %v3833
        %v4003 = vunpack.c.l.b16 %v3834
        %v4004 = vunpack.c.h.b16 %v3834
        %v4005 = vunpack.c.l.b16 %v3835
        %v4006 = vunpack.c.h.b16 %v3835
        %v4007 = vunpack.c.l.b16 %v3836
        %v4008 = vunpack.c.h.b16 %v3836
        %v4009 = vunpack.c.l.b16 %v3837
        %v4010 = vunpack.c.h.b16 %v3837
        %v4011 = vunpack.c.l.b16 %v3838
        %v4012 = vunpack.c.h.b16 %v3838
        %v4013 = vunpack.c.l.b16 %v3839
        %v4014 = vunpack.c.h.b16 %v3839
        %v4015 = vunpack.c.l.b16 %v3840
        %v4016 = vunpack.c.h.b16 %v3840
        %v4017 = vunpack.c.l.b16 %v3841
        %v4018 = vunpack.c.h.b16 %v3841
        %v4019 = vunpack.c.l.b16 %v3842
        %v4020 = vunpack.c.h.b16 %v3842
        %v4021 = vunpack.c.l.b16 %v3843
        %v4022 = vunpack.c.h.b16 %v3843
        %v4023 = vunpack.c.l.b16 %v3844
        %v4024 = vunpack.c.h.b16 %v3844
        %v4025 = vunpack.c.l.b16 %v3845
        %v4026 = vunpack.c.h.b16 %v3845
        %v4027 = vunpack.c.l.b16 %v3846
        %v4028 = vunpack.c.h.b16 %v3846
        %v4029 = vunpack.c.l.b16 %v3847
        %v4030 = vunpack.c.h.b16 %v3847
        %v4031 = vunpack.c.l.b16 %v3848
        %v4032 = vunpack.c.h.b16 %v3848
        %v4033 = vunpack.c.l.b16 %v3849
        %v4034 = vunpack.c.h.b16 %v3849
        %v4035 = vunpack.c.l.b16 %v3850
        %v4036 = vunpack.c.h.b16 %v3850
        %v4037 = vpack.c.b16 %v3943, %v3941
        %v4038 = vpack.c.b16 %v3944, %v3942
        %v4039 = vpack.c.b16 %v3947, %v3945
        %v4040 = vpack.c.b16 %v3948, %v3946
        %v4041 = vpack.c.b16 %v3951, %v3949
        %v4042 = vpack.c.b16 %v3952, %v3950
        %v4043 = vpack.c.b16 %v3955, %v3953
        %v4044 = vpack.c.b16 %v3956, %v3954
        %v4045 = vpack.c.b16 %v3959, %v3957
        %v4046 = vpack.c.b16 %v3960, %v3958
        %v4047 = vpack.c.b16 %v3963, %v3961
        %v4048 = vpack.c.b16 %v3964, %v3962
        %v4049 = vpack.c.b16 %v3967, %v3965
        %v4050 = vpack.c.b16 %v3968, %v3966
        %v4051 = vpack.c.b16 %v3971, %v3969
        %v4052 = vpack.c.b16 %v3972, %v3970
        %v4053 = vpack.c.b16 %v3975, %v3973
        %v4054 = vpack.c.b16 %v3976, %v3974
        %v4055 = vpack.c.b16 %v3979, %v3977
        %v4056 = vpack.c.b16 %v3980, %v3978
        %v4057 = vpack.c.b16 %v3983, %v3981
        %v4058 = vpack.c.b16 %v3984, %v3982
        %v4059 = vpack.c.b16 %v3987, %v3985
        %v4060 = vpack.c.b16 %v3988, %v3986
        %v4061 = vpack.c.b16 %v3991, %v3989
        %v4062 = vpack.c.b16 %v3992, %v3990
        %v4063 = vpack.c.b16 %v3995, %v3993
        %v4064 = vpack.c.b16 %v3996, %v3994
        %v4065 = vpack.c.b16 %v3999, %v3997
        %v4066 = vpack.c.b16 %v4000, %v3998
        %v4067 = vpack.c.b16 %v4003, %v4001
        %v4068 = vpack.c.b16 %v4004, %v4002
        %v4069 = vpack.c.b16 %v4007, %v4005
        %v4070 = vpack.c.b16 %v4008, %v4006
        %v4071 = vpack.c.b16 %v4011, %v4009
        %v4072 = vpack.c.b16 %v4012, %v4010
        %v4073 = vpack.c.b16 %v4015, %v4013
        %v4074 = vpack.c.b16 %v4016, %v4014
        %v4075 = vpack.c.b16 %v4019, %v4017
        %v4076 = vpack.c.b16 %v4020, %v4018
        %v4077 = vpack.c.b16 %v4023, %v4021
        %v4078 = vpack.c.b16 %v4024, %v4022
        %v4079 = vpack.c.b16 %v4027, %v4025
        %v4080 = vpack.c.b16 %v4028, %v4026
        %v4081 = vpack.c.b16 %v4031, %v4029
        %v4082 = vpack.c.b16 %v4032, %v4030
        %v4083 = vpack.c.b16 %v4035, %v4033
        %v4084 = vpack.c.b16 %v4036, %v4034
        %4133 = vmatprep.subr.bf16.mxu0 %v4052
        %4134 = vmatpush1.bf16.msra.mxu0 %v4051
        %4135 = vmatprep.subr.bf16.mxu0 %v4050
        %4136 = vmatpush1.bf16.msra.mxu0 %v4049
        %4137 = vmatprep.subr.bf16.mxu0 %v4048
        %4138 = vmatpush1.bf16.msra.mxu0 %v4047
        %4139 = vmatprep.subr.bf16.mxu0 %v4046
        %4140 = vmatpush1.bf16.msra.mxu0 %v4045
        %4141 = vmatprep.subr.bf16.mxu0 %v4044
        %4142 = vmatpush1.bf16.msra.mxu0 %v4043
        %4143 = vmatprep.subr.bf16.mxu0 %v4042
        %4144 = vmatpush1.bf16.msra.mxu0 %v4041
        %4145 = vmatprep.subr.bf16.mxu0 %v4040
        %4146 = vmatpush1.bf16.msra.mxu0 %v4039
        %4147 = vmatprep.subr.bf16.mxu0 %v4038
        %4148 = vmatpush1.bf16.msra.mxu0 %v4037
        %4149 = vmatprep.subr.bf16.mxu0 %v4068
        %4150 = vmatpush2.bf16.msra.mxu0 %v4067
        %4151 = vmatprep.subr.bf16.mxu0 %v4066
        %4152 = vmatpush2.bf16.msra.mxu0 %v4065
        %4153 = vmatprep.subr.bf16.mxu0 %v4064
        %4154 = vmatpush2.bf16.msra.mxu0 %v4063
        %4155 = vmatprep.subr.bf16.mxu0 %v4062
        %4156 = vmatpush2.bf16.msra.mxu0 %v4061
        %4157 = vmatprep.subr.bf16.mxu0 %v4060
        %4158 = vmatpush2.bf16.msra.mxu0 %v4059
        %4159 = vmatprep.subr.bf16.mxu0 %v4058
        %4160 = vmatpush2.bf16.msra.mxu0 %v4057
        %4161 = vmatprep.subr.bf16.mxu0 %v4056
        %4162 = vmatpush2.bf16.msra.mxu0 %v4055
        %4163 = vmatprep.subr.bf16.mxu0 %v4054
        %4164 = vmatpush2.bf16.msra.mxu0 %v4053
        %4165 = vmatprep.mubr.bf16.mxu0 %v3888
        %4166 = vmatmul.mubr.bf16.gmra.mxu0 %v3887
        %v4167 = vpop.f32.mrf.mxu0
        %v4168 = vadd.f32 0.0, %v4167
        %v4169 = vpop.f32.mrf.mxu0
        %v4170 = vadd.f32 0.0, %v4169
        %v4171 = vpop.f32.mrf.mxu0
        %v4172 = vadd.f32 0.0, %v4171
        %v4173 = vpop.f32.mrf.mxu0
        %v4174 = vadd.f32 0.0, %v4173
        %4175 = vdwg.mxu0
        %4176 = vmatprep.subr.bf16.mxu0 %v4084
        %4177 = vmatpush1.bf16.msra.mxu0 %v4083
        %4178 = vmatprep.subr.bf16.mxu0 %v4082
        %4179 = vmatpush1.bf16.msra.mxu0 %v4081
        %4180 = vmatprep.subr.bf16.mxu0 %v4080
        %4181 = vmatpush1.bf16.msra.mxu0 %v4079
        %4182 = vmatprep.subr.bf16.mxu0 %v4078
        %4183 = vmatpush1.bf16.msra.mxu0 %v4077
        %4184 = vmatprep.subr.bf16.mxu0 %v4076
        %4185 = vmatpush1.bf16.msra.mxu0 %v4075
        %4186 = vmatprep.subr.bf16.mxu0 %v4074
        %4187 = vmatpush1.bf16.msra.mxu0 %v4073
        %4188 = vmatprep.subr.bf16.mxu0 %v4072
        %4189 = vmatpush1.bf16.msra.mxu0 %v4071
        %4190 = vmatprep.subr.bf16.mxu0 %v4070
        %4191 = vmatpush1.bf16.msra.mxu0 %v4069
        %4192 = vmatprep.subr.bf16.mxu0 0
        %4193 = vmatpush2.bf16.msra.mxu0 0
        %4194 = vmatprep.subr.bf16.mxu0 0
        %4195 = vmatpush2.bf16.msra.mxu0 0
        %4196 = vmatprep.subr.bf16.mxu0 0
        %4197 = vmatpush2.bf16.msra.mxu0 0
        %4198 = vmatprep.subr.bf16.mxu0 0
        %4199 = vmatpush2.bf16.msra.mxu0 0
        %4200 = vmatprep.subr.bf16.mxu0 0
        %4201 = vmatpush2.bf16.msra.mxu0 0
        %4202 = vmatprep.subr.bf16.mxu0 0
        %4203 = vmatpush2.bf16.msra.mxu0 0
        %4204 = vmatprep.subr.bf16.mxu0 0
        %4205 = vmatpush2.bf16.msra.mxu0 0
        %4206 = vmatprep.subr.bf16.mxu0 0
        %4207 = vmatpush2.bf16.msra.mxu0 0
        %4208 = vmatprep.mubr.bf16.mxu0 0
        %4209 = vmatmul.mubr.bf16.gmra.mxu0 %v3889
        %v4210 = vpop.f32.mrf.mxu0
        %v4211 = vadd.f32 %v4168, %v4210
        %v4212 = vpop.f32.mrf.mxu0
        %v4213 = vadd.f32 %v4170, %v4212
        %v4214 = vpop.f32.mrf.mxu0
        %v4215 = vadd.f32 %v4172, %v4214
        %v4216 = vpop.f32.mrf.mxu0
        %v4217 = vadd.f32 %v4174, %v4216
        %4218 = vdwg.mxu0
        %v4219 = vadd.f32 %v3786, %v4211
        %v4220 = vadd.f32 %v3787, %v4213
        %v4221 = vadd.f32 %v3788, %v4215
        %v4222 = vadd.f32 %v3789, %v4217
        %v4223 = vld [vmem:[%s8] sm:$0x3]
        %v4225 = vlaneseq
        %v4226 = vshrl.u32 %v4225, 7
        %v4227 = vsub.s32 0, %v4226
        %v4228 = vrot.slane %v4223, %v4227
        %v4229 = vlaneseq
        %v4230 = vshrl.u32 %v4229, 7
        %v4231 = vsub.s32 1, %v4230
        %v4232 = vrot.slane %v4223, %v4231
        %v4235 = vadd.f32 %v4219, %v4228
        %v4236 = vadd.f32 %v4220, %v4232
        %v4237 = vadd.f32 %v4221, %v4228
        %v4238 = vadd.f32 %v4222, %v4232
        %vm4239 = vcmp.ge.f32.partialorder %v4235, 0.0
        %vm4240 = vcmp.ge.f32.partialorder %v4236, 0.0
        %vm4241 = vcmp.ge.f32.partialorder %v4237, 0.0
        %vm4242 = vcmp.ge.f32.partialorder %v4238, 0.0
        %v4243 = vmul.f32 %v4235, 0.1
        %v4244 = vmul.f32 %v4236, 0.1
        %v4245 = vmul.f32 %v4237, 0.1
        %v4246 = vmul.f32 %v4238, 0.1
        %v4247 = vsel %vm4239, %v4235, %v4243
        %v4248 = vsel %vm4240, %v4236, %v4244
        %v4249 = vsel %vm4241, %v4237, %v4245
        %v4250 = vsel %vm4242, %v4238, %v4246
        %4251 = vst [vmem:[#allocation5] sm:$0xff] 0.0
        %4252 = vst [vmem:[#allocation5 + $0x8] sm:$0xff] 0.0
        %4253 = vst [vmem:[#allocation5 + $0x10] sm:$0xff] 0.0
        %4254 = vst [vmem:[#allocation5 + $0x18] sm:$0xff] 0.0
        %v4259 = vrot.slane %v4247, 7
        %v4260 = vrot.slane %v4248, 7
        %v4261 = vrot.slane %v4249, 7
        %v4262 = vsel %vm2558, %v4259, %v4261
        %v4263 = vrot.slane %v4250, 7
        %v4264 = vsel %vm2558, %v4260, %v4263
        %4265 = vrot.lane.b32.xlu0 %v4259, 32
        %v4266 = vpop.permute.xlu0 %4265
        %4267 = vrot.lane.b32.xlu0 %v4260, 32
        %v4268 = vpop.permute.xlu0 %4267
        %4269 = vrot.lane.b32.xlu0 %v4262, 32
        %v4270 = vpop.permute.xlu0 %4269
        %4271 = vrot.lane.b32.xlu0 %v4264, 32
        %v4272 = vpop.permute.xlu0 %4271
        %v4273 = vsel %vm1552, %v4266, %v4268
        %v4274 = vsel %vm1552, %v4270, %v4272
        %vm4279 = vcmask 1047809
        %4280 = vst.msk [vmem:[#allocation5] sm:$0xfe] %vm4279, %v4266
        %vm4281 = vcmask 785409
        %4282 = vst.msk [vmem:[#allocation5 + $0x8] sm:$0xfe] %vm4281, %v4273
        %vm4283 = vcmask 1046784
        %4284 = vst.msk [vmem:[#allocation5 + $0x10] sm:$0x7f] %vm4283, %v4270
        %vm4285 = vcmask 784384
        %4286 = vst.msk [vmem:[#allocation5 + $0x18] sm:$0x7f] %vm4285, %v4274
        %v4287 = vld [vmem:[#allocation5] sm:$0xff]
        %v4288 = vld [vmem:[#allocation5 + $0x8] sm:$0xff]
        %v4289 = vld [vmem:[#allocation5 + $0x10] sm:$0x7f]
        %v4290 = vld [vmem:[#allocation5 + $0x18] sm:$0x7f]
        %v4291 = vpack.c.bf16 %v4289, %v4287
        %v4292 = vpack.c.bf16 %v4290, %v4288
        %v4293 = vld [vmem:[%s9] sm:$0xf]
        %v4294 = vld [vmem:[%s9 + $0x4] sm:$0xf]
        %v4295 = vld [vmem:[%s9 + $0x8] sm:$0xf]
        %v4296 = vld [vmem:[%s9 + $0xc] sm:$0xf]
        %v4297 = vld [vmem:[%s9 + $0x10] sm:$0xf]
        %v4298 = vld [vmem:[%s9 + $0x14] sm:$0xf]
        %v4299 = vld [vmem:[%s9 + $0x18] sm:$0xf]
        %v4300 = vld [vmem:[%s9 + $0x1c] sm:$0xf]
        %v4301 = vld [vmem:[%s9 + $0x20] sm:$0xf]
        %v4302 = vld [vmem:[%s9 + $0x24] sm:$0xf]
        %v4303 = vld [vmem:[%s9 + $0x28] sm:$0xf]
        %v4304 = vld [vmem:[%s9 + $0x2c] sm:$0xf]
        %v4305 = vld [vmem:[%s9 + $0x30] sm:$0xf]
        %v4306 = vld [vmem:[%s9 + $0x34] sm:$0xf]
        %v4307 = vld [vmem:[%s9 + $0x38] sm:$0xf]
        %v4308 = vld [vmem:[%s9 + $0x3c] sm:$0xf]
        %v4309 = vld [vmem:[%s9 + $0x40] sm:$0xf]
        %v4310 = vld [vmem:[%s9 + $0x44] sm:$0xf]
        %v4311 = vld [vmem:[%s9 + $0x48] sm:$0xf]
        %v4312 = vld [vmem:[%s9 + $0x4c] sm:$0xf]
        %v4313 = vld [vmem:[%s9 + $0x50] sm:$0xf]
        %v4314 = vld [vmem:[%s9 + $0x54] sm:$0xf]
        %v4315 = vld [vmem:[%s9 + $0x58] sm:$0xf]
        %v4316 = vld [vmem:[%s9 + $0x5c] sm:$0xf]
        %v4317 = vld [vmem:[%s9 + $0x60] sm:$0xf]
        %v4318 = vld [vmem:[%s9 + $0x64] sm:$0xf]
        %v4319 = vld [vmem:[%s9 + $0x68] sm:$0xf]
        %v4320 = vld [vmem:[%s9 + $0x6c] sm:$0xf]
        %s4321 = scalar_lea.vmem %s9, 112
        %v4322 = vld [vmem:[%s4321] sm:$0xf]
        %v4323 = vld [vmem:[%s4321 + $0x4] sm:$0xf]
        %v4324 = vld [vmem:[%s4321 + $0x8] sm:$0xf]
        %v4325 = vld [vmem:[%s4321 + $0xc] sm:$0xf]
        %v4326 = vld [vmem:[%s4321 + $0x10] sm:$0xf]
        %v4327 = vld [vmem:[%s4321 + $0x14] sm:$0xf]
        %v4328 = vld [vmem:[%s4321 + $0x18] sm:$0xf]
        %v4329 = vld [vmem:[%s4321 + $0x1c] sm:$0xf]
        %v4330 = vld [vmem:[%s4321 + $0x20] sm:$0xf]
        %v4331 = vld [vmem:[%s4321 + $0x24] sm:$0xf]
        %v4332 = vld [vmem:[%s4321 + $0x28] sm:$0xf]
        %v4333 = vld [vmem:[%s4321 + $0x2c] sm:$0xf]
        %v4334 = vld [vmem:[%s4321 + $0x30] sm:$0xf]
        %v4335 = vld [vmem:[%s4321 + $0x34] sm:$0xf]
        %v4336 = vld [vmem:[%s4321 + $0x38] sm:$0xf]
        %v4337 = vld [vmem:[%s4321 + $0x3c] sm:$0xf]
        %v4338 = vld [vmem:[%s4321 + $0x40] sm:$0xf]
        %v4339 = vld [vmem:[%s4321 + $0x44] sm:$0xf]
        %v4340 = vld [vmem:[%s4321 + $0x48] sm:$0xf]
        %v4341 = vld [vmem:[%s4321 + $0x4c] sm:$0xf]
        %v4342 = vld [vmem:[%s4321 + $0x50] sm:$0xf]
        %v4343 = vld [vmem:[%s4321 + $0x54] sm:$0xf]
        %v4344 = vld [vmem:[%s4321 + $0x58] sm:$0xf]
        %v4345 = vld [vmem:[%s4321 + $0x5c] sm:$0xf]
        %v4346 = vld [vmem:[%s4321 + $0x60] sm:$0xf]
        %v4347 = vld [vmem:[%s4321 + $0x64] sm:$0xf]
        %v4348 = vld [vmem:[%s4321 + $0x68] sm:$0xf]
        %v4349 = vld [vmem:[%s4321 + $0x6c] sm:$0xf]
        %4352 = vrot.lane.b32.xlu0 %v4291, 96
        %v4353 = vpop.permute.xlu0 %4352
        %4354 = vrot.lane.b32.xlu0 %v4292, 96
        %v4355 = vpop.permute.xlu0 %4354
        %v4356 = vsel %vm1389, %v4353, %v4355
        %v4386 = vunpack.c.l.b16 %v4322
        %v4387 = vunpack.c.l.b16 %v4323
        %v4388 = vunpack.c.l.b16 %v4324
        %v4389 = vunpack.c.l.b16 %v4325
        %v4390 = vunpack.c.l.b16 %v4326
        %v4391 = vunpack.c.l.b16 %v4327
        %v4392 = vunpack.c.l.b16 %v4328
        %v4393 = vunpack.c.l.b16 %v4329
        %v4394 = vunpack.c.l.b16 %v4330
        %v4395 = vunpack.c.l.b16 %v4331
        %v4396 = vunpack.c.l.b16 %v4332
        %v4397 = vunpack.c.l.b16 %v4333
        %v4398 = vunpack.c.l.b16 %v4334
        %v4399 = vunpack.c.l.b16 %v4335
        %v4400 = vunpack.c.l.b16 %v4336
        %v4401 = vunpack.c.l.b16 %v4337
        %v4402 = vunpack.c.l.b16 %v4338
        %v4403 = vunpack.c.l.b16 %v4339
        %v4404 = vunpack.c.l.b16 %v4340
        %v4405 = vunpack.c.l.b16 %v4341
        %v4406 = vunpack.c.l.b16 %v4342
        %v4407 = vunpack.c.l.b16 %v4343
        %v4408 = vunpack.c.l.b16 %v4344
        %v4409 = vunpack.c.l.b16 %v4345
        %v4410 = vunpack.c.l.b16 %v4346
        %v4411 = vunpack.c.l.b16 %v4347
        %v4412 = vunpack.c.l.b16 %v4348
        %v4413 = vunpack.c.l.b16 %v4349
        %v4414 = vpack.c.b16 %v4387, %v4386
        %v4415 = vpack.c.b16 %v4389, %v4388
        %v4416 = vpack.c.b16 %v4391, %v4390
        %v4417 = vpack.c.b16 %v4393, %v4392
        %v4418 = vpack.c.b16 %v4395, %v4394
        %v4419 = vpack.c.b16 %v4397, %v4396
        %v4420 = vpack.c.b16 %v4399, %v4398
        %v4421 = vpack.c.b16 %v4401, %v4400
        %v4422 = vpack.c.b16 %v4403, %v4402
        %v4423 = vpack.c.b16 %v4405, %v4404
        %v4424 = vpack.c.b16 %v4407, %v4406
        %v4425 = vpack.c.b16 %v4409, %v4408
        %v4426 = vpack.c.b16 %v4411, %v4410
        %v4427 = vpack.c.b16 %v4413, %v4412
        %v4443 = vsel %vm857, %v4355, 0
        %4445 = vmatprep.subr.bf16.mxu0 0
        %4446 = vmatpush1.bf16.msra.mxu0 %v4421
        %4447 = vmatprep.subr.bf16.mxu0 0
        %4448 = vmatpush1.bf16.msra.mxu0 %v4420
        %4449 = vmatprep.subr.bf16.mxu0 0
        %4450 = vmatpush1.bf16.msra.mxu0 %v4419
        %4451 = vmatprep.subr.bf16.mxu0 0
        %4452 = vmatpush1.bf16.msra.mxu0 %v4418
        %4453 = vmatprep.subr.bf16.mxu0 0
        %4454 = vmatpush1.bf16.msra.mxu0 %v4417
        %4455 = vmatprep.subr.bf16.mxu0 0
        %4456 = vmatpush1.bf16.msra.mxu0 %v4416
        %4457 = vmatprep.subr.bf16.mxu0 0
        %4458 = vmatpush1.bf16.msra.mxu0 %v4415
        %4459 = vmatprep.subr.bf16.mxu0 0
        %4460 = vmatpush1.bf16.msra.mxu0 %v4414
        %4461 = vmatprep.subr.bf16.mxu0 0
        %4462 = vmatpush2.bf16.msra.mxu0 0
        %4463 = vmatprep.subr.bf16.mxu0 0
        %4464 = vmatpush2.bf16.msra.mxu0 0
        %4465 = vmatprep.subr.bf16.mxu0 0
        %4466 = vmatpush2.bf16.msra.mxu0 %v4427
        %4467 = vmatprep.subr.bf16.mxu0 0
        %4468 = vmatpush2.bf16.msra.mxu0 %v4426
        %4469 = vmatprep.subr.bf16.mxu0 0
        %4470 = vmatpush2.bf16.msra.mxu0 %v4425
        %4471 = vmatprep.subr.bf16.mxu0 0
        %4472 = vmatpush2.bf16.msra.mxu0 %v4424
        %4473 = vmatprep.subr.bf16.mxu0 0
        %4474 = vmatpush2.bf16.msra.mxu0 %v4423
        %4475 = vmatprep.subr.bf16.mxu0 0
        %4476 = vmatpush2.bf16.msra.mxu0 %v4422
        %4477 = vmatprep.mubr.bf16.mxu0 %v4443
        %4478 = vmatmul.mubr.bf16.gmra.mxu0 %v4356
        %v4479 = vpop.f32.mrf.mxu0
        %v4480 = vadd.f32 0.0, %v4479
        %v4481 = vpop.f32.mrf.mxu0
        %v4482 = vpop.f32.mrf.mxu0
        %v4483 = vadd.f32 0.0, %v4482
        %v4484 = vpop.f32.mrf.mxu0
        %4485 = vdwg.mxu0
        %v4514 = vunpack.c.l.b16 %v4293
        %v4515 = vunpack.c.l.b16 %v4294
        %v4516 = vunpack.c.l.b16 %v4295
        %v4517 = vunpack.c.l.b16 %v4296
        %v4518 = vunpack.c.l.b16 %v4297
        %v4519 = vunpack.c.l.b16 %v4298
        %v4520 = vunpack.c.l.b16 %v4299
        %v4521 = vunpack.c.l.b16 %v4300
        %v4522 = vunpack.c.l.b16 %v4301
        %v4523 = vunpack.c.l.b16 %v4302
        %v4524 = vunpack.c.l.b16 %v4303
        %v4525 = vunpack.c.l.b16 %v4304
        %v4526 = vunpack.c.l.b16 %v4305
        %v4527 = vunpack.c.l.b16 %v4306
        %v4528 = vunpack.c.l.b16 %v4307
        %v4529 = vunpack.c.l.b16 %v4308
        %v4530 = vunpack.c.l.b16 %v4309
        %v4531 = vunpack.c.l.b16 %v4310
        %v4532 = vunpack.c.l.b16 %v4311
        %v4533 = vunpack.c.l.b16 %v4312
        %v4534 = vunpack.c.l.b16 %v4313
        %v4535 = vunpack.c.l.b16 %v4314
        %v4536 = vunpack.c.l.b16 %v4315
        %v4537 = vunpack.c.l.b16 %v4316
        %v4538 = vunpack.c.l.b16 %v4317
        %v4539 = vunpack.c.l.b16 %v4318
        %v4540 = vunpack.c.l.b16 %v4319
        %v4541 = vunpack.c.l.b16 %v4320
        %v4542 = vpack.c.b16 %v4515, %v4514
        %v4543 = vpack.c.b16 %v4517, %v4516
        %v4544 = vpack.c.b16 %v4519, %v4518
        %v4545 = vpack.c.b16 %v4521, %v4520
        %v4546 = vpack.c.b16 %v4523, %v4522
        %v4547 = vpack.c.b16 %v4525, %v4524
        %v4548 = vpack.c.b16 %v4527, %v4526
        %v4549 = vpack.c.b16 %v4529, %v4528
        %v4550 = vpack.c.b16 %v4531, %v4530
        %v4551 = vpack.c.b16 %v4533, %v4532
        %v4552 = vpack.c.b16 %v4535, %v4534
        %v4553 = vpack.c.b16 %v4537, %v4536
        %v4554 = vpack.c.b16 %v4539, %v4538
        %v4555 = vpack.c.b16 %v4541, %v4540
        %v4571 = vsel %vm857, %v4292, 0
        %4573 = vmatprep.subr.bf16.mxu0 0
        %4574 = vmatpush1.bf16.msra.mxu0 %v4549
        %4575 = vmatprep.subr.bf16.mxu0 0
        %4576 = vmatpush1.bf16.msra.mxu0 %v4548
        %4577 = vmatprep.subr.bf16.mxu0 0
        %4578 = vmatpush1.bf16.msra.mxu0 %v4547
        %4579 = vmatprep.subr.bf16.mxu0 0
        %4580 = vmatpush1.bf16.msra.mxu0 %v4546
        %4581 = vmatprep.subr.bf16.mxu0 0
        %4582 = vmatpush1.bf16.msra.mxu0 %v4545
        %4583 = vmatprep.subr.bf16.mxu0 0
        %4584 = vmatpush1.bf16.msra.mxu0 %v4544
        %4585 = vmatprep.subr.bf16.mxu0 0
        %4586 = vmatpush1.bf16.msra.mxu0 %v4543
        %4587 = vmatprep.subr.bf16.mxu0 0
        %4588 = vmatpush1.bf16.msra.mxu0 %v4542
        %4589 = vmatprep.subr.bf16.mxu0 0
        %4590 = vmatpush2.bf16.msra.mxu0 0
        %4591 = vmatprep.subr.bf16.mxu0 0
        %4592 = vmatpush2.bf16.msra.mxu0 0
        %4593 = vmatprep.subr.bf16.mxu0 0
        %4594 = vmatpush2.bf16.msra.mxu0 %v4555
        %4595 = vmatprep.subr.bf16.mxu0 0
        %4596 = vmatpush2.bf16.msra.mxu0 %v4554
        %4597 = vmatprep.subr.bf16.mxu0 0
        %4598 = vmatpush2.bf16.msra.mxu0 %v4553
        %4599 = vmatprep.subr.bf16.mxu0 0
        %4600 = vmatpush2.bf16.msra.mxu0 %v4552
        %4601 = vmatprep.subr.bf16.mxu0 0
        %4602 = vmatpush2.bf16.msra.mxu0 %v4551
        %4603 = vmatprep.subr.bf16.mxu0 0
        %4604 = vmatpush2.bf16.msra.mxu0 %v4550
        %4605 = vmatprep.mubr.bf16.mxu0 %v4571
        %4606 = vmatmul.mubr.bf16.gmra.mxu0 %v4291
        %v4607 = vpop.f32.mrf.mxu0
        %v4608 = vadd.f32 %v4480, %v4607
        %v4609 = vpop.f32.mrf.mxu0
        %v4610 = vpop.f32.mrf.mxu0
        %v4611 = vadd.f32 %v4483, %v4610
        %v4612 = vpop.f32.mrf.mxu0
        %4613 = vdwg.mxu0
        %v4614 = vld [vmem:[#allocation5] sm:$0xfe]
        %v4615 = vld [vmem:[#allocation5 + $0x8] sm:$0xfe]
        %v4616 = vld [vmem:[#allocation5 + $0x10] sm:$0xff]
        %v4617 = vld [vmem:[#allocation5 + $0x18] sm:$0xff]
        %v4618 = vpack.c.bf16 %v4616, %v4614
        %v4619 = vpack.c.bf16 %v4617, %v4615
        %s4620 = scalar_lea.vmem %s9, 224
        %v4621 = vld [vmem:[%s4620] sm:$0xf]
        %v4622 = vld [vmem:[%s4620 + $0x4] sm:$0xf]
        %v4623 = vld [vmem:[%s4620 + $0x8] sm:$0xf]
        %v4624 = vld [vmem:[%s4620 + $0xc] sm:$0xf]
        %v4625 = vld [vmem:[%s4620 + $0x10] sm:$0xf]
        %v4626 = vld [vmem:[%s4620 + $0x14] sm:$0xf]
        %v4627 = vld [vmem:[%s4620 + $0x18] sm:$0xf]
        %v4628 = vld [vmem:[%s4620 + $0x1c] sm:$0xf]
        %v4629 = vld [vmem:[%s4620 + $0x20] sm:$0xf]
        %v4630 = vld [vmem:[%s4620 + $0x24] sm:$0xf]
        %v4631 = vld [vmem:[%s4620 + $0x28] sm:$0xf]
        %v4632 = vld [vmem:[%s4620 + $0x2c] sm:$0xf]
        %v4633 = vld [vmem:[%s4620 + $0x30] sm:$0xf]
        %v4634 = vld [vmem:[%s4620 + $0x34] sm:$0xf]
        %v4635 = vld [vmem:[%s4620 + $0x38] sm:$0xf]
        %v4636 = vld [vmem:[%s4620 + $0x3c] sm:$0xf]
        %v4637 = vld [vmem:[%s4620 + $0x40] sm:$0xf]
        %v4638 = vld [vmem:[%s4620 + $0x44] sm:$0xf]
        %v4639 = vld [vmem:[%s4620 + $0x48] sm:$0xf]
        %v4640 = vld [vmem:[%s4620 + $0x4c] sm:$0xf]
        %v4641 = vld [vmem:[%s4620 + $0x50] sm:$0xf]
        %v4642 = vld [vmem:[%s4620 + $0x54] sm:$0xf]
        %v4643 = vld [vmem:[%s4620 + $0x58] sm:$0xf]
        %v4644 = vld [vmem:[%s4620 + $0x5c] sm:$0xf]
        %v4645 = vld [vmem:[%s4620 + $0x60] sm:$0xf]
        %v4646 = vld [vmem:[%s4620 + $0x64] sm:$0xf]
        %v4647 = vld [vmem:[%s4620 + $0x68] sm:$0xf]
        %v4648 = vld [vmem:[%s4620 + $0x6c] sm:$0xf]
        %v4650 = vshrl.u32 %v4618, 16
        %v4652 = vshll.u32 %v4618, 16
        %v4654 = vrot.slane %v4652, 1
        %v4655 = vor.u32 %v4650, %v4654
        %v4657 = vshrl.u32 %v4619, 16
        %v4659 = vshll.u32 %v4619, 16
        %v4661 = vrot.slane %v4659, 1
        %v4662 = vor.u32 %v4657, %v4661
        %v4692 = vunpack.c.l.b16 %v4621
        %v4693 = vunpack.c.l.b16 %v4622
        %v4694 = vunpack.c.l.b16 %v4623
        %v4695 = vunpack.c.l.b16 %v4624
        %v4696 = vunpack.c.l.b16 %v4625
        %v4697 = vunpack.c.l.b16 %v4626
        %v4698 = vunpack.c.l.b16 %v4627
        %v4699 = vunpack.c.l.b16 %v4628
        %v4700 = vunpack.c.l.b16 %v4629
        %v4701 = vunpack.c.l.b16 %v4630
        %v4702 = vunpack.c.l.b16 %v4631
        %v4703 = vunpack.c.l.b16 %v4632
        %v4704 = vunpack.c.l.b16 %v4633
        %v4705 = vunpack.c.l.b16 %v4634
        %v4706 = vunpack.c.l.b16 %v4635
        %v4707 = vunpack.c.l.b16 %v4636
        %v4708 = vunpack.c.l.b16 %v4637
        %v4709 = vunpack.c.l.b16 %v4638
        %v4710 = vunpack.c.l.b16 %v4639
        %v4711 = vunpack.c.l.b16 %v4640
        %v4712 = vunpack.c.l.b16 %v4641
        %v4713 = vunpack.c.l.b16 %v4642
        %v4714 = vunpack.c.l.b16 %v4643
        %v4715 = vunpack.c.l.b16 %v4644
        %v4716 = vunpack.c.l.b16 %v4645
        %v4717 = vunpack.c.l.b16 %v4646
        %v4718 = vunpack.c.l.b16 %v4647
        %v4719 = vunpack.c.l.b16 %v4648
        %v4720 = vpack.c.b16 %v4693, %v4692
        %v4721 = vpack.c.b16 %v4695, %v4694
        %v4722 = vpack.c.b16 %v4697, %v4696
        %v4723 = vpack.c.b16 %v4699, %v4698
        %v4724 = vpack.c.b16 %v4701, %v4700
        %v4725 = vpack.c.b16 %v4703, %v4702
        %v4726 = vpack.c.b16 %v4705, %v4704
        %v4727 = vpack.c.b16 %v4707, %v4706
        %v4728 = vpack.c.b16 %v4709, %v4708
        %v4729 = vpack.c.b16 %v4711, %v4710
        %v4730 = vpack.c.b16 %v4713, %v4712
        %v4731 = vpack.c.b16 %v4715, %v4714
        %v4732 = vpack.c.b16 %v4717, %v4716
        %v4733 = vpack.c.b16 %v4719, %v4718
        %v4749 = vsel %vm857, %v4662, 0
        %4751 = vmatprep.subr.bf16.mxu0 0
        %4752 = vmatpush1.bf16.msra.mxu0 %v4727
        %4753 = vmatprep.subr.bf16.mxu0 0
        %4754 = vmatpush1.bf16.msra.mxu0 %v4726
        %4755 = vmatprep.subr.bf16.mxu0 0
        %4756 = vmatpush1.bf16.msra.mxu0 %v4725
        %4757 = vmatprep.subr.bf16.mxu0 0
        %4758 = vmatpush1.bf16.msra.mxu0 %v4724
        %4759 = vmatprep.subr.bf16.mxu0 0
        %4760 = vmatpush1.bf16.msra.mxu0 %v4723
        %4761 = vmatprep.subr.bf16.mxu0 0
        %4762 = vmatpush1.bf16.msra.mxu0 %v4722
        %4763 = vmatprep.subr.bf16.mxu0 0
        %4764 = vmatpush1.bf16.msra.mxu0 %v4721
        %4765 = vmatprep.subr.bf16.mxu0 0
        %4766 = vmatpush1.bf16.msra.mxu0 %v4720
        %4767 = vmatprep.subr.bf16.mxu0 0
        %4768 = vmatpush2.bf16.msra.mxu0 0
        %4769 = vmatprep.subr.bf16.mxu0 0
        %4770 = vmatpush2.bf16.msra.mxu0 0
        %4771 = vmatprep.subr.bf16.mxu0 0
        %4772 = vmatpush2.bf16.msra.mxu0 %v4733
        %4773 = vmatprep.subr.bf16.mxu0 0
        %4774 = vmatpush2.bf16.msra.mxu0 %v4732
        %4775 = vmatprep.subr.bf16.mxu0 0
        %4776 = vmatpush2.bf16.msra.mxu0 %v4731
        %4777 = vmatprep.subr.bf16.mxu0 0
        %4778 = vmatpush2.bf16.msra.mxu0 %v4730
        %4779 = vmatprep.subr.bf16.mxu0 0
        %4780 = vmatpush2.bf16.msra.mxu0 %v4729
        %4781 = vmatprep.subr.bf16.mxu0 0
        %4782 = vmatpush2.bf16.msra.mxu0 %v4728
        %4783 = vmatprep.mubr.bf16.mxu0 %v4749
        %4784 = vmatmul.mubr.bf16.gmra.mxu0 %v4655
        %v4785 = vpop.f32.mrf.mxu0
        %v4786 = vadd.f32 0.0, %v4785
        %v4787 = vpop.f32.mrf.mxu0
        %v4788 = vpop.f32.mrf.mxu0
        %v4789 = vadd.f32 0.0, %v4788
        %v4790 = vpop.f32.mrf.mxu0
        %4791 = vdwg.mxu0
        %v4792 = vadd.f32 %v4608, %v4786
        %v4793 = vadd.f32 %v4611, %v4789
        %s4794 = scalar_lea.vmem %s9, 336
        %v4795 = vld [vmem:[%s4794] sm:$0xf]
        %v4796 = vld [vmem:[%s4794 + $0x4] sm:$0xf]
        %v4797 = vld [vmem:[%s4794 + $0x8] sm:$0xf]
        %v4798 = vld [vmem:[%s4794 + $0xc] sm:$0xf]
        %v4799 = vld [vmem:[%s4794 + $0x10] sm:$0xf]
        %v4800 = vld [vmem:[%s4794 + $0x14] sm:$0xf]
        %v4801 = vld [vmem:[%s4794 + $0x18] sm:$0xf]
        %v4802 = vld [vmem:[%s4794 + $0x1c] sm:$0xf]
        %v4803 = vld [vmem:[%s4794 + $0x20] sm:$0xf]
        %v4804 = vld [vmem:[%s4794 + $0x24] sm:$0xf]
        %v4805 = vld [vmem:[%s4794 + $0x28] sm:$0xf]
        %v4806 = vld [vmem:[%s4794 + $0x2c] sm:$0xf]
        %v4807 = vld [vmem:[%s4794 + $0x30] sm:$0xf]
        %v4808 = vld [vmem:[%s4794 + $0x34] sm:$0xf]
        %v4809 = vld [vmem:[%s4794 + $0x38] sm:$0xf]
        %v4810 = vld [vmem:[%s4794 + $0x3c] sm:$0xf]
        %v4811 = vld [vmem:[%s4794 + $0x40] sm:$0xf]
        %v4812 = vld [vmem:[%s4794 + $0x44] sm:$0xf]
        %v4813 = vld [vmem:[%s4794 + $0x48] sm:$0xf]
        %v4814 = vld [vmem:[%s4794 + $0x4c] sm:$0xf]
        %v4815 = vld [vmem:[%s4794 + $0x50] sm:$0xf]
        %v4816 = vld [vmem:[%s4794 + $0x54] sm:$0xf]
        %v4817 = vld [vmem:[%s4794 + $0x58] sm:$0xf]
        %v4818 = vld [vmem:[%s4794 + $0x5c] sm:$0xf]
        %v4819 = vld [vmem:[%s4794 + $0x60] sm:$0xf]
        %v4820 = vld [vmem:[%s4794 + $0x64] sm:$0xf]
        %v4821 = vld [vmem:[%s4794 + $0x68] sm:$0xf]
        %v4822 = vld [vmem:[%s4794 + $0x6c] sm:$0xf]
        %4823 = vrot.lane.b32.xlu0 %v4655, 96
        %v4824 = vpop.permute.xlu0 %4823
        %4825 = vrot.lane.b32.xlu0 %v4662, 96
        %v4826 = vpop.permute.xlu0 %4825
        %v4827 = vsel %vm1389, %v4824, %v4826
        %v4857 = vunpack.c.l.b16 %v4795
        %v4858 = vunpack.c.l.b16 %v4796
        %v4859 = vunpack.c.l.b16 %v4797
        %v4860 = vunpack.c.l.b16 %v4798
        %v4861 = vunpack.c.l.b16 %v4799
        %v4862 = vunpack.c.l.b16 %v4800
        %v4863 = vunpack.c.l.b16 %v4801
        %v4864 = vunpack.c.l.b16 %v4802
        %v4865 = vunpack.c.l.b16 %v4803
        %v4866 = vunpack.c.l.b16 %v4804
        %v4867 = vunpack.c.l.b16 %v4805
        %v4868 = vunpack.c.l.b16 %v4806
        %v4869 = vunpack.c.l.b16 %v4807
        %v4870 = vunpack.c.l.b16 %v4808
        %v4871 = vunpack.c.l.b16 %v4809
        %v4872 = vunpack.c.l.b16 %v4810
        %v4873 = vunpack.c.l.b16 %v4811
        %v4874 = vunpack.c.l.b16 %v4812
        %v4875 = vunpack.c.l.b16 %v4813
        %v4876 = vunpack.c.l.b16 %v4814
        %v4877 = vunpack.c.l.b16 %v4815
        %v4878 = vunpack.c.l.b16 %v4816
        %v4879 = vunpack.c.l.b16 %v4817
        %v4880 = vunpack.c.l.b16 %v4818
        %v4881 = vunpack.c.l.b16 %v4819
        %v4882 = vunpack.c.l.b16 %v4820
        %v4883 = vunpack.c.l.b16 %v4821
        %v4884 = vunpack.c.l.b16 %v4822
        %v4885 = vpack.c.b16 %v4858, %v4857
        %v4886 = vpack.c.b16 %v4860, %v4859
        %v4887 = vpack.c.b16 %v4862, %v4861
        %v4888 = vpack.c.b16 %v4864, %v4863
        %v4889 = vpack.c.b16 %v4866, %v4865
        %v4890 = vpack.c.b16 %v4868, %v4867
        %v4891 = vpack.c.b16 %v4870, %v4869
        %v4892 = vpack.c.b16 %v4872, %v4871
        %v4893 = vpack.c.b16 %v4874, %v4873
        %v4894 = vpack.c.b16 %v4876, %v4875
        %v4895 = vpack.c.b16 %v4878, %v4877
        %v4896 = vpack.c.b16 %v4880, %v4879
        %v4897 = vpack.c.b16 %v4882, %v4881
        %v4898 = vpack.c.b16 %v4884, %v4883
        %v4914 = vsel %vm857, %v4826, 0
        %4916 = vmatprep.subr.bf16.mxu0 0
        %4917 = vmatpush1.bf16.msra.mxu0 %v4892
        %4918 = vmatprep.subr.bf16.mxu0 0
        %4919 = vmatpush1.bf16.msra.mxu0 %v4891
        %4920 = vmatprep.subr.bf16.mxu0 0
        %4921 = vmatpush1.bf16.msra.mxu0 %v4890
        %4922 = vmatprep.subr.bf16.mxu0 0
        %4923 = vmatpush1.bf16.msra.mxu0 %v4889
        %4924 = vmatprep.subr.bf16.mxu0 0
        %4925 = vmatpush1.bf16.msra.mxu0 %v4888
        %4926 = vmatprep.subr.bf16.mxu0 0
        %4927 = vmatpush1.bf16.msra.mxu0 %v4887
        %4928 = vmatprep.subr.bf16.mxu0 0
        %4929 = vmatpush1.bf16.msra.mxu0 %v4886
        %4930 = vmatprep.subr.bf16.mxu0 0
        %4931 = vmatpush1.bf16.msra.mxu0 %v4885
        %4932 = vmatprep.subr.bf16.mxu0 0
        %4933 = vmatpush2.bf16.msra.mxu0 0
        %4934 = vmatprep.subr.bf16.mxu0 0
        %4935 = vmatpush2.bf16.msra.mxu0 0
        %4936 = vmatprep.subr.bf16.mxu0 0
        %4937 = vmatpush2.bf16.msra.mxu0 %v4898
        %4938 = vmatprep.subr.bf16.mxu0 0
        %4939 = vmatpush2.bf16.msra.mxu0 %v4897
        %4940 = vmatprep.subr.bf16.mxu0 0
        %4941 = vmatpush2.bf16.msra.mxu0 %v4896
        %4942 = vmatprep.subr.bf16.mxu0 0
        %4943 = vmatpush2.bf16.msra.mxu0 %v4895
        %4944 = vmatprep.subr.bf16.mxu0 0
        %4945 = vmatpush2.bf16.msra.mxu0 %v4894
        %4946 = vmatprep.subr.bf16.mxu0 0
        %4947 = vmatpush2.bf16.msra.mxu0 %v4893
        %4948 = vmatprep.mubr.bf16.mxu0 %v4914
        %4949 = vmatmul.mubr.bf16.gmra.mxu0 %v4827
        %v4950 = vpop.f32.mrf.mxu0
        %v4951 = vadd.f32 0.0, %v4950
        %v4952 = vpop.f32.mrf.mxu0
        %v4953 = vpop.f32.mrf.mxu0
        %v4954 = vadd.f32 0.0, %v4953
        %v4955 = vpop.f32.mrf.mxu0
        %4956 = vdwg.mxu0
        %v4957 = vadd.f32 %v4792, %v4951
        %v4958 = vadd.f32 %v4793, %v4954
        %v4959 = vld [vmem:[%s10] sm:$0x1]
        %v4961 = vlaneseq
        %v4962 = vshrl.u32 %v4961, 7
        %v4963 = vsub.s32 0, %v4962
        %v4964 = vrot.slane %v4959, %v4963
        %v4966 = vadd.f32 %v4957, %v4964
        %v4967 = vadd.f32 %v4958, %v4964
        %vm4968 = vcmp.ge.f32.partialorder %v4966, 0.0
        %vm4969 = vcmp.ge.f32.partialorder %v4967, 0.0
        %v4970 = vmul.f32 %v4966, 0.1
        %v4971 = vmul.f32 %v4967, 0.1
        %v4972 = vsel %vm4968, %v4966, %v4970
        %v4973 = vsel %vm4969, %v4967, %v4971
        %4974 = vst [vmem:[#allocation6] sm:$0xff] 0.0
        %vm4975 = vcmask 130048
        %4976 = vst.msk [vmem:[#allocation6 + $0x8] sm:$0xff] %vm4975, 0.0
        %4977 = vst [vmem:[#allocation6 + $0x10] sm:$0xff] 0.0
        %4978 = vst.msk [vmem:[#allocation6 + $0x18] sm:$0xff] %vm4975, 0.0
        %4979 = vst [vmem:[#allocation6 + $0x20] sm:$0x1] 0.0
        %vm4980 = vcmask 122880
        %4981 = vst.msk [vmem:[#allocation6 + $0x28] sm:$0x1] %vm4980, 0.0
        %v4984 = vrot.slane %v4972, 7
        %v4985 = vrot.slane %v4973, 7
        %v4986 = vsel %vm2558, %v4984, %v4985
        %4987 = vrot.lane.b32.xlu0 %v4984, 16
        %v4988 = vpop.permute.xlu0 %4987
        %4989 = vrot.lane.b32.xlu0 %v4986, 16
        %v4990 = vpop.permute.xlu0 %4989
        %vm4993 = vcmask 1047681
        %4994 = vst.msk [vmem:[#allocation6] sm:$0xfe] %vm4993, %v4988
        %vm4995 = vcmask 1047680
        %4996 = vst.msk [vmem:[#allocation6 + $0x10] sm:$0xff] %vm4995, %v4990
        %v4997 = vld [vmem:[#allocation6] sm:$0xff]
        %v4998 = vld [vmem:[#allocation6 + $0x10] sm:$0xff]
        %v4999 = vpack.c.bf16 %v4998, %v4997
        %v5000 = vld [vmem:[%s11] sm:$0xf]
        %v5001 = vld [vmem:[%s11 + $0x4] sm:$0xf]
        %v5002 = vld [vmem:[%s11 + $0x8] sm:$0xf]
        %v5003 = vld [vmem:[%s11 + $0xc] sm:$0xf]
        %v5004 = vld [vmem:[%s11 + $0x10] sm:$0xf]
        %v5005 = vld [vmem:[%s11 + $0x14] sm:$0xf]
        %v5006 = vld [vmem:[%s11 + $0x18] sm:$0xf]
        %v5007 = vld [vmem:[%s11 + $0x1c] sm:$0xf]
        %v5008 = vld [vmem:[%s11 + $0x20] sm:$0xf]
        %v5009 = vld [vmem:[%s11 + $0x24] sm:$0xf]
        %v5010 = vld [vmem:[%s11 + $0x28] sm:$0xf]
        %v5011 = vld [vmem:[%s11 + $0x2c] sm:$0xf]
        %v5012 = vld [vmem:[%s11 + $0x30] sm:$0xf]
        %v5013 = vld [vmem:[%s11 + $0x34] sm:$0xf]
        %v5014 = vld [vmem:[%s11 + $0x38] sm:$0xf]
        %v5015 = vld [vmem:[%s11 + $0x3c] sm:$0xf]
        %v5016 = vld [vmem:[#allocation6 + $0x8] sm:$0xff]
        %v5017 = vld [vmem:[#allocation6 + $0x18] sm:$0xff]
        %v5018 = vpack.c.bf16 %v5017, %v5016
        %s5019 = scalar_lea.vmem %s11, 64
        %v5020 = vld [vmem:[%s5019] sm:$0xf]
        %v5021 = vld [vmem:[%s5019 + $0x4] sm:$0xf]
        %v5022 = vld [vmem:[%s5019 + $0x8] sm:$0xf]
        %v5023 = vld [vmem:[%s5019 + $0xc] sm:$0xf]
        %v5024 = vld [vmem:[%s5019 + $0x10] sm:$0xf]
        %v5025 = vld [vmem:[%s5019 + $0x14] sm:$0xf]
        %v5026 = vld [vmem:[%s5019 + $0x18] sm:$0xf]
        %v5027 = vld [vmem:[%s5019 + $0x1c] sm:$0xf]
        %v5028 = vld [vmem:[%s5019 + $0x20] sm:$0xf]
        %v5029 = vld [vmem:[%s5019 + $0x24] sm:$0xf]
        %v5030 = vld [vmem:[%s5019 + $0x28] sm:$0xf]
        %v5031 = vld [vmem:[%s5019 + $0x2c] sm:$0xf]
        %v5032 = vld [vmem:[%s5019 + $0x30] sm:$0xf]
        %v5033 = vld [vmem:[%s5019 + $0x34] sm:$0xf]
        %v5034 = vld [vmem:[%s5019 + $0x38] sm:$0xf]
        %v5035 = vld [vmem:[%s5019 + $0x3c] sm:$0xf]
        %5038 = vrot.lane.b32.xlu0 %v4999, 112
        %v5039 = vpop.permute.xlu0 %5038
        %5040 = vrot.lane.b32.xlu0 %v5018, 112
        %v5041 = vpop.permute.xlu0 %5040
        %vm5042 = vcmask 916480
        %v5043 = vsel %vm5042, %v5039, %v5041
        %v5061 = vunpack.c.l.b16 %v5020
        %v5062 = vunpack.c.l.b16 %v5021
        %v5063 = vunpack.c.l.b16 %v5022
        %v5064 = vunpack.c.l.b16 %v5023
        %v5065 = vunpack.c.l.b16 %v5024
        %v5066 = vunpack.c.l.b16 %v5025
        %v5067 = vunpack.c.l.b16 %v5026
        %v5068 = vunpack.c.l.b16 %v5027
        %v5069 = vunpack.c.l.b16 %v5028
        %v5070 = vunpack.c.l.b16 %v5029
        %v5071 = vunpack.c.l.b16 %v5030
        %v5072 = vunpack.c.l.b16 %v5031
        %v5073 = vunpack.c.l.b16 %v5032
        %v5074 = vunpack.c.l.b16 %v5033
        %v5075 = vunpack.c.l.b16 %v5034
        %v5076 = vunpack.c.l.b16 %v5035
        %v5077 = vpack.c.b16 %v5062, %v5061
        %v5078 = vpack.c.b16 %v5064, %v5063
        %v5079 = vpack.c.b16 %v5066, %v5065
        %v5080 = vpack.c.b16 %v5068, %v5067
        %v5081 = vpack.c.b16 %v5070, %v5069
        %v5082 = vpack.c.b16 %v5072, %v5071
        %v5083 = vpack.c.b16 %v5074, %v5073
        %v5084 = vpack.c.b16 %v5076, %v5075
        %5093 = vmatprep.subr.bf16.mxu0 0
        %5094 = vmatpush1.bf16.msra.mxu0 %v5084
        %5095 = vmatprep.subr.bf16.mxu0 0
        %5096 = vmatpush1.bf16.msra.mxu0 %v5083
        %5097 = vmatprep.subr.bf16.mxu0 0
        %5098 = vmatpush1.bf16.msra.mxu0 %v5082
        %5099 = vmatprep.subr.bf16.mxu0 0
        %5100 = vmatpush1.bf16.msra.mxu0 %v5081
        %5101 = vmatprep.subr.bf16.mxu0 0
        %5102 = vmatpush1.bf16.msra.mxu0 %v5080
        %5103 = vmatprep.subr.bf16.mxu0 0
        %5104 = vmatpush1.bf16.msra.mxu0 %v5079
        %5105 = vmatprep.subr.bf16.mxu0 0
        %5106 = vmatpush1.bf16.msra.mxu0 %v5078
        %5107 = vmatprep.subr.bf16.mxu0 0
        %5108 = vmatpush1.bf16.msra.mxu0 %v5077
        %5109 = vmatprep.subr.bf16.mxu0 0
        %5110 = vmatpush2.bf16.msra.mxu0 0
        %5111 = vmatprep.subr.bf16.mxu0 0
        %5112 = vmatpush2.bf16.msra.mxu0 0
        %5113 = vmatprep.subr.bf16.mxu0 0
        %5114 = vmatpush2.bf16.msra.mxu0 0
        %5115 = vmatprep.subr.bf16.mxu0 0
        %5116 = vmatpush2.bf16.msra.mxu0 0
        %5117 = vmatprep.subr.bf16.mxu0 0
        %5118 = vmatpush2.bf16.msra.mxu0 0
        %5119 = vmatprep.subr.bf16.mxu0 0
        %5120 = vmatpush2.bf16.msra.mxu0 0
        %5121 = vmatprep.subr.bf16.mxu0 0
        %5122 = vmatpush2.bf16.msra.mxu0 0
        %5123 = vmatprep.subr.bf16.mxu0 0
        %5124 = vmatpush2.bf16.msra.mxu0 0
        %5125 = vmatprep.mubr.bf16.mxu0 0
        %5126 = vmatmul.mubr.bf16.gmra.mxu0 %v5043
        %v5127 = vpop.f32.mrf.mxu0
        %v5128 = vadd.f32 0.0, %v5127
        %v5129 = vpop.f32.mrf.mxu0
        %v5130 = vpop.f32.mrf.mxu0
        %v5131 = vadd.f32 0.0, %v5130
        %v5132 = vpop.f32.mrf.mxu0
        %5133 = vdwg.mxu0
        %v5150 = vunpack.c.l.b16 %v5000
        %v5151 = vunpack.c.l.b16 %v5001
        %v5152 = vunpack.c.l.b16 %v5002
        %v5153 = vunpack.c.l.b16 %v5003
        %v5154 = vunpack.c.l.b16 %v5004
        %v5155 = vunpack.c.l.b16 %v5005
        %v5156 = vunpack.c.l.b16 %v5006
        %v5157 = vunpack.c.l.b16 %v5007
        %v5158 = vunpack.c.l.b16 %v5008
        %v5159 = vunpack.c.l.b16 %v5009
        %v5160 = vunpack.c.l.b16 %v5010
        %v5161 = vunpack.c.l.b16 %v5011
        %v5162 = vunpack.c.l.b16 %v5012
        %v5163 = vunpack.c.l.b16 %v5013
        %v5164 = vunpack.c.l.b16 %v5014
        %v5165 = vunpack.c.l.b16 %v5015
        %v5166 = vpack.c.b16 %v5151, %v5150
        %v5167 = vpack.c.b16 %v5153, %v5152
        %v5168 = vpack.c.b16 %v5155, %v5154
        %v5169 = vpack.c.b16 %v5157, %v5156
        %v5170 = vpack.c.b16 %v5159, %v5158
        %v5171 = vpack.c.b16 %v5161, %v5160
        %v5172 = vpack.c.b16 %v5163, %v5162
        %v5173 = vpack.c.b16 %v5165, %v5164
        %5182 = vmatprep.subr.bf16.mxu0 0
        %5183 = vmatpush1.bf16.msra.mxu0 %v5173
        %5184 = vmatprep.subr.bf16.mxu0 0
        %5185 = vmatpush1.bf16.msra.mxu0 %v5172
        %5186 = vmatprep.subr.bf16.mxu0 0
        %5187 = vmatpush1.bf16.msra.mxu0 %v5171
        %5188 = vmatprep.subr.bf16.mxu0 0
        %5189 = vmatpush1.bf16.msra.mxu0 %v5170
        %5190 = vmatprep.subr.bf16.mxu0 0
        %5191 = vmatpush1.bf16.msra.mxu0 %v5169
        %5192 = vmatprep.subr.bf16.mxu0 0
        %5193 = vmatpush1.bf16.msra.mxu0 %v5168
        %5194 = vmatprep.subr.bf16.mxu0 0
        %5195 = vmatpush1.bf16.msra.mxu0 %v5167
        %5196 = vmatprep.subr.bf16.mxu0 0
        %5197 = vmatpush1.bf16.msra.mxu0 %v5166
        %5198 = vmatprep.subr.bf16.mxu0 0
        %5199 = vmatpush2.bf16.msra.mxu0 0
        %5200 = vmatprep.subr.bf16.mxu0 0
        %5201 = vmatpush2.bf16.msra.mxu0 0
        %5202 = vmatprep.subr.bf16.mxu0 0
        %5203 = vmatpush2.bf16.msra.mxu0 0
        %5204 = vmatprep.subr.bf16.mxu0 0
        %5205 = vmatpush2.bf16.msra.mxu0 0
        %5206 = vmatprep.subr.bf16.mxu0 0
        %5207 = vmatpush2.bf16.msra.mxu0 0
        %5208 = vmatprep.subr.bf16.mxu0 0
        %5209 = vmatpush2.bf16.msra.mxu0 0
        %5210 = vmatprep.subr.bf16.mxu0 0
        %5211 = vmatpush2.bf16.msra.mxu0 0
        %5212 = vmatprep.subr.bf16.mxu0 0
        %5213 = vmatpush2.bf16.msra.mxu0 0
        %5214 = vmatprep.mubr.bf16.mxu0 0
        %5215 = vmatmul.mubr.bf16.gmra.mxu0 %v4999
        %v5216 = vpop.f32.mrf.mxu0
        %v5217 = vadd.f32 %v5128, %v5216
        %v5218 = vpop.f32.mrf.mxu0
        %v5219 = vpop.f32.mrf.mxu0
        %v5220 = vadd.f32 %v5131, %v5219
        %v5221 = vpop.f32.mrf.mxu0
        %5222 = vdwg.mxu0
        %v5223 = vld [vmem:[#allocation6] sm:$0xfe]
        %v5224 = vld [vmem:[#allocation6 + $0x10] sm:$0xff]
        %v5225 = vld [vmem:[#allocation6 + $0x20] sm:$0x1]
        %v5226 = vpack.c.bf16 %v5224, %v5223
        %v5227 = vpack.c.bf16 %v5225, %v5225
        %s5228 = scalar_lea.vmem %s11, 128
        %v5229 = vld [vmem:[%s5228] sm:$0xf]
        %v5230 = vld [vmem:[%s5228 + $0x4] sm:$0xf]
        %v5231 = vld [vmem:[%s5228 + $0x8] sm:$0xf]
        %v5232 = vld [vmem:[%s5228 + $0xc] sm:$0xf]
        %v5233 = vld [vmem:[%s5228 + $0x10] sm:$0xf]
        %v5234 = vld [vmem:[%s5228 + $0x14] sm:$0xf]
        %v5235 = vld [vmem:[%s5228 + $0x18] sm:$0xf]
        %v5236 = vld [vmem:[%s5228 + $0x1c] sm:$0xf]
        %v5237 = vld [vmem:[%s5228 + $0x20] sm:$0xf]
        %v5238 = vld [vmem:[%s5228 + $0x24] sm:$0xf]
        %v5239 = vld [vmem:[%s5228 + $0x28] sm:$0xf]
        %v5240 = vld [vmem:[%s5228 + $0x2c] sm:$0xf]
        %v5241 = vld [vmem:[%s5228 + $0x30] sm:$0xf]
        %v5242 = vld [vmem:[%s5228 + $0x34] sm:$0xf]
        %v5243 = vld [vmem:[%s5228 + $0x38] sm:$0xf]
        %v5244 = vld [vmem:[%s5228 + $0x3c] sm:$0xf]
        %vm5245 = vsmask.f32 7424
        %v5247 = vshrl.u32 %v5226, 16
        %v5249 = vshll.u32 %v5226, 16
        %v5251 = vrot.slane %v5249, 1
        %v5252 = vor.u32 %v5247, %v5251
        %v5254 = vshll.u32 %v5227, 16
        %v5256 = vrot.slane %v5254, 1
        %v5257 = vsel %vm5245, %v5252, %v5256
        %v5275 = vunpack.c.l.b16 %v5229
        %v5276 = vunpack.c.l.b16 %v5230
        %v5277 = vunpack.c.l.b16 %v5231
        %v5278 = vunpack.c.l.b16 %v5232
        %v5279 = vunpack.c.l.b16 %v5233
        %v5280 = vunpack.c.l.b16 %v5234
        %v5281 = vunpack.c.l.b16 %v5235
        %v5282 = vunpack.c.l.b16 %v5236
        %v5283 = vunpack.c.l.b16 %v5237
        %v5284 = vunpack.c.l.b16 %v5238
        %v5285 = vunpack.c.l.b16 %v5239
        %v5286 = vunpack.c.l.b16 %v5240
        %v5287 = vunpack.c.l.b16 %v5241
        %v5288 = vunpack.c.l.b16 %v5242
        %v5289 = vunpack.c.l.b16 %v5243
        %v5290 = vunpack.c.l.b16 %v5244
        %v5291 = vpack.c.b16 %v5276, %v5275
        %v5292 = vpack.c.b16 %v5278, %v5277
        %v5293 = vpack.c.b16 %v5280, %v5279
        %v5294 = vpack.c.b16 %v5282, %v5281
        %v5295 = vpack.c.b16 %v5284, %v5283
        %v5296 = vpack.c.b16 %v5286, %v5285
        %v5297 = vpack.c.b16 %v5288, %v5287
        %v5298 = vpack.c.b16 %v5290, %v5289
        %5307 = vmatprep.subr.bf16.mxu0 0
        %5308 = vmatpush1.bf16.msra.mxu0 %v5298
        %5309 = vmatprep.subr.bf16.mxu0 0
        %5310 = vmatpush1.bf16.msra.mxu0 %v5297
        %5311 = vmatprep.subr.bf16.mxu0 0
        %5312 = vmatpush1.bf16.msra.mxu0 %v5296
        %5313 = vmatprep.subr.bf16.mxu0 0
        %5314 = vmatpush1.bf16.msra.mxu0 %v5295
        %5315 = vmatprep.subr.bf16.mxu0 0
        %5316 = vmatpush1.bf16.msra.mxu0 %v5294
        %5317 = vmatprep.subr.bf16.mxu0 0
        %5318 = vmatpush1.bf16.msra.mxu0 %v5293
        %5319 = vmatprep.subr.bf16.mxu0 0
        %5320 = vmatpush1.bf16.msra.mxu0 %v5292
        %5321 = vmatprep.subr.bf16.mxu0 0
        %5322 = vmatpush1.bf16.msra.mxu0 %v5291
        %5323 = vmatprep.subr.bf16.mxu0 0
        %5324 = vmatpush2.bf16.msra.mxu0 0
        %5325 = vmatprep.subr.bf16.mxu0 0
        %5326 = vmatpush2.bf16.msra.mxu0 0
        %5327 = vmatprep.subr.bf16.mxu0 0
        %5328 = vmatpush2.bf16.msra.mxu0 0
        %5329 = vmatprep.subr.bf16.mxu0 0
        %5330 = vmatpush2.bf16.msra.mxu0 0
        %5331 = vmatprep.subr.bf16.mxu0 0
        %5332 = vmatpush2.bf16.msra.mxu0 0
        %5333 = vmatprep.subr.bf16.mxu0 0
        %5334 = vmatpush2.bf16.msra.mxu0 0
        %5335 = vmatprep.subr.bf16.mxu0 0
        %5336 = vmatpush2.bf16.msra.mxu0 0
        %5337 = vmatprep.subr.bf16.mxu0 0
        %5338 = vmatpush2.bf16.msra.mxu0 0
        %5339 = vmatprep.mubr.bf16.mxu0 0
        %5340 = vmatmul.mubr.bf16.gmra.mxu0 %v5257
        %v5341 = vpop.f32.mrf.mxu0
        %v5342 = vadd.f32 0.0, %v5341
        %v5343 = vpop.f32.mrf.mxu0
        %v5344 = vpop.f32.mrf.mxu0
        %v5345 = vadd.f32 0.0, %v5344
        %v5346 = vpop.f32.mrf.mxu0
        %5347 = vdwg.mxu0
        %v5348 = vadd.f32 %v5217, %v5342
        %v5349 = vadd.f32 %v5220, %v5345
        %v5350 = vld [vmem:[#allocation6] sm:$0xfe]
        %v5351 = vld [vmem:[#allocation6 + $0x8] sm:$0xfe]
        %v5352 = vld [vmem:[#allocation6 + $0x10] sm:$0xff]
        %v5353 = vld [vmem:[#allocation6 + $0x18] sm:$0xff]
        %v5354 = vld [vmem:[#allocation6 + $0x20] sm:$0x1]
        %v5355 = vld [vmem:[#allocation6 + $0x28] sm:$0x1]
        %v5356 = vpack.c.bf16 %v5352, %v5350
        %v5357 = vpack.c.bf16 %v5353, %v5351
        %v5358 = vpack.c.bf16 %v5354, %v5354
        %v5359 = vpack.c.bf16 %v5355, %v5355
        %s5360 = scalar_lea.vmem %s11, 192
        %v5361 = vld [vmem:[%s5360] sm:$0xf]
        %v5362 = vld [vmem:[%s5360 + $0x4] sm:$0xf]
        %v5363 = vld [vmem:[%s5360 + $0x8] sm:$0xf]
        %v5364 = vld [vmem:[%s5360 + $0xc] sm:$0xf]
        %v5365 = vld [vmem:[%s5360 + $0x10] sm:$0xf]
        %v5366 = vld [vmem:[%s5360 + $0x14] sm:$0xf]
        %v5367 = vld [vmem:[%s5360 + $0x18] sm:$0xf]
        %v5368 = vld [vmem:[%s5360 + $0x1c] sm:$0xf]
        %v5369 = vld [vmem:[%s5360 + $0x20] sm:$0xf]
        %v5370 = vld [vmem:[%s5360 + $0x24] sm:$0xf]
        %v5371 = vld [vmem:[%s5360 + $0x28] sm:$0xf]
        %v5372 = vld [vmem:[%s5360 + $0x2c] sm:$0xf]
        %v5373 = vld [vmem:[%s5360 + $0x30] sm:$0xf]
        %v5374 = vld [vmem:[%s5360 + $0x34] sm:$0xf]
        %v5375 = vld [vmem:[%s5360 + $0x38] sm:$0xf]
        %v5376 = vld [vmem:[%s5360 + $0x3c] sm:$0xf]
        %v5378 = vshrl.u32 %v5356, 16
        %v5380 = vshll.u32 %v5356, 16
        %v5382 = vrot.slane %v5380, 1
        %v5383 = vor.u32 %v5378, %v5382
        %v5385 = vshll.u32 %v5358, 16
        %v5387 = vrot.slane %v5385, 1
        %v5388 = vsel %vm5245, %v5383, %v5387
        %v5390 = vshrl.u32 %v5357, 16
        %v5392 = vshll.u32 %v5357, 16
        %v5394 = vrot.slane %v5392, 1
        %v5395 = vor.u32 %v5390, %v5394
        %v5397 = vshll.u32 %v5359, 16
        %v5399 = vrot.slane %v5397, 1
        %v5400 = vsel %vm5245, %v5395, %v5399
        %5401 = vrot.lane.b32.xlu0 %v5388, 112
        %v5402 = vpop.permute.xlu0 %5401
        %5403 = vrot.lane.b32.xlu0 %v5400, 112
        %v5404 = vpop.permute.xlu0 %5403
        %v5405 = vsel %vm5042, %v5402, %v5404
        %v5423 = vunpack.c.l.b16 %v5361
        %v5424 = vunpack.c.l.b16 %v5362
        %v5425 = vunpack.c.l.b16 %v5363
        %v5426 = vunpack.c.l.b16 %v5364
        %v5427 = vunpack.c.l.b16 %v5365
        %v5428 = vunpack.c.l.b16 %v5366
        %v5429 = vunpack.c.l.b16 %v5367
        %v5430 = vunpack.c.l.b16 %v5368
        %v5431 = vunpack.c.l.b16 %v5369
        %v5432 = vunpack.c.l.b16 %v5370
        %v5433 = vunpack.c.l.b16 %v5371
        %v5434 = vunpack.c.l.b16 %v5372
        %v5435 = vunpack.c.l.b16 %v5373
        %v5436 = vunpack.c.l.b16 %v5374
        %v5437 = vunpack.c.l.b16 %v5375
        %v5438 = vunpack.c.l.b16 %v5376
        %v5439 = vpack.c.b16 %v5424, %v5423
        %v5440 = vpack.c.b16 %v5426, %v5425
        %v5441 = vpack.c.b16 %v5428, %v5427
        %v5442 = vpack.c.b16 %v5430, %v5429
        %v5443 = vpack.c.b16 %v5432, %v5431
        %v5444 = vpack.c.b16 %v5434, %v5433
        %v5445 = vpack.c.b16 %v5436, %v5435
        %v5446 = vpack.c.b16 %v5438, %v5437
        %5455 = vmatprep.subr.bf16.mxu0 0
        %5456 = vmatpush1.bf16.msra.mxu0 %v5446
        %5457 = vmatprep.subr.bf16.mxu0 0
        %5458 = vmatpush1.bf16.msra.mxu0 %v5445
        %5459 = vmatprep.subr.bf16.mxu0 0
        %5460 = vmatpush1.bf16.msra.mxu0 %v5444
        %5461 = vmatprep.subr.bf16.mxu0 0
        %5462 = vmatpush1.bf16.msra.mxu0 %v5443
        %5463 = vmatprep.subr.bf16.mxu0 0
        %5464 = vmatpush1.bf16.msra.mxu0 %v5442
        %5465 = vmatprep.subr.bf16.mxu0 0
        %5466 = vmatpush1.bf16.msra.mxu0 %v5441
        %5467 = vmatprep.subr.bf16.mxu0 0
        %5468 = vmatpush1.bf16.msra.mxu0 %v5440
        %5469 = vmatprep.subr.bf16.mxu0 0
        %5470 = vmatpush1.bf16.msra.mxu0 %v5439
        %5471 = vmatprep.subr.bf16.mxu0 0
        %5472 = vmatpush2.bf16.msra.mxu0 0
        %5473 = vmatprep.subr.bf16.mxu0 0
        %5474 = vmatpush2.bf16.msra.mxu0 0
        %5475 = vmatprep.subr.bf16.mxu0 0
        %5476 = vmatpush2.bf16.msra.mxu0 0
        %5477 = vmatprep.subr.bf16.mxu0 0
        %5478 = vmatpush2.bf16.msra.mxu0 0
        %5479 = vmatprep.subr.bf16.mxu0 0
        %5480 = vmatpush2.bf16.msra.mxu0 0
        %5481 = vmatprep.subr.bf16.mxu0 0
        %5482 = vmatpush2.bf16.msra.mxu0 0
        %5483 = vmatprep.subr.bf16.mxu0 0
        %5484 = vmatpush2.bf16.msra.mxu0 0
        %5485 = vmatprep.subr.bf16.mxu0 0
        %5486 = vmatpush2.bf16.msra.mxu0 0
        %5487 = vmatprep.mubr.bf16.mxu0 0
        %5488 = vmatmul.mubr.bf16.gmra.mxu0 %v5405
        %v5489 = vpop.f32.mrf.mxu0
        %v5490 = vadd.f32 0.0, %v5489
        %v5491 = vpop.f32.mrf.mxu0
        %v5492 = vpop.f32.mrf.mxu0
        %v5493 = vadd.f32 0.0, %v5492
        %v5494 = vpop.f32.mrf.mxu0
        %5495 = vdwg.mxu0
        %v5496 = vadd.f32 %v5348, %v5490
        %v5497 = vadd.f32 %v5349, %v5493
        %v5498 = vld [vmem:[%s12] sm:$0x1]
        %v5500 = vlaneseq
        %v5501 = vshrl.u32 %v5500, 7
        %v5502 = vsub.s32 0, %v5501
        %v5503 = vrot.slane %v5498, %v5502
        %v5505 = vadd.f32 %v5496, %v5503
        %v5506 = vadd.f32 %v5497, %v5503
        %vm5507 = vcmask 64512
        %5508 = vst.msk [vmem:[#allocation7] sm:$0xff] %vm5507, %v5505
        %5509 = vst.msk [vmem:[#allocation7 + $0x8] sm:$0xff] %vm5507, %v5506
        %v5510 = vld [vmem:[#allocation7] sm:$0xff]
        %v5511 = vld [vmem:[#allocation7 + $0x8] sm:$0xff]
        %5512 = vxpose.xlu0.b32.start [1/16] %v5510, 128
        %5513 = vxpose.xlu0.b32.cont [2/16] 0.0, 128
        %5514 = vxpose.xlu0.b32.cont [3/16] 0.0, 128
        %5515 = vxpose.xlu0.b32.cont [4/16] 0.0, 128
        %5516 = vxpose.xlu0.b32.cont [5/16] 0.0, 128
        %5517 = vxpose.xlu0.b32.cont [6/16] 0.0, 128
        %5518 = vxpose.xlu0.b32.cont [7/16] 0.0, 128
        %5519 = vxpose.xlu0.b32.cont [8/16] 0.0, 128
        %5520 = vxpose.xlu0.b32.cont [9/16] 0.0, 128
        %5521 = vxpose.xlu0.b32.cont [10/16] 0.0, 128
        %5522 = vxpose.xlu0.b32.cont [11/16] 0.0, 128
        %5523 = vxpose.xlu0.b32.cont [12/16] 0.0, 128
        %5524 = vxpose.xlu0.b32.cont [13/16] 0.0, 128
        %5525 = vxpose.xlu0.b32.cont [14/16] 0.0, 128
        %5526 = vxpose.xlu0.b32.cont [15/16] 0.0, 128
        %5527 = vxpose.xlu0.b32.end [16/16] 0.0, 128
        %v5528 = vpop.trf.xlu0
        %v5529 = vpop.trf.xlu0
        %v5530 = vpop.trf.xlu0
        %v5531 = vpop.trf.xlu0
        %v5532 = vpop.trf.xlu0
        %v5533 = vpop.trf.xlu0
        %v5534 = vpop.trf.xlu0
        %v5535 = vpop.trf.xlu0
        %v5536 = vpop.trf.xlu0
        %v5537 = vpop.trf.xlu0
        %v5538 = vpop.trf.xlu0
        %v5539 = vpop.trf.xlu0
        %v5540 = vpop.trf.xlu0
        %v5541 = vpop.trf.xlu0
        %v5542 = vpop.trf.xlu0
        %v5543 = vpop.trf.xlu0
        %v5545 = vsel %vm5507, %v5528, 0
        %5547 = vmatprep.subr.mxu0 0.0
        %5548 = vmatpush1.msra.mxu0 0.0
        %5549 = vmatprep.subr.mxu0 0.0
        %5550 = vmatpush1.msra.mxu0 0.0
        %5551 = vmatprep.subr.mxu0 0.0
        %5552 = vmatpush1.msra.mxu0 0.0
        %5553 = vmatprep.subr.mxu0 0.0
        %5554 = vmatpush1.msra.mxu0 0.0
        %5555 = vmatprep.subr.mxu0 0.0
        %5556 = vmatpush1.msra.mxu0 0.0
        %5557 = vmatprep.subr.mxu0 0.0
        %5558 = vmatpush1.msra.mxu0 0.0
        %5559 = vmatprep.subr.mxu0 0.0
        %5560 = vmatpush1.msra.mxu0 0.0
        %5561 = vmatprep.subr.mxu0 0.0
        %5562 = vmatpush1.msra.mxu0 0.0
        %5563 = vmatprep.subr.mxu0 0.0
        %5564 = vmatpush1.msra.mxu0 0.0
        %5565 = vmatprep.subr.mxu0 0.0
        %5566 = vmatpush1.msra.mxu0 0.0
        %5567 = vmatprep.subr.mxu0 0.0
        %5568 = vmatpush1.msra.mxu0 0.0
        %5569 = vmatprep.subr.mxu0 0.0
        %5570 = vmatpush1.msra.mxu0 0.0
        %5571 = vmatprep.subr.mxu0 0.0
        %5572 = vmatpush1.msra.mxu0 0.0
        %5573 = vmatprep.subr.mxu0 0.0
        %5574 = vmatpush1.msra.mxu0 0.0
        %5575 = vmatprep.subr.mxu0 0.0
        %5576 = vmatpush1.msra.mxu0 0.0
        %5577 = vmatprep.subr.mxu0 0.0
        %5578 = vmatpush1.msra.mxu0 %v5511
        %5579 = vmatprep.subr.mxu0 0.0
        %5580 = vmatpush2.msra.mxu0 0.0
        %5581 = vmatprep.subr.mxu0 0.0
        %5582 = vmatpush2.msra.mxu0 0.0
        %5583 = vmatprep.subr.mxu0 0.0
        %5584 = vmatpush2.msra.mxu0 0.0
        %5585 = vmatprep.subr.mxu0 0.0
        %5586 = vmatpush2.msra.mxu0 0.0
        %5587 = vmatprep.subr.mxu0 0.0
        %5588 = vmatpush2.msra.mxu0 0.0
        %5589 = vmatprep.subr.mxu0 0.0
        %5590 = vmatpush2.msra.mxu0 0.0
        %5591 = vmatprep.subr.mxu0 0.0
        %5592 = vmatpush2.msra.mxu0 0.0
        %5593 = vmatprep.subr.mxu0 0.0
        %5594 = vmatpush2.msra.mxu0 0.0
        %5595 = vmatprep.subr.mxu0 0.0
        %5596 = vmatpush2.msra.mxu0 0.0
        %5597 = vmatprep.subr.mxu0 0.0
        %5598 = vmatpush2.msra.mxu0 0.0
        %5599 = vmatprep.subr.mxu0 0.0
        %5600 = vmatpush2.msra.mxu0 0.0
        %5601 = vmatprep.subr.mxu0 0.0
        %5602 = vmatpush2.msra.mxu0 0.0
        %5603 = vmatprep.subr.mxu0 0.0
        %5604 = vmatpush2.msra.mxu0 0.0
        %5605 = vmatprep.subr.mxu0 0.0
        %5606 = vmatpush2.msra.mxu0 0.0
        %5607 = vmatprep.subr.mxu0 0.0
        %5608 = vmatpush2.msra.mxu0 0.0
        %5609 = vmatprep.subr.mxu0 0.0
        %5610 = vmatpush2.msra.mxu0 0.0
        %5611 = vmatprep.mubr.f32.mxu0 0.0
        %5612 = vmatmul.mubr.f32.gmra.mxu0 %v5545
        %v5613 = vpop.f32.mrf.mxu0
        %v5614 = vadd.f32 0.0, %v5613
        %v5615 = vpop.f32.mrf.mxu0
        %5616 = vdwg.mxu0
        %5617 = vxpose.xlu0.b32.start [1/16] %v5511, 128
        %5618 = vxpose.xlu0.b32.cont [2/16] 0.0, 128
        %5619 = vxpose.xlu0.b32.cont [3/16] 0.0, 128
        %5620 = vxpose.xlu0.b32.cont [4/16] 0.0, 128
        %5621 = vxpose.xlu0.b32.cont [5/16] 0.0, 128
        %5622 = vxpose.xlu0.b32.cont [6/16] 0.0, 128
        %5623 = vxpose.xlu0.b32.cont [7/16] 0.0, 128
        %5624 = vxpose.xlu0.b32.cont [8/16] 0.0, 128
        %5625 = vxpose.xlu0.b32.cont [9/16] 0.0, 128
        %5626 = vxpose.xlu0.b32.cont [10/16] 0.0, 128
        %5627 = vxpose.xlu0.b32.cont [11/16] 0.0, 128
        %5628 = vxpose.xlu0.b32.cont [12/16] 0.0, 128
        %5629 = vxpose.xlu0.b32.cont [13/16] 0.0, 128
        %5630 = vxpose.xlu0.b32.cont [14/16] 0.0, 128
        %5631 = vxpose.xlu0.b32.cont [15/16] 0.0, 128
        %5632 = vxpose.xlu0.b32.end [16/16] 0.0, 128
        %v5633 = vpop.trf.xlu0
        %v5634 = vpop.trf.xlu0
        %v5635 = vpop.trf.xlu0
        %v5636 = vpop.trf.xlu0
        %v5637 = vpop.trf.xlu0
        %v5638 = vpop.trf.xlu0
        %v5639 = vpop.trf.xlu0
        %v5640 = vpop.trf.xlu0
        %v5641 = vpop.trf.xlu0
        %v5642 = vpop.trf.xlu0
        %v5643 = vpop.trf.xlu0
        %v5644 = vpop.trf.xlu0
        %v5645 = vpop.trf.xlu0
        %v5646 = vpop.trf.xlu0
        %v5647 = vpop.trf.xlu0
        %v5648 = vpop.trf.xlu0
        %v5650 = vsel %vm5507, %v5633, 0
        %5652 = vmatprep.subr.mxu0 0.0
        %5653 = vmatpush1.msra.mxu0 0.0
        %5654 = vmatprep.subr.mxu0 0.0
        %5655 = vmatpush1.msra.mxu0 0.0
        %5656 = vmatprep.subr.mxu0 0.0
        %5657 = vmatpush1.msra.mxu0 0.0
        %5658 = vmatprep.subr.mxu0 0.0
        %5659 = vmatpush1.msra.mxu0 0.0
        %5660 = vmatprep.subr.mxu0 0.0
        %5661 = vmatpush1.msra.mxu0 0.0
        %5662 = vmatprep.subr.mxu0 0.0
        %5663 = vmatpush1.msra.mxu0 0.0
        %5664 = vmatprep.subr.mxu0 0.0
        %5665 = vmatpush1.msra.mxu0 0.0
        %5666 = vmatprep.subr.mxu0 0.0
        %5667 = vmatpush1.msra.mxu0 0.0
        %5668 = vmatprep.subr.mxu0 0.0
        %5669 = vmatpush1.msra.mxu0 0.0
        %5670 = vmatprep.subr.mxu0 0.0
        %5671 = vmatpush1.msra.mxu0 0.0
        %5672 = vmatprep.subr.mxu0 0.0
        %5673 = vmatpush1.msra.mxu0 0.0
        %5674 = vmatprep.subr.mxu0 0.0
        %5675 = vmatpush1.msra.mxu0 0.0
        %5676 = vmatprep.subr.mxu0 0.0
        %5677 = vmatpush1.msra.mxu0 0.0
        %5678 = vmatprep.subr.mxu0 0.0
        %5679 = vmatpush1.msra.mxu0 0.0
        %5680 = vmatprep.subr.mxu0 0.0
        %5681 = vmatpush1.msra.mxu0 0.0
        %5682 = vmatprep.subr.mxu0 0.0
        %5683 = vmatpush1.msra.mxu0 %v5510
        %5684 = vmatprep.subr.mxu0 0.0
        %5685 = vmatpush2.msra.mxu0 0.0
        %5686 = vmatprep.subr.mxu0 0.0
        %5687 = vmatpush2.msra.mxu0 0.0
        %5688 = vmatprep.subr.mxu0 0.0
        %5689 = vmatpush2.msra.mxu0 0.0
        %5690 = vmatprep.subr.mxu0 0.0
        %5691 = vmatpush2.msra.mxu0 0.0
        %5692 = vmatprep.subr.mxu0 0.0
        %5693 = vmatpush2.msra.mxu0 0.0
        %5694 = vmatprep.subr.mxu0 0.0
        %5695 = vmatpush2.msra.mxu0 0.0
        %5696 = vmatprep.subr.mxu0 0.0
        %5697 = vmatpush2.msra.mxu0 0.0
        %5698 = vmatprep.subr.mxu0 0.0
        %5699 = vmatpush2.msra.mxu0 0.0
        %5700 = vmatprep.subr.mxu0 0.0
        %5701 = vmatpush2.msra.mxu0 0.0
        %5702 = vmatprep.subr.mxu0 0.0
        %5703 = vmatpush2.msra.mxu0 0.0
        %5704 = vmatprep.subr.mxu0 0.0
        %5705 = vmatpush2.msra.mxu0 0.0
        %5706 = vmatprep.subr.mxu0 0.0
        %5707 = vmatpush2.msra.mxu0 0.0
        %5708 = vmatprep.subr.mxu0 0.0
        %5709 = vmatpush2.msra.mxu0 0.0
        %5710 = vmatprep.subr.mxu0 0.0
        %5711 = vmatpush2.msra.mxu0 0.0
        %5712 = vmatprep.subr.mxu0 0.0
        %5713 = vmatpush2.msra.mxu0 0.0
        %5714 = vmatprep.subr.mxu0 0.0
        %5715 = vmatpush2.msra.mxu0 0.0
        %5716 = vmatprep.mubr.f32.mxu0 0.0
        %5717 = vmatmul.mubr.f32.gmra.mxu0 %v5650
        %v5718 = vpop.f32.mrf.mxu0
        %v5719 = vadd.f32 0.0, %v5718
        %v5720 = vpop.f32.mrf.mxu0
        %5721 = vdwg.mxu0
        %v5722 = vsub.f32 %v5614, %v5719
        %v5723 = vlaneseq
        %v5724 = vshrl.u32 %v5723, 7
        %v5725 = vlaneseq
        %v5726 = vand.u32 %v5725, 127
        %vm5727 = vcmp.eq.s32.totalorder %v5724, %v5726
        %v5728 = vsel %vm5727, 1, 0
        %v5729 = vcvt.s32.f32 %v5728
        %5730 = vxpose.xlu0.b32.start [1/16] %v5510, 128
        %5731 = vxpose.xlu0.b32.cont [2/16] %v5511, 128
        %5732 = vxpose.xlu0.b32.cont [3/16] 0.0, 128
        %5733 = vxpose.xlu0.b32.cont [4/16] 0.0, 128
        %5734 = vxpose.xlu0.b32.cont [5/16] 0.0, 128
        %5735 = vxpose.xlu0.b32.cont [6/16] 0.0, 128
        %5736 = vxpose.xlu0.b32.cont [7/16] 0.0, 128
        %5737 = vxpose.xlu0.b32.cont [8/16] 0.0, 128
        %5738 = vxpose.xlu0.b32.cont [9/16] 0.0, 128
        %5739 = vxpose.xlu0.b32.cont [10/16] 0.0, 128
        %5740 = vxpose.xlu0.b32.cont [11/16] 0.0, 128
        %5741 = vxpose.xlu0.b32.cont [12/16] 0.0, 128
        %5742 = vxpose.xlu0.b32.cont [13/16] 0.0, 128
        %5743 = vxpose.xlu0.b32.cont [14/16] 0.0, 128
        %5744 = vxpose.xlu0.b32.cont [15/16] 0.0, 128
        %5745 = vxpose.xlu0.b32.end [16/16] 0.0, 128
        %v5746 = vpop.trf.xlu0
        %v5747 = vpop.trf.xlu0
        %v5748 = vpop.trf.xlu0
        %v5749 = vpop.trf.xlu0
        %v5750 = vpop.trf.xlu0
        %v5751 = vpop.trf.xlu0
        %v5752 = vpop.trf.xlu0
        %v5753 = vpop.trf.xlu0
        %v5754 = vpop.trf.xlu0
        %v5755 = vpop.trf.xlu0
        %v5756 = vpop.trf.xlu0
        %v5757 = vpop.trf.xlu0
        %v5758 = vpop.trf.xlu0
        %v5759 = vpop.trf.xlu0
        %v5760 = vpop.trf.xlu0
        %v5761 = vpop.trf.xlu0
        %v5763 = vsel %vm4975, %v5746, 0
        %5765 = vmatprep.subr.mxu0 0.0
        %5766 = vmatpush1.msra.mxu0 0.0
        %5767 = vmatprep.subr.mxu0 0.0
        %5768 = vmatpush1.msra.mxu0 0.0
        %5769 = vmatprep.subr.mxu0 0.0
        %5770 = vmatpush1.msra.mxu0 0.0
        %5771 = vmatprep.subr.mxu0 0.0
        %5772 = vmatpush1.msra.mxu0 0.0
        %5773 = vmatprep.subr.mxu0 0.0
        %5774 = vmatpush1.msra.mxu0 0.0
        %5775 = vmatprep.subr.mxu0 0.0
        %5776 = vmatpush1.msra.mxu0 0.0
        %5777 = vmatprep.subr.mxu0 0.0
        %5778 = vmatpush1.msra.mxu0 0.0
        %5779 = vmatprep.subr.mxu0 0.0
        %5780 = vmatpush1.msra.mxu0 0.0
        %5781 = vmatprep.subr.mxu0 0.0
        %5782 = vmatpush1.msra.mxu0 0.0
        %5783 = vmatprep.subr.mxu0 0.0
        %5784 = vmatpush1.msra.mxu0 0.0
        %5785 = vmatprep.subr.mxu0 0.0
        %5786 = vmatpush1.msra.mxu0 0.0
        %5787 = vmatprep.subr.mxu0 0.0
        %5788 = vmatpush1.msra.mxu0 0.0
        %5789 = vmatprep.subr.mxu0 0.0
        %5790 = vmatpush1.msra.mxu0 0.0
        %5791 = vmatprep.subr.mxu0 0.0
        %5792 = vmatpush1.msra.mxu0 0.0
        %5793 = vmatprep.subr.mxu0 0.0
        %5794 = vmatpush1.msra.mxu0 %v5511
        %5795 = vmatprep.subr.mxu0 0.0
        %5796 = vmatpush1.msra.mxu0 %v5510
        %5797 = vmatprep.subr.mxu0 0.0
        %5798 = vmatpush2.msra.mxu0 0.0
        %5799 = vmatprep.subr.mxu0 0.0
        %5800 = vmatpush2.msra.mxu0 0.0
        %5801 = vmatprep.subr.mxu0 0.0
        %5802 = vmatpush2.msra.mxu0 0.0
        %5803 = vmatprep.subr.mxu0 0.0
        %5804 = vmatpush2.msra.mxu0 0.0
        %5805 = vmatprep.subr.mxu0 0.0
        %5806 = vmatpush2.msra.mxu0 0.0
        %5807 = vmatprep.subr.mxu0 0.0
        %5808 = vmatpush2.msra.mxu0 0.0
        %5809 = vmatprep.subr.mxu0 0.0
        %5810 = vmatpush2.msra.mxu0 0.0
        %5811 = vmatprep.subr.mxu0 0.0
        %5812 = vmatpush2.msra.mxu0 0.0
        %5813 = vmatprep.subr.mxu0 0.0
        %5814 = vmatpush2.msra.mxu0 0.0
        %5815 = vmatprep.subr.mxu0 0.0
        %5816 = vmatpush2.msra.mxu0 0.0
        %5817 = vmatprep.subr.mxu0 0.0
        %5818 = vmatpush2.msra.mxu0 0.0
        %5819 = vmatprep.subr.mxu0 0.0
        %5820 = vmatpush2.msra.mxu0 0.0
        %5821 = vmatprep.subr.mxu0 0.0
        %5822 = vmatpush2.msra.mxu0 0.0
        %5823 = vmatprep.subr.mxu0 0.0
        %5824 = vmatpush2.msra.mxu0 0.0
        %5825 = vmatprep.subr.mxu0 0.0
        %5826 = vmatpush2.msra.mxu0 0.0
        %5827 = vmatprep.subr.mxu0 0.0
        %5828 = vmatpush2.msra.mxu0 0.0
        %5829 = vmatprep.mubr.f32.mxu0 0.0
        %5830 = vmatmul.mubr.f32.gmra.mxu0 %v5763
        %v5831 = vpop.f32.mrf.mxu0
        %v5832 = vadd.f32 %v5729, %v5831
        %v5833 = vpop.f32.mrf.mxu0
        %5834 = vdwg.mxu0
        %5835 = vst.msk [vmem:[%s464] sm:$0xff] %vm5507, %v5832
        %5836 = vst.msk [vmem:[%s471] sm:$0xff] %vm5507, %v5722
        %s5837 = sand.u32 %s318, 1
        %s5838 = scalar_lea.sflag [#allocation9], %s5837
        %s5839 = sand.u32 %s318, 1
        %s5840 = smul.addr %s5839, 8
        %s5841 = scalar_lea.vmem [#allocation8], %s5840
        %s5842 = sand.u32 %s344, 1
        %s5843 = scalar_lea.sflag [#allocation11], %s5842
        %s5844 = sand.u32 %s344, 1
        %s5845 = smul.addr %s5844, 8
        %s5846 = scalar_lea.vmem [#allocation10], %s5845
        // Predicated region
        $region73: #{forward.1} parent=71 // pred_check
          %p5847 = pneg %p328
        $region74: #{forward.1} parent=71 // pred_check_branch
          %5849 = sbr.rel (%p5847) target = $region76
        $region75: #{forward.1} parent=71 // pred_region
          %s5851 = ssub.s32 128, 128
          %5852 = vsyncadd %s5838, %s5851
          %s5853 = smul.addr %s32, 128
          %s5854 = scalar_lea.hbm %s13, %s5853
          %s5856 = sshll.u32 %s5841, 4
          %s5857 = int_to_ptr.vmem [resolvable:$true] %s5856
          %5859 = dma.vmem_to_hbm [thread:$0]  %s5857, 128, %s5854, %s5838
        $region76: #{forward.1} parent=71 // pred_fallthru
          _
        // Predicated region
        $region77: #{forward.1} parent=71 // pred_check
          %p5860 = pneg %p354
        $region78: #{forward.1} parent=71 // pred_check_branch
          %5862 = sbr.rel (%p5860) target = $region80
        $region79: #{forward.1} parent=71 // pred_region
          %s5864 = ssub.s32 128, 128
          %5865 = vsyncadd %s5843, %s5864
          %s5866 = smul.addr %s32, 128
          %s5867 = scalar_lea.hbm %s14, %s5866
          %s5869 = sshll.u32 %s5846, 4
          %s5870 = int_to_ptr.vmem [resolvable:$true] %s5869
          %5872 = dma.vmem_to_hbm [thread:$0]  %s5870, 128, %s5867, %s5843
        $region80: #{forward.1} parent=71 // pred_fallthru
          _
      $region72: #{forward.1} parent=5 // pred_fallthru
        _
      %p5873 = scmp.le.s32.totalorder 2, %s27
      // Predicated region
      $region81: #{forward.1} parent=5 // pred_check
        %p5874 = pneg %p5873
      $region82: #{forward.1} parent=5 // pred_check_branch
        %5876 = sbr.rel (%p5874) target = $region84
      $region83: #{forward.1} parent=5 // pred_region
        %s5877 = ssub.s32 %s27, 2
        // Predicated region
        $region85: #{forward.1} parent=83 // pred_check
          %p5878 = pneg %p334
        $region86: #{forward.1} parent=83 // pred_check_branch
          %5880 = sbr.rel (%p5878) target = $region88
        $region87: #{forward.1} parent=83 // pred_region
          %s5881 = sand.u32 %s319, 1
          %s5882 = scalar_lea.sflag [#allocation9], %s5881
          %s5883 = sand.u32 %s319, 1
          %s5884 = smul.addr %s5883, 8
          %s5885 = scalar_lea.vmem [#allocation8], %s5884
          %5886 = dma.done %s5882, 128
        $region88: #{forward.1} parent=83 // pred_fallthru
          _
        // Predicated region
        $region89: #{forward.1} parent=83 // pred_check
          %p5887 = pneg %p360
        $region90: #{forward.1} parent=83 // pred_check_branch
          %5889 = sbr.rel (%p5887) target = $region92
        $region91: #{forward.1} parent=83 // pred_region
          %s5890 = sand.u32 %s345, 1
          %s5891 = scalar_lea.sflag [#allocation11], %s5890
          %s5892 = sand.u32 %s345, 1
          %s5893 = smul.addr %s5892, 8
          %s5894 = scalar_lea.vmem [#allocation10], %s5893
          %5895 = dma.done %s5891, 128
        $region92: #{forward.1} parent=83 // pred_fallthru
          _
      $region84: #{forward.1} parent=5 // pred_fallthru
        _
    $region6: #{forward.1} parent=1 // loop_footer
      %s31 = sadd.s32 1, %s27
    $region7: #{forward.1} parent=1 // loop_footer_branch
      %26 = sbr.rel target = $region3
    $region8: #{forward.1} parent=1 // loop_exit
      _
    %5896 = vsyncpa [#allocation9], 1
    %s5897 = scalar_lea.sflag [#allocation9], 1
    %5898 = vsyncpa %s5897, 1
    %5899 = vsyncpa [#allocation11], 1
    %s5900 = scalar_lea.sflag [#allocation11], 1
    %5901 = vsyncpa %s5900, 1

</llo_original>
